<compile_context>
chip_gen: v6e
topology: v6e:2x2x1
jax: 0.10.0
libtpu: 0.0.40
codegen_flags: <defaults>
</compile_context>

<pallas_src>
import jax
import jax.numpy as jnp
import numpy as np
from jax import lax
from jax.experimental import pallas as pl
from jax.experimental.pallas import tpu as pltpu

HIDDEN = 64          # hidden_size (PyTorch module default)
NUM_LAYERS = 2
NUM_CLASSES = 2


# ---------------------------------------------------------------------------
# Fused Pallas kernel
# ---------------------------------------------------------------------------
def _make_fused_kernel(B, C, T, F, H, NC):
    N = B * C          # channel-folded batch: sequences share the LSTM weights
    H2 = 2 * H         # [fwd || bwd] hidden width (= 128 -> one f32 vreg row)
    G = 8 * H          # gates for both dirs, grouped as 4 chunks of 2H:
                       #   [i_f|i_b | f_f|f_b | g_f|g_b | o_f|o_b]

    def kernel(x_ref, wih0_ref, whh0_ref, b0_ref,
               wih1_ref, whh1_ref, b1_ref,
               wfc_ref, bfc_ref, out_ref, gx_scr, seq_scr):
        # Lane masks (hoisted): within each 2H chunk, lanes [0,H) belong to the
        # fwd direction, lanes [H,2H) to the bwd direction.
        mask_g = (lax.broadcasted_iota(jnp.int32, (N, G), 1) % H2) < H
        mask_h = lax.broadcasted_iota(jnp.int32, (N, H2), 1) < H

        def time_align(ref, mask):
            # In-place pre-pass (off the recurrence's dependent chain): for
            # each row-block pair (s, T-1-s) swap the bwd-direction lanes, so
            # row s holds [fwd data @ time s | bwd data @ time T-1-s].
            # Whole-vreg loads/selects/stores only.
            for s in range(T // 2):
                r = T - 1 - s
                a = ref[s * N:(s + 1) * N, :]
                b = ref[r * N:(r + 1) * N, :]
                ref[s * N:(s + 1) * N, :] = jnp.where(mask, a, b)
                ref[r * N:(r + 1) * N, :] = jnp.where(mask, b, a)

        def recurrence(whh_ref, write_seq):
            whh = whh_ref[...]                      # bf16, loaded once / layer
            h = jnp.zeros((N, H2), jnp.float32)
            c = jnp.zeros((N, H2), jnp.float32)
            h_first = None
            for s in range(T):                      # fully unrolled, static T
                # gx_scr is already time-aligned: row-block s = fwd gates at
                # time s / bwd gates at time T-1-s.  Single bf16 MXU pass.
                gates = gx_scr[s * N:(s + 1) * N, :] + jnp.dot(
                    h.astype(jnp.bfloat16), whh,
                    preferred_element_type=jnp.float32)
                # PyTorch gate order i, f, g, o — each chunk is 2H = 128 lanes.
                i_g = jax.nn.sigmoid(gates[:, 0 * H2:1 * H2])
                f_g = jax.nn.sigmoid(gates[:, 1 * H2:2 * H2])
                g_g = jnp.tanh(gates[:, 2 * H2:3 * H2])
                o_g = jax.nn.sigmoid(gates[:, 3 * H2:4 * H2])
                c = f_g * c + i_g * g_g
                h = o_g * jnp.tanh(c)
                if write_seq:
                    # One lane-dense 128-lane store per step (step order).
                    seq_scr[s * N:(s + 1) * N, :] = h
                if s == 0:
                    h_first = h    # bwd lanes = bwd hidden at time T-1
            return h, h_first

        # ---- layer 0: hoisted input projection (all t, both directions) ----
        gx_scr[...] = jnp.dot(x_ref[...], wih0_ref[...],
                              preferred_element_type=jnp.float32) + b0_ref[...]
        time_align(gx_scr, mask_g)
        recurrence(whh0_ref, write_seq=True)

        # seq_scr rows are in step order [fwd(s) | bwd(T-1-s)]; re-align so row
        # t holds the true layer-1 input y(t) = [fwd(t) | bwd(t)].
        time_align(seq_scr, mask_h)

        # ---- layer 1 --------------------------------------------------------
        gx_scr[...] = jnp.dot(seq_scr[...], wih1_ref[...],
                              preferred_element_type=jnp.float32) + b1_ref[...]
        time_align(gx_scr, mask_g)
        h_last, h_first = recurrence(whh1_ref, write_seq=False)

        # lstm_out[:, -1, :]: fwd lanes from the final step, bwd lanes from the
        # first step (the bwd direction's step 0 processes time T-1).
        last = jnp.where(mask_h, h_last, h_first)          # (N, 2H)

        # ---- fused fc head (dropout is identity in eval mode) ---------------
        # Channel-major folding (row = c*B + b) makes each channel a contiguous
        # sublane block; concatenating them along lanes reproduces
        # torch.cat(channel_outputs, dim=1) -> one (B, C*2H) @ (C*2H, NC) dot.
        combined = jnp.concatenate(
            [last[ci * B:(ci + 1) * B, :] for ci in range(C)], axis=-1)
        out_ref[...] = jnp.dot(combined, wfc_ref[...],
                               preferred_element_type=jnp.float32) + bfc_ref[...]

    return kernel, N


@jax.jit
def lstm_model_forward(x, packed):
    """x: (B, C, T, F).  Returns (B, NUM_CLASSES)."""
    B, C, T, F = x.shape
    H = HIDDEN
    kernel, N = _make_fused_kernel(B, C, T, F, H, NUM_CLASSES)
    # Time-major, channel-major batch folding: row index = t*N + c*B + b.
    x_tm = jnp.transpose(x, (2, 1, 0, 3)).reshape(T * N, F).astype(jnp.float32)
    vmem = pl.BlockSpec(memory_space=pltpu.MemorySpace.VMEM)
    return pl.pallas_call(
        kernel,
        out_shape=jax.ShapeDtypeStruct((B, NUM_CLASSES), jnp.float32),
        in_specs=[vmem] * 9,
        out_specs=vmem,
        scratch_shapes=[
            pltpu.VMEM((T * N, 8 * H), jnp.float32),   # hoisted gate precompute (reused by both layers)
            pltpu.VMEM((T * N, 2 * H), jnp.float32),   # layer-0 per-timestep output
        ],
    )(x_tm,
      packed["wih0"], packed["whh0"], packed["b0"],
      packed["wih1"], packed["whh1"], packed["b1"],
      packed["wfc"], packed["bfc"])


# ---------------------------------------------------------------------------
# Parameter construction (PyTorch-layout params -> fused kernel layout)
# ---------------------------------------------------------------------------
def _pack_layer(fwd, bwd, H):
    """fwd/bwd = (w_ih (4H,D), w_hh (4H,H), b_ih (4H,), b_hh (4H,))."""
    w_ih_f, w_hh_f, b_ih_f, b_hh_f = fwd
    w_ih_b, w_hh_b, b_ih_b, b_hh_b = bwd
    D = w_ih_f.shape[1]
    wih = jnp.zeros((D, 8 * H), jnp.float32)
    whh = jnp.zeros((2 * H, 8 * H), jnp.float32)      # block-diagonal
    b = jnp.zeros((8 * H,), jnp.float32)
    for g in range(4):                                # gate order i, f, g, o
        c0 = g * 2 * H
        gs = slice(g * H, (g + 1) * H)
        wih = wih.at[:, c0:c0 + H].set(w_ih_f[gs, :].T)
        wih = wih.at[:, c0 + H:c0 + 2 * H].set(w_ih_b[gs, :].T)
        whh = whh.at[0:H, c0:c0 + H].set(w_hh_f[gs, :].T)
        whh = whh.at[H:2 * H, c0 + H:c0 + 2 * H].set(w_hh_b[gs, :].T)
        b = b.at[c0:c0 + H].set(b_ih_f[gs] + b_hh_f[gs])
        b = b.at[c0 + H:c0 + 2 * H].set(b_ih_b[gs] + b_hh_b[gs])
    # Recurrent weight in bf16 -> single-pass MXU op on the serial path.
    return wih, whh.astype(jnp.bfloat16), b.reshape(1, 8 * H)


def init_params(key, freq_bins, channels):
    H = HIDDEN
    k = 1.0 / float(np.sqrt(H))
    raw = {}
    for layer in range(NUM_LAYERS):
        d_in = freq_bins if layer == 0 else 2 * H
        for d in ("fwd", "bwd"):
            key, k1, k2, k3, k4 = jax.random.split(key, 5)
            raw[f"l{layer}_{d}"] = (
                jax.random.uniform(k1, (4 * H, d_in), jnp.float32, -k, k),
                jax.random.uniform(k2, (4 * H, H), jnp.float32, -k, k),
                jax.random.uniform(k3, (4 * H,), jnp.float32, -k, k),
                jax.random.uniform(k4, (4 * H,), jnp.float32, -k, k),
            )
    fc_in = 2 * H * channels
    kf = 1.0 / float(np.sqrt(fc_in))
    key, k1, k2 = jax.random.split(key, 3)
    fc_w = jax.random.uniform(k1, (NUM_CLASSES, fc_in), jnp.float32, -kf, kf)
    fc_b = jax.random.uniform(k2, (NUM_CLASSES,), jnp.float32, -kf, kf)

    wih0, whh0, b0 = _pack_layer(raw["l0_fwd"], raw["l0_bwd"], H)
    wih1, whh1, b1 = _pack_layer(raw["l1_fwd"], raw["l1_bwd"], H)
    packed = {"wih0": wih0, "whh0": whh0, "b0": b0,
              "wih1": wih1, "whh1": whh1, "b1": b1,
              "wfc": fc_w.T, "bfc": fc_b.reshape(1, NUM_CLASSES)}
    return raw, (fc_w, fc_b), packed


# ---------------------------------------------------------------------------
# Pure-JAX reference (mirrors the PyTorch module) for a correctness check
# ---------------------------------------------------------------------------
def _ref_lstm_dir(seq, w_ih, w_hh, b_ih, b_hh, reverse):
    Bn, T, _ = seq.shape
    H = w_hh.shape[1]
    h = jnp.zeros((Bn, H), jnp.float32)
    c = jnp.zeros((Bn, H), jnp.float32)
    outs = [None] * T
    order = range(T - 1, -1, -1) if reverse else range(T)
    for t in order:
        gates = seq[:, t, :] @ w_ih.T + h @ w_hh.T + b_ih + b_hh
        i, f, g, o = jnp.split(gates, 4, axis=-1)
        c = jax.nn.sigmoid(f) * c + jax.nn.sigmoid(i) * jnp.tanh(g)
        h = jax.nn.sigmoid(o) * jnp.tanh(c)
        outs[t] = h
    return jnp.stack(outs, axis=1)


def reference_forward(x, raw, fc):
    fc_w, fc_b = fc
    B, C, T, F = x.shape
    chans = []
    for ci in range(C):
        inp = x[:, ci, :, :]
        for layer in range(NUM_LAYERS):
            of = _ref_lstm_dir(inp, *raw[f"l{layer}_fwd"], reverse=False)
            ob = _ref_lstm_dir(inp, *raw[f"l{layer}_bwd"], reverse=True)
            inp = jnp.concatenate([of, ob], axis=-1)
        chans.append(inp[:, -1, :])
    combined = jnp.concatenate(chans, axis=1)
    return combined @ fc_w.T + fc_b


# ---------------------------------------------------------------------------
if __name__ == "__main__":
    # input_shape = (channels, windows, freq_bins) = (4, 8, 16), batch = 2
    B, C, T, F = 2, 4, 8, 16
    key = jax.random.PRNGKey(0)
    key, kx, kp = jax.random.split(key, 3)
    x = jax.random.normal(kx, (B, C, T, F), dtype=jnp.float32)

    raw, fc, packed = init_params(kp, freq_bins=F, channels=C)

    out = lstm_model_forward(x, packed)
    out = jax.block_until_ready(out)
    assert out.shape == (B, NUM_CLASSES), out.shape

    # Reference is strict f32; kernel uses a bf16 recurrent matmul (f32 acc),
    # so tolerances are set accordingly.
    ref = reference_forward(x, raw, fc)
    np.testing.assert_allclose(np.asarray(out), np.asarray(ref),
                               rtol=5e-2, atol=2e-2)

    print("KERNEL_OK")
</pallas_src>

<mosaic_0001>
module attributes {stable_mosaic.version = 11 : i64} {
  func.func @kernel(%arg0: memref<64x16xf32, #tpu.memory_space<vmem>>, %arg1: memref<16x512xf32, #tpu.memory_space<vmem>>, %arg2: memref<128x512xbf16, #tpu.memory_space<vmem>>, %arg3: memref<1x512xf32, #tpu.memory_space<vmem>>, %arg4: memref<128x512xf32, #tpu.memory_space<vmem>>, %arg5: memref<128x512xbf16, #tpu.memory_space<vmem>>, %arg6: memref<1x512xf32, #tpu.memory_space<vmem>>, %arg7: memref<512x2xf32, #tpu.memory_space<vmem>>, %arg8: memref<1x2xf32, #tpu.memory_space<vmem>>, %arg9: memref<2x2xf32, #tpu.memory_space<vmem>>, %arg10: memref<64x512xf32, #tpu.memory_space<vmem>>, %arg11: memref<64x128xf32, #tpu.memory_space<vmem>>) attributes {dimension_semantics = [], scalar_prefetch = 0 : i64, scratch_operands = 2 : i64, tpu.core_type = #tpu.core_type<tc>} {
    %0 = tpu.iota {dimensions = array<i32: 1>} : vector<8x512xi32>
    %c128_i32 = arith.constant 128 : i32
    %c0_i32 = arith.constant 0 : i32
    %1 = arith.cmpi eq, %c128_i32, %c0_i32 : i32
    %c1_i32 = arith.constant 1 : i32
    %2 = arith.select %1, %c1_i32, %c128_i32 : i32
    %3 = vector.broadcast %2 : i32 to vector<8x512xi32>
    %4 = arith.remsi %0, %3 : vector<8x512xi32>
    %c0_i32_0 = arith.constant 0 : i32
    %5 = vector.broadcast %c0_i32_0 : i32 to vector<8x512xi32>
    %6 = arith.cmpi ne, %4, %5 : vector<8x512xi32>
    %c0_i32_1 = arith.constant 0 : i32
    %7 = vector.broadcast %c0_i32_1 : i32 to vector<8x512xi32>
    %8 = arith.cmpi slt, %4, %7 : vector<8x512xi32>
    %c0_i32_2 = arith.constant 0 : i32
    %9 = arith.cmpi slt, %2, %c0_i32_2 : i32
    %10 = vector.broadcast %9 : i1 to vector<8x512xi1>
    %11 = vector.broadcast %10 : vector<8x512xi1> to vector<8x512xi1>
    %12 = arith.xori %8, %11 : vector<8x512xi1>
    %13 = arith.andi %12, %6 : vector<8x512xi1>
    %14 = vector.broadcast %2 : i32 to vector<8x512xi32>
    %15 = arith.addi %4, %14 : vector<8x512xi32>
    %16 = arith.select %13, %15, %4 : vector<8x512xi1>, vector<8x512xi32>
    %c64_i32 = arith.constant 64 : i32
    %17 = vector.broadcast %c64_i32 : i32 to vector<8x512xi32>
    %18 = arith.cmpi slt, %16, %17 : vector<8x512xi32>
    %19 = tpu.iota {dimensions = array<i32: 1>} : vector<8x128xi32>
    %c64_i32_3 = arith.constant 64 : i32
    %20 = vector.broadcast %c64_i32_3 : i32 to vector<8x128xi32>
    %21 = arith.cmpi slt, %19, %20 : vector<8x128xi32>
    %c0 = arith.constant 0 : index
    %c0_4 = arith.constant 0 : index
    %22 = vector.load %arg0[%c0, %c0_4] : memref<64x16xf32, #tpu.memory_space<vmem>>, vector<64x16xf32>
    %c0_5 = arith.constant 0 : index
    %c0_6 = arith.constant 0 : index
    %23 = vector.load %arg1[%c0_5, %c0_6] : memref<16x512xf32, #tpu.memory_space<vmem>>, vector<16x512xf32>
    %cst = arith.constant dense<0.000000e+00> : vector<64x512xf32>
    %24 = tpu.matmul %22, %23, %cst {dimension_numbers = #tpu.dot_dimension_numbers<[1], [0], [0], [1], [0, 0, 1, 1], [], []>} : vector<64x16xf32>, vector<16x512xf32>, vector<64x512xf32> -> vector<64x512xf32>
    %c0_7 = arith.constant 0 : index
    %c0_8 = arith.constant 0 : index
    %25 = vector.load %arg3[%c0_7, %c0_8] : memref<1x512xf32, #tpu.memory_space<vmem>>, vector<1x512xf32>
    %26 = vector.broadcast %25 : vector<1x512xf32> to vector<64x512xf32>
    %27 = arith.addf %24, %26 : vector<64x512xf32>
    %c0_9 = arith.constant 0 : index
    %c0_10 = arith.constant 0 : index
    %28 = vector.load %arg10[%c0_9, %c0_10] : memref<64x512xf32, #tpu.memory_space<vmem>>, vector<64x512xf32>
    tpu.vector_store %arg10[%c0_9, %c0_10], %27 {strides = array<i32>} : memref<64x512xf32, #tpu.memory_space<vmem>>, vector<64x512xf32>,
    %c0_11 = arith.constant 0 : index
    %c0_12 = arith.constant 0 : index
    %29 = vector.load %arg10[%c0_11, %c0_12] : memref<64x512xf32, #tpu.memory_space<vmem>>, vector<8x512xf32>
    %c56 = arith.constant 56 : index
    %c0_13 = arith.constant 0 : index
    %30 = vector.load %arg10[%c56, %c0_13] : memref<64x512xf32, #tpu.memory_space<vmem>>, vector<8x512xf32>
    %31 = arith.select %18, %29, %30 : vector<8x512xi1>, vector<8x512xf32>
    %c0_14 = arith.constant 0 : index
    %c0_15 = arith.constant 0 : index
    %32 = vector.load %arg10[%c0_14, %c0_15] : memref<64x512xf32, #tpu.memory_space<vmem>>, vector<8x512xf32>
    tpu.vector_store %arg10[%c0_14, %c0_15], %31 {strides = array<i32>} : memref<64x512xf32, #tpu.memory_space<vmem>>, vector<8x512xf32>,
    %33 = arith.select %18, %30, %29 : vector<8x512xi1>, vector<8x512xf32>
    %c56_16 = arith.constant 56 : index
    %c0_17 = arith.constant 0 : index
    %34 = vector.load %arg10[%c56_16, %c0_17] : memref<64x512xf32, #tpu.memory_space<vmem>>, vector<8x512xf32>
    tpu.vector_store %arg10[%c56_16, %c0_17], %33 {strides = array<i32>} : memref<64x512xf32, #tpu.memory_space<vmem>>, vector<8x512xf32>,
    %c8 = arith.constant 8 : index
    %c0_18 = arith.constant 0 : index
    %35 = vector.load %arg10[%c8, %c0_18] : memref<64x512xf32, #tpu.memory_space<vmem>>, vector<8x512xf32>
    %c48 = arith.constant 48 : index
    %c0_19 = arith.constant 0 : index
    %36 = vector.load %arg10[%c48, %c0_19] : memref<64x512xf32, #tpu.memory_space<vmem>>, vector<8x512xf32>
    %37 = arith.select %18, %35, %36 : vector<8x512xi1>, vector<8x512xf32>
    %c8_20 = arith.constant 8 : index
    %c0_21 = arith.constant 0 : index
    %38 = vector.load %arg10[%c8_20, %c0_21] : memref<64x512xf32, #tpu.memory_space<vmem>>, vector<8x512xf32>
    tpu.vector_store %arg10[%c8_20, %c0_21], %37 {strides = array<i32>} : memref<64x512xf32, #tpu.memory_space<vmem>>, vector<8x512xf32>,
    %39 = arith.select %18, %36, %35 : vector<8x512xi1>, vector<8x512xf32>
    %c48_22 = arith.constant 48 : index
    %c0_23 = arith.constant 0 : index
    %40 = vector.load %arg10[%c48_22, %c0_23] : memref<64x512xf32, #tpu.memory_space<vmem>>, vector<8x512xf32>
    tpu.vector_store %arg10[%c48_22, %c0_23], %39 {strides = array<i32>} : memref<64x512xf32, #tpu.memory_space<vmem>>, vector<8x512xf32>,
    %c16 = arith.constant 16 : index
    %c0_24 = arith.constant 0 : index
    %41 = vector.load %arg10[%c16, %c0_24] : memref<64x512xf32, #tpu.memory_space<vmem>>, vector<8x512xf32>
    %c40 = arith.constant 40 : index
    %c0_25 = arith.constant 0 : index
    %42 = vector.load %arg10[%c40, %c0_25] : memref<64x512xf32, #tpu.memory_space<vmem>>, vector<8x512xf32>
    %43 = arith.select %18, %41, %42 : vector<8x512xi1>, vector<8x512xf32>
    %c16_26 = arith.constant 16 : index
    %c0_27 = arith.constant 0 : index
    %44 = vector.load %arg10[%c16_26, %c0_27] : memref<64x512xf32, #tpu.memory_space<vmem>>, vector<8x512xf32>
    tpu.vector_store %arg10[%c16_26, %c0_27], %43 {strides = array<i32>} : memref<64x512xf32, #tpu.memory_space<vmem>>, vector<8x512xf32>,
    %45 = arith.select %18, %42, %41 : vector<8x512xi1>, vector<8x512xf32>
    %c40_28 = arith.constant 40 : index
    %c0_29 = arith.constant 0 : index
    %46 = vector.load %arg10[%c40_28, %c0_29] : memref<64x512xf32, #tpu.memory_space<vmem>>, vector<8x512xf32>
    tpu.vector_store %arg10[%c40_28, %c0_29], %45 {strides = array<i32>} : memref<64x512xf32, #tpu.memory_space<vmem>>, vector<8x512xf32>,
    %c24 = arith.constant 24 : index
    %c0_30 = arith.constant 0 : index
    %47 = vector.load %arg10[%c24, %c0_30] : memref<64x512xf32, #tpu.memory_space<vmem>>, vector<8x512xf32>
    %c32 = arith.constant 32 : index
    %c0_31 = arith.constant 0 : index
    %48 = vector.load %arg10[%c32, %c0_31] : memref<64x512xf32, #tpu.memory_space<vmem>>, vector<8x512xf32>
    %49 = arith.select %18, %47, %48 : vector<8x512xi1>, vector<8x512xf32>
    %c24_32 = arith.constant 24 : index
    %c0_33 = arith.constant 0 : index
    %50 = vector.load %arg10[%c24_32, %c0_33] : memref<64x512xf32, #tpu.memory_space<vmem>>, vector<8x512xf32>
    tpu.vector_store %arg10[%c24_32, %c0_33], %49 {strides = array<i32>} : memref<64x512xf32, #tpu.memory_space<vmem>>, vector<8x512xf32>,
    %51 = arith.select %18, %48, %47 : vector<8x512xi1>, vector<8x512xf32>
    %c32_34 = arith.constant 32 : index
    %c0_35 = arith.constant 0 : index
    %52 = vector.load %arg10[%c32_34, %c0_35] : memref<64x512xf32, #tpu.memory_space<vmem>>, vector<8x512xf32>
    tpu.vector_store %arg10[%c32_34, %c0_35], %51 {strides = array<i32>} : memref<64x512xf32, #tpu.memory_space<vmem>>, vector<8x512xf32>,
    %c0_36 = arith.constant 0 : index
    %c0_37 = arith.constant 0 : index
    %53 = vector.load %arg2[%c0_36, %c0_37] : memref<128x512xbf16, #tpu.memory_space<vmem>>, vector<128x512xbf16>
    %cst_38 = arith.constant 0.000000e+00 : f32
    %54 = vector.broadcast %cst_38 : f32 to vector<8x128xf32>
    %cst_39 = arith.constant 0.000000e+00 : f32
    %55 = vector.broadcast %cst_39 : f32 to vector<8x128xf32>
    %c0_40 = arith.constant 0 : index
    %c0_41 = arith.constant 0 : index
    %56 = vector.load %arg10[%c0_40, %c0_41] : memref<64x512xf32, #tpu.memory_space<vmem>>, vector<8x512xf32>
    %57 = arith.truncf %54 : vector<8x128xf32> to vector<8x128xbf16>
    %cst_42 = arith.constant dense<0.000000e+00> : vector<8x512xf32>
    %58 = tpu.matmul %57, %53, %cst_42 {dimension_numbers = #tpu.dot_dimension_numbers<[1], [0], [0], [1], [0, 0, 1, 1], [], []>} : vector<8x128xbf16>, vector<128x512xbf16>, vector<8x512xf32> -> vector<8x512xf32>
    %59 = arith.addf %56, %58 : vector<8x512xf32>
    %60 = vector.extract_strided_slice %59 {offsets = [0, 0], sizes = [8, 128], strides = [1, 1]} : vector<8x512xf32> to vector<8x128xf32>
    %61 = arith.negf %60 : vector<8x128xf32>
    %62 = math.exp %61 : vector<8x128xf32>
    %cst_43 = arith.constant 1.000000e+00 : f32
    %63 = vector.broadcast %cst_43 : f32 to vector<8x128xf32>
    %64 = arith.addf %63, %62 : vector<8x128xf32>
    %65 = arith.divf %63, %64 : vector<8x128xf32>
    %66 = vector.extract_strided_slice %59 {offsets = [0, 128], sizes = [8, 128], strides = [1, 1]} : vector<8x512xf32> to vector<8x128xf32>
    %67 = arith.negf %66 : vector<8x128xf32>
    %68 = math.exp %67 : vector<8x128xf32>
    %cst_44 = arith.constant 1.000000e+00 : f32
    %69 = vector.broadcast %cst_44 : f32 to vector<8x128xf32>
    %70 = arith.addf %69, %68 : vector<8x128xf32>
    %71 = arith.divf %69, %70 : vector<8x128xf32>
    %72 = vector.extract_strided_slice %59 {offsets = [0, 256], sizes = [8, 128], strides = [1, 1]} : vector<8x512xf32> to vector<8x128xf32>
    %73 = math.tanh %72 : vector<8x128xf32>
    %74 = vector.extract_strided_slice %59 {offsets = [0, 384], sizes = [8, 128], strides = [1, 1]} : vector<8x512xf32> to vector<8x128xf32>
    %75 = arith.negf %74 : vector<8x128xf32>
    %76 = math.exp %75 : vector<8x128xf32>
    %cst_45 = arith.constant 1.000000e+00 : f32
    %77 = vector.broadcast %cst_45 : f32 to vector<8x128xf32>
    %78 = arith.addf %77, %76 : vector<8x128xf32>
    %79 = arith.divf %77, %78 : vector<8x128xf32>
    %80 = arith.mulf %71, %55 : vector<8x128xf32>
    %81 = arith.mulf %65, %73 : vector<8x128xf32>
    %82 = arith.addf %80, %81 : vector<8x128xf32>
    %83 = math.tanh %82 : vector<8x128xf32>
    %84 = arith.mulf %79, %83 : vector<8x128xf32>
    %c0_46 = arith.constant 0 : index
    %c0_47 = arith.constant 0 : index
    %85 = vector.load %arg11[%c0_46, %c0_47] : memref<64x128xf32, #tpu.memory_space<vmem>>, vector<8x128xf32>
    tpu.vector_store %arg11[%c0_46, %c0_47], %84 {strides = array<i32>} : memref<64x128xf32, #tpu.memory_space<vmem>>, vector<8x128xf32>,
    %c8_48 = arith.constant 8 : index
    %c0_49 = arith.constant 0 : index
    %86 = vector.load %arg10[%c8_48, %c0_49] : memref<64x512xf32, #tpu.memory_space<vmem>>, vector<8x512xf32>
    %87 = arith.truncf %84 : vector<8x128xf32> to vector<8x128xbf16>
    %cst_50 = arith.constant dense<0.000000e+00> : vector<8x512xf32>
    %88 = tpu.matmul %87, %53, %cst_50 {dimension_numbers = #tpu.dot_dimension_numbers<[1], [0], [0], [1], [0, 0, 1, 1], [], []>} : vector<8x128xbf16>, vector<128x512xbf16>, vector<8x512xf32> -> vector<8x512xf32>
    %89 = arith.addf %86, %88 : vector<8x512xf32>
    %90 = vector.extract_strided_slice %89 {offsets = [0, 0], sizes = [8, 128], strides = [1, 1]} : vector<8x512xf32> to vector<8x128xf32>
    %91 = arith.negf %90 : vector<8x128xf32>
    %92 = math.exp %91 : vector<8x128xf32>
    %cst_51 = arith.constant 1.000000e+00 : f32
    %93 = vector.broadcast %cst_51 : f32 to vector<8x128xf32>
    %94 = arith.addf %93, %92 : vector<8x128xf32>
    %95 = arith.divf %93, %94 : vector<8x128xf32>
    %96 = vector.extract_strided_slice %89 {offsets = [0, 128], sizes = [8, 128], strides = [1, 1]} : vector<8x512xf32> to vector<8x128xf32>
    %97 = arith.negf %96 : vector<8x128xf32>
    %98 = math.exp %97 : vector<8x128xf32>
    %cst_52 = arith.constant 1.000000e+00 : f32
    %99 = vector.broadcast %cst_52 : f32 to vector<8x128xf32>
    %100 = arith.addf %99, %98 : vector<8x128xf32>
    %101 = arith.divf %99, %100 : vector<8x128xf32>
    %102 = vector.extract_strided_slice %89 {offsets = [0, 256], sizes = [8, 128], strides = [1, 1]} : vector<8x512xf32> to vector<8x128xf32>
    %103 = math.tanh %102 : vector<8x128xf32>
    %104 = vector.extract_strided_slice %89 {offsets = [0, 384], sizes = [8, 128], strides = [1, 1]} : vector<8x512xf32> to vector<8x128xf32>
    %105 = arith.negf %104 : vector<8x128xf32>
    %106 = math.exp %105 : vector<8x128xf32>
    %cst_53 = arith.constant 1.000000e+00 : f32
    %107 = vector.broadcast %cst_53 : f32 to vector<8x128xf32>
    %108 = arith.addf %107, %106 : vector<8x128xf32>
    %109 = arith.divf %107, %108 : vector<8x128xf32>
    %110 = arith.mulf %101, %82 : vector<8x128xf32>
    %111 = arith.mulf %95, %103 : vector<8x128xf32>
    %112 = arith.addf %110, %111 : vector<8x128xf32>
    %113 = math.tanh %112 : vector<8x128xf32>
    %114 = arith.mulf %109, %113 : vector<8x128xf32>
    %c8_54 = arith.constant 8 : index
    %c0_55 = arith.constant 0 : index
    %115 = vector.load %arg11[%c8_54, %c0_55] : memref<64x128xf32, #tpu.memory_space<vmem>>, vector<8x128xf32>
    tpu.vector_store %arg11[%c8_54, %c0_55], %114 {strides = array<i32>} : memref<64x128xf32, #tpu.memory_space<vmem>>, vector<8x128xf32>,
    %c16_56 = arith.constant 16 : index
    %c0_57 = arith.constant 0 : index
    %116 = vector.load %arg10[%c16_56, %c0_57] : memref<64x512xf32, #tpu.memory_space<vmem>>, vector<8x512xf32>
    %117 = arith.truncf %114 : vector<8x128xf32> to vector<8x128xbf16>
    %cst_58 = arith.constant dense<0.000000e+00> : vector<8x512xf32>
    %118 = tpu.matmul %117, %53, %cst_58 {dimension_numbers = #tpu.dot_dimension_numbers<[1], [0], [0], [1], [0, 0, 1, 1], [], []>} : vector<8x128xbf16>, vector<128x512xbf16>, vector<8x512xf32> -> vector<8x512xf32>
    %119 = arith.addf %116, %118 : vector<8x512xf32>
    %120 = vector.extract_strided_slice %119 {offsets = [0, 0], sizes = [8, 128], strides = [1, 1]} : vector<8x512xf32> to vector<8x128xf32>
    %121 = arith.negf %120 : vector<8x128xf32>
    %122 = math.exp %121 : vector<8x128xf32>
    %cst_59 = arith.constant 1.000000e+00 : f32
    %123 = vector.broadcast %cst_59 : f32 to vector<8x128xf32>
    %124 = arith.addf %123, %122 : vector<8x128xf32>
    %125 = arith.divf %123, %124 : vector<8x128xf32>
    %126 = vector.extract_strided_slice %119 {offsets = [0, 128], sizes = [8, 128], strides = [1, 1]} : vector<8x512xf32> to vector<8x128xf32>
    %127 = arith.negf %126 : vector<8x128xf32>
    %128 = math.exp %127 : vector<8x128xf32>
    %cst_60 = arith.constant 1.000000e+00 : f32
    %129 = vector.broadcast %cst_60 : f32 to vector<8x128xf32>
    %130 = arith.addf %129, %128 : vector<8x128xf32>
    %131 = arith.divf %129, %130 : vector<8x128xf32>
    %132 = vector.extract_strided_slice %119 {offsets = [0, 256], sizes = [8, 128], strides = [1, 1]} : vector<8x512xf32> to vector<8x128xf32>
    %133 = math.tanh %132 : vector<8x128xf32>
    %134 = vector.extract_strided_slice %119 {offsets = [0, 384], sizes = [8, 128], strides = [1, 1]} : vector<8x512xf32> to vector<8x128xf32>
    %135 = arith.negf %134 : vector<8x128xf32>
    %136 = math.exp %135 : vector<8x128xf32>
    %cst_61 = arith.constant 1.000000e+00 : f32
    %137 = vector.broadcast %cst_61 : f32 to vector<8x128xf32>
    %138 = arith.addf %137, %136 : vector<8x128xf32>
    %139 = arith.divf %137, %138 : vector<8x128xf32>
    %140 = arith.mulf %131, %112 : vector<8x128xf32>
    %141 = arith.mulf %125, %133 : vector<8x128xf32>
    %142 = arith.addf %140, %141 : vector<8x128xf32>
    %143 = math.tanh %142 : vector<8x128xf32>
    %144 = arith.mulf %139, %143 : vector<8x128xf32>
    %c16_62 = arith.constant 16 : index
    %c0_63 = arith.constant 0 : index
    %145 = vector.load %arg11[%c16_62, %c0_63] : memref<64x128xf32, #tpu.memory_space<vmem>>, vector<8x128xf32>
    tpu.vector_store %arg11[%c16_62, %c0_63], %144 {strides = array<i32>} : memref<64x128xf32, #tpu.memory_space<vmem>>, vector<8x128xf32>,
    %c24_64 = arith.constant 24 : index
    %c0_65 = arith.constant 0 : index
    %146 = vector.load %arg10[%c24_64, %c0_65] : memref<64x512xf32, #tpu.memory_space<vmem>>, vector<8x512xf32>
    %147 = arith.truncf %144 : vector<8x128xf32> to vector<8x128xbf16>
    %cst_66 = arith.constant dense<0.000000e+00> : vector<8x512xf32>
    %148 = tpu.matmul %147, %53, %cst_66 {dimension_numbers = #tpu.dot_dimension_numbers<[1], [0], [0], [1], [0, 0, 1, 1], [], []>} : vector<8x128xbf16>, vector<128x512xbf16>, vector<8x512xf32> -> vector<8x512xf32>
    %149 = arith.addf %146, %148 : vector<8x512xf32>
    %150 = vector.extract_strided_slice %149 {offsets = [0, 0], sizes = [8, 128], strides = [1, 1]} : vector<8x512xf32> to vector<8x128xf32>
    %151 = arith.negf %150 : vector<8x128xf32>
    %152 = math.exp %151 : vector<8x128xf32>
    %cst_67 = arith.constant 1.000000e+00 : f32
    %153 = vector.broadcast %cst_67 : f32 to vector<8x128xf32>
    %154 = arith.addf %153, %152 : vector<8x128xf32>
    %155 = arith.divf %153, %154 : vector<8x128xf32>
    %156 = vector.extract_strided_slice %149 {offsets = [0, 128], sizes = [8, 128], strides = [1, 1]} : vector<8x512xf32> to vector<8x128xf32>
    %157 = arith.negf %156 : vector<8x128xf32>
    %158 = math.exp %157 : vector<8x128xf32>
    %cst_68 = arith.constant 1.000000e+00 : f32
    %159 = vector.broadcast %cst_68 : f32 to vector<8x128xf32>
    %160 = arith.addf %159, %158 : vector<8x128xf32>
    %161 = arith.divf %159, %160 : vector<8x128xf32>
    %162 = vector.extract_strided_slice %149 {offsets = [0, 256], sizes = [8, 128], strides = [1, 1]} : vector<8x512xf32> to vector<8x128xf32>
    %163 = math.tanh %162 : vector<8x128xf32>
    %164 = vector.extract_strided_slice %149 {offsets = [0, 384], sizes = [8, 128], strides = [1, 1]} : vector<8x512xf32> to vector<8x128xf32>
    %165 = arith.negf %164 : vector<8x128xf32>
    %166 = math.exp %165 : vector<8x128xf32>
    %cst_69 = arith.constant 1.000000e+00 : f32
    %167 = vector.broadcast %cst_69 : f32 to vector<8x128xf32>
    %168 = arith.addf %167, %166 : vector<8x128xf32>
    %169 = arith.divf %167, %168 : vector<8x128xf32>
    %170 = arith.mulf %161, %142 : vector<8x128xf32>
    %171 = arith.mulf %155, %163 : vector<8x128xf32>
    %172 = arith.addf %170, %171 : vector<8x128xf32>
    %173 = math.tanh %172 : vector<8x128xf32>
    %174 = arith.mulf %169, %173 : vector<8x128xf32>
    %c24_70 = arith.constant 24 : index
    %c0_71 = arith.constant 0 : index
    %175 = vector.load %arg11[%c24_70, %c0_71] : memref<64x128xf32, #tpu.memory_space<vmem>>, vector<8x128xf32>
    tpu.vector_store %arg11[%c24_70, %c0_71], %174 {strides = array<i32>} : memref<64x128xf32, #tpu.memory_space<vmem>>, vector<8x128xf32>,
    %c32_72 = arith.constant 32 : index
    %c0_73 = arith.constant 0 : index
    %176 = vector.load %arg10[%c32_72, %c0_73] : memref<64x512xf32, #tpu.memory_space<vmem>>, vector<8x512xf32>
    %177 = arith.truncf %174 : vector<8x128xf32> to vector<8x128xbf16>
    %cst_74 = arith.constant dense<0.000000e+00> : vector<8x512xf32>
    %178 = tpu.matmul %177, %53, %cst_74 {dimension_numbers = #tpu.dot_dimension_numbers<[1], [0], [0], [1], [0, 0, 1, 1], [], []>} : vector<8x128xbf16>, vector<128x512xbf16>, vector<8x512xf32> -> vector<8x512xf32>
    %179 = arith.addf %176, %178 : vector<8x512xf32>
    %180 = vector.extract_strided_slice %179 {offsets = [0, 0], sizes = [8, 128], strides = [1, 1]} : vector<8x512xf32> to vector<8x128xf32>
    %181 = arith.negf %180 : vector<8x128xf32>
    %182 = math.exp %181 : vector<8x128xf32>
    %cst_75 = arith.constant 1.000000e+00 : f32
    %183 = vector.broadcast %cst_75 : f32 to vector<8x128xf32>
    %184 = arith.addf %183, %182 : vector<8x128xf32>
    %185 = arith.divf %183, %184 : vector<8x128xf32>
    %186 = vector.extract_strided_slice %179 {offsets = [0, 128], sizes = [8, 128], strides = [1, 1]} : vector<8x512xf32> to vector<8x128xf32>
    %187 = arith.negf %186 : vector<8x128xf32>
    %188 = math.exp %187 : vector<8x128xf32>
    %cst_76 = arith.constant 1.000000e+00 : f32
    %189 = vector.broadcast %cst_76 : f32 to vector<8x128xf32>
    %190 = arith.addf %189, %188 : vector<8x128xf32>
    %191 = arith.divf %189, %190 : vector<8x128xf32>
    %192 = vector.extract_strided_slice %179 {offsets = [0, 256], sizes = [8, 128], strides = [1, 1]} : vector<8x512xf32> to vector<8x128xf32>
    %193 = math.tanh %192 : vector<8x128xf32>
    %194 = vector.extract_strided_slice %179 {offsets = [0, 384], sizes = [8, 128], strides = [1, 1]} : vector<8x512xf32> to vector<8x128xf32>
    %195 = arith.negf %194 : vector<8x128xf32>
    %196 = math.exp %195 : vector<8x128xf32>
    %cst_77 = arith.constant 1.000000e+00 : f32
    %197 = vector.broadcast %cst_77 : f32 to vector<8x128xf32>
    %198 = arith.addf %197, %196 : vector<8x128xf32>
    %199 = arith.divf %197, %198 : vector<8x128xf32>
    %200 = arith.mulf %191, %172 : vector<8x128xf32>
    %201 = arith.mulf %185, %193 : vector<8x128xf32>
    %202 = arith.addf %200, %201 : vector<8x128xf32>
    %203 = math.tanh %202 : vector<8x128xf32>
    %204 = arith.mulf %199, %203 : vector<8x128xf32>
    %c32_78 = arith.constant 32 : index
    %c0_79 = arith.constant 0 : index
    %205 = vector.load %arg11[%c32_78, %c0_79] : memref<64x128xf32, #tpu.memory_space<vmem>>, vector<8x128xf32>
    tpu.vector_store %arg11[%c32_78, %c0_79], %204 {strides = array<i32>} : memref<64x128xf32, #tpu.memory_space<vmem>>, vector<8x128xf32>,
    %c40_80 = arith.constant 40 : index
    %c0_81 = arith.constant 0 : index
    %206 = vector.load %arg10[%c40_80, %c0_81] : memref<64x512xf32, #tpu.memory_space<vmem>>, vector<8x512xf32>
    %207 = arith.truncf %204 : vector<8x128xf32> to vector<8x128xbf16>
    %cst_82 = arith.constant dense<0.000000e+00> : vector<8x512xf32>
    %208 = tpu.matmul %207, %53, %cst_82 {dimension_numbers = #tpu.dot_dimension_numbers<[1], [0], [0], [1], [0, 0, 1, 1], [], []>} : vector<8x128xbf16>, vector<128x512xbf16>, vector<8x512xf32> -> vector<8x512xf32>
    %209 = arith.addf %206, %208 : vector<8x512xf32>
    %210 = vector.extract_strided_slice %209 {offsets = [0, 0], sizes = [8, 128], strides = [1, 1]} : vector<8x512xf32> to vector<8x128xf32>
    %211 = arith.negf %210 : vector<8x128xf32>
    %212 = math.exp %211 : vector<8x128xf32>
    %cst_83 = arith.constant 1.000000e+00 : f32
    %213 = vector.broadcast %cst_83 : f32 to vector<8x128xf32>
    %214 = arith.addf %213, %212 : vector<8x128xf32>
    %215 = arith.divf %213, %214 : vector<8x128xf32>
    %216 = vector.extract_strided_slice %209 {offsets = [0, 128], sizes = [8, 128], strides = [1, 1]} : vector<8x512xf32> to vector<8x128xf32>
    %217 = arith.negf %216 : vector<8x128xf32>
    %218 = math.exp %217 : vector<8x128xf32>
    %cst_84 = arith.constant 1.000000e+00 : f32
    %219 = vector.broadcast %cst_84 : f32 to vector<8x128xf32>
    %220 = arith.addf %219, %218 : vector<8x128xf32>
    %221 = arith.divf %219, %220 : vector<8x128xf32>
    %222 = vector.extract_strided_slice %209 {offsets = [0, 256], sizes = [8, 128], strides = [1, 1]} : vector<8x512xf32> to vector<8x128xf32>
    %223 = math.tanh %222 : vector<8x128xf32>
    %224 = vector.extract_strided_slice %209 {offsets = [0, 384], sizes = [8, 128], strides = [1, 1]} : vector<8x512xf32> to vector<8x128xf32>
    %225 = arith.negf %224 : vector<8x128xf32>
    %226 = math.exp %225 : vector<8x128xf32>
    %cst_85 = arith.constant 1.000000e+00 : f32
    %227 = vector.broadcast %cst_85 : f32 to vector<8x128xf32>
    %228 = arith.addf %227, %226 : vector<8x128xf32>
    %229 = arith.divf %227, %228 : vector<8x128xf32>
    %230 = arith.mulf %221, %202 : vector<8x128xf32>
    %231 = arith.mulf %215, %223 : vector<8x128xf32>
    %232 = arith.addf %230, %231 : vector<8x128xf32>
    %233 = math.tanh %232 : vector<8x128xf32>
    %234 = arith.mulf %229, %233 : vector<8x128xf32>
    %c40_86 = arith.constant 40 : index
    %c0_87 = arith.constant 0 : index
    %235 = vector.load %arg11[%c40_86, %c0_87] : memref<64x128xf32, #tpu.memory_space<vmem>>, vector<8x128xf32>
    tpu.vector_store %arg11[%c40_86, %c0_87], %234 {strides = array<i32>} : memref<64x128xf32, #tpu.memory_space<vmem>>, vector<8x128xf32>,
    %c48_88 = arith.constant 48 : index
    %c0_89 = arith.constant 0 : index
    %236 = vector.load %arg10[%c48_88, %c0_89] : memref<64x512xf32, #tpu.memory_space<vmem>>, vector<8x512xf32>
    %237 = arith.truncf %234 : vector<8x128xf32> to vector<8x128xbf16>
    %cst_90 = arith.constant dense<0.000000e+00> : vector<8x512xf32>
    %238 = tpu.matmul %237, %53, %cst_90 {dimension_numbers = #tpu.dot_dimension_numbers<[1], [0], [0], [1], [0, 0, 1, 1], [], []>} : vector<8x128xbf16>, vector<128x512xbf16>, vector<8x512xf32> -> vector<8x512xf32>
    %239 = arith.addf %236, %238 : vector<8x512xf32>
    %240 = vector.extract_strided_slice %239 {offsets = [0, 0], sizes = [8, 128], strides = [1, 1]} : vector<8x512xf32> to vector<8x128xf32>
    %241 = arith.negf %240 : vector<8x128xf32>
    %242 = math.exp %241 : vector<8x128xf32>
    %cst_91 = arith.constant 1.000000e+00 : f32
    %243 = vector.broadcast %cst_91 : f32 to vector<8x128xf32>
    %244 = arith.addf %243, %242 : vector<8x128xf32>
    %245 = arith.divf %243, %244 : vector<8x128xf32>
    %246 = vector.extract_strided_slice %239 {offsets = [0, 128], sizes = [8, 128], strides = [1, 1]} : vector<8x512xf32> to vector<8x128xf32>
    %247 = arith.negf %246 : vector<8x128xf32>
    %248 = math.exp %247 : vector<8x128xf32>
    %cst_92 = arith.constant 1.000000e+00 : f32
    %249 = vector.broadcast %cst_92 : f32 to vector<8x128xf32>
    %250 = arith.addf %249, %248 : vector<8x128xf32>
    %251 = arith.divf %249, %250 : vector<8x128xf32>
    %252 = vector.extract_strided_slice %239 {offsets = [0, 256], sizes = [8, 128], strides = [1, 1]} : vector<8x512xf32> to vector<8x128xf32>
    %253 = math.tanh %252 : vector<8x128xf32>
    %254 = vector.extract_strided_slice %239 {offsets = [0, 384], sizes = [8, 128], strides = [1, 1]} : vector<8x512xf32> to vector<8x128xf32>
    %255 = arith.negf %254 : vector<8x128xf32>
    %256 = math.exp %255 : vector<8x128xf32>
    %cst_93 = arith.constant 1.000000e+00 : f32
    %257 = vector.broadcast %cst_93 : f32 to vector<8x128xf32>
    %258 = arith.addf %257, %256 : vector<8x128xf32>
    %259 = arith.divf %257, %258 : vector<8x128xf32>
    %260 = arith.mulf %251, %232 : vector<8x128xf32>
    %261 = arith.mulf %245, %253 : vector<8x128xf32>
    %262 = arith.addf %260, %261 : vector<8x128xf32>
    %263 = math.tanh %262 : vector<8x128xf32>
    %264 = arith.mulf %259, %263 : vector<8x128xf32>
    %c48_94 = arith.constant 48 : index
    %c0_95 = arith.constant 0 : index
    %265 = vector.load %arg11[%c48_94, %c0_95] : memref<64x128xf32, #tpu.memory_space<vmem>>, vector<8x128xf32>
    tpu.vector_store %arg11[%c48_94, %c0_95], %264 {strides = array<i32>} : memref<64x128xf32, #tpu.memory_space<vmem>>, vector<8x128xf32>,
    %c56_96 = arith.constant 56 : index
    %c0_97 = arith.constant 0 : index
    %266 = vector.load %arg10[%c56_96, %c0_97] : memref<64x512xf32, #tpu.memory_space<vmem>>, vector<8x512xf32>
    %267 = arith.truncf %264 : vector<8x128xf32> to vector<8x128xbf16>
    %cst_98 = arith.constant dense<0.000000e+00> : vector<8x512xf32>
    %268 = tpu.matmul %267, %53, %cst_98 {dimension_numbers = #tpu.dot_dimension_numbers<[1], [0], [0], [1], [0, 0, 1, 1], [], []>} : vector<8x128xbf16>, vector<128x512xbf16>, vector<8x512xf32> -> vector<8x512xf32>
    %269 = arith.addf %266, %268 : vector<8x512xf32>
    %270 = vector.extract_strided_slice %269 {offsets = [0, 0], sizes = [8, 128], strides = [1, 1]} : vector<8x512xf32> to vector<8x128xf32>
    %271 = arith.negf %270 : vector<8x128xf32>
    %272 = math.exp %271 : vector<8x128xf32>
    %cst_99 = arith.constant 1.000000e+00 : f32
    %273 = vector.broadcast %cst_99 : f32 to vector<8x128xf32>
    %274 = arith.addf %273, %272 : vector<8x128xf32>
    %275 = arith.divf %273, %274 : vector<8x128xf32>
    %276 = vector.extract_strided_slice %269 {offsets = [0, 128], sizes = [8, 128], strides = [1, 1]} : vector<8x512xf32> to vector<8x128xf32>
    %277 = arith.negf %276 : vector<8x128xf32>
    %278 = math.exp %277 : vector<8x128xf32>
    %cst_100 = arith.constant 1.000000e+00 : f32
    %279 = vector.broadcast %cst_100 : f32 to vector<8x128xf32>
    %280 = arith.addf %279, %278 : vector<8x128xf32>
    %281 = arith.divf %279, %280 : vector<8x128xf32>
    %282 = vector.extract_strided_slice %269 {offsets = [0, 256], sizes = [8, 128], strides = [1, 1]} : vector<8x512xf32> to vector<8x128xf32>
    %283 = math.tanh %282 : vector<8x128xf32>
    %284 = vector.extract_strided_slice %269 {offsets = [0, 384], sizes = [8, 128], strides = [1, 1]} : vector<8x512xf32> to vector<8x128xf32>
    %285 = arith.negf %284 : vector<8x128xf32>
    %286 = math.exp %285 : vector<8x128xf32>
    %cst_101 = arith.constant 1.000000e+00 : f32
    %287 = vector.broadcast %cst_101 : f32 to vector<8x128xf32>
    %288 = arith.addf %287, %286 : vector<8x128xf32>
    %289 = arith.divf %287, %288 : vector<8x128xf32>
    %290 = arith.mulf %281, %262 : vector<8x128xf32>
    %291 = arith.mulf %275, %283 : vector<8x128xf32>
    %292 = arith.addf %290, %291 : vector<8x128xf32>
    %293 = math.tanh %292 : vector<8x128xf32>
    %294 = arith.mulf %289, %293 : vector<8x128xf32>
    %c56_102 = arith.constant 56 : index
    %c0_103 = arith.constant 0 : index
    %295 = vector.load %arg11[%c56_102, %c0_103] : memref<64x128xf32, #tpu.memory_space<vmem>>, vector<8x128xf32>
    tpu.vector_store %arg11[%c56_102, %c0_103], %294 {strides = array<i32>} : memref<64x128xf32, #tpu.memory_space<vmem>>, vector<8x128xf32>,
    %c0_104 = arith.constant 0 : index
    %c0_105 = arith.constant 0 : index
    %296 = vector.load %arg11[%c0_104, %c0_105] : memref<64x128xf32, #tpu.memory_space<vmem>>, vector<8x128xf32>
    %c56_106 = arith.constant 56 : index
    %c0_107 = arith.constant 0 : index
    %297 = vector.load %arg11[%c56_106, %c0_107] : memref<64x128xf32, #tpu.memory_space<vmem>>, vector<8x128xf32>
    %298 = arith.select %21, %296, %297 : vector<8x128xi1>, vector<8x128xf32>
    %c0_108 = arith.constant 0 : index
    %c0_109 = arith.constant 0 : index
    %299 = vector.load %arg11[%c0_108, %c0_109] : memref<64x128xf32, #tpu.memory_space<vmem>>, vector<8x128xf32>
    tpu.vector_store %arg11[%c0_108, %c0_109], %298 {strides = array<i32>} : memref<64x128xf32, #tpu.memory_space<vmem>>, vector<8x128xf32>,
    %300 = arith.select %21, %297, %296 : vector<8x128xi1>, vector<8x128xf32>
    %c56_110 = arith.constant 56 : index
    %c0_111 = arith.constant 0 : index
    %301 = vector.load %arg11[%c56_110, %c0_111] : memref<64x128xf32, #tpu.memory_space<vmem>>, vector<8x128xf32>
    tpu.vector_store %arg11[%c56_110, %c0_111], %300 {strides = array<i32>} : memref<64x128xf32, #tpu.memory_space<vmem>>, vector<8x128xf32>,
    %c8_112 = arith.constant 8 : index
    %c0_113 = arith.constant 0 : index
    %302 = vector.load %arg11[%c8_112, %c0_113] : memref<64x128xf32, #tpu.memory_space<vmem>>, vector<8x128xf32>
    %c48_114 = arith.constant 48 : index
    %c0_115 = arith.constant 0 : index
    %303 = vector.load %arg11[%c48_114, %c0_115] : memref<64x128xf32, #tpu.memory_space<vmem>>, vector<8x128xf32>
    %304 = arith.select %21, %302, %303 : vector<8x128xi1>, vector<8x128xf32>
    %c8_116 = arith.constant 8 : index
    %c0_117 = arith.constant 0 : index
    %305 = vector.load %arg11[%c8_116, %c0_117] : memref<64x128xf32, #tpu.memory_space<vmem>>, vector<8x128xf32>
    tpu.vector_store %arg11[%c8_116, %c0_117], %304 {strides = array<i32>} : memref<64x128xf32, #tpu.memory_space<vmem>>, vector<8x128xf32>,
    %306 = arith.select %21, %303, %302 : vector<8x128xi1>, vector<8x128xf32>
    %c48_118 = arith.constant 48 : index
    %c0_119 = arith.constant 0 : index
    %307 = vector.load %arg11[%c48_118, %c0_119] : memref<64x128xf32, #tpu.memory_space<vmem>>, vector<8x128xf32>
    tpu.vector_store %arg11[%c48_118, %c0_119], %306 {strides = array<i32>} : memref<64x128xf32, #tpu.memory_space<vmem>>, vector<8x128xf32>,
    %c16_120 = arith.constant 16 : index
    %c0_121 = arith.constant 0 : index
    %308 = vector.load %arg11[%c16_120, %c0_121] : memref<64x128xf32, #tpu.memory_space<vmem>>, vector<8x128xf32>
    %c40_122 = arith.constant 40 : index
    %c0_123 = arith.constant 0 : index
    %309 = vector.load %arg11[%c40_122, %c0_123] : memref<64x128xf32, #tpu.memory_space<vmem>>, vector<8x128xf32>
    %310 = arith.select %21, %308, %309 : vector<8x128xi1>, vector<8x128xf32>
    %c16_124 = arith.constant 16 : index
    %c0_125 = arith.constant 0 : index
    %311 = vector.load %arg11[%c16_124, %c0_125] : memref<64x128xf32, #tpu.memory_space<vmem>>, vector<8x128xf32>
    tpu.vector_store %arg11[%c16_124, %c0_125], %310 {strides = array<i32>} : memref<64x128xf32, #tpu.memory_space<vmem>>, vector<8x128xf32>,
    %312 = arith.select %21, %309, %308 : vector<8x128xi1>, vector<8x128xf32>
    %c40_126 = arith.constant 40 : index
    %c0_127 = arith.constant 0 : index
    %313 = vector.load %arg11[%c40_126, %c0_127] : memref<64x128xf32, #tpu.memory_space<vmem>>, vector<8x128xf32>
    tpu.vector_store %arg11[%c40_126, %c0_127], %312 {strides = array<i32>} : memref<64x128xf32, #tpu.memory_space<vmem>>, vector<8x128xf32>,
    %c24_128 = arith.constant 24 : index
    %c0_129 = arith.constant 0 : index
    %314 = vector.load %arg11[%c24_128, %c0_129] : memref<64x128xf32, #tpu.memory_space<vmem>>, vector<8x128xf32>
    %c32_130 = arith.constant 32 : index
    %c0_131 = arith.constant 0 : index
    %315 = vector.load %arg11[%c32_130, %c0_131] : memref<64x128xf32, #tpu.memory_space<vmem>>, vector<8x128xf32>
    %316 = arith.select %21, %314, %315 : vector<8x128xi1>, vector<8x128xf32>
    %c24_132 = arith.constant 24 : index
    %c0_133 = arith.constant 0 : index
    %317 = vector.load %arg11[%c24_132, %c0_133] : memref<64x128xf32, #tpu.memory_space<vmem>>, vector<8x128xf32>
    tpu.vector_store %arg11[%c24_132, %c0_133], %316 {strides = array<i32>} : memref<64x128xf32, #tpu.memory_space<vmem>>, vector<8x128xf32>,
    %318 = arith.select %21, %315, %314 : vector<8x128xi1>, vector<8x128xf32>
    %c32_134 = arith.constant 32 : index
    %c0_135 = arith.constant 0 : index
    %319 = vector.load %arg11[%c32_134, %c0_135] : memref<64x128xf32, #tpu.memory_space<vmem>>, vector<8x128xf32>
    tpu.vector_store %arg11[%c32_134, %c0_135], %318 {strides = array<i32>} : memref<64x128xf32, #tpu.memory_space<vmem>>, vector<8x128xf32>,
    %c0_136 = arith.constant 0 : index
    %c0_137 = arith.constant 0 : index
    %320 = vector.load %arg11[%c0_136, %c0_137] : memref<64x128xf32, #tpu.memory_space<vmem>>, vector<64x128xf32>
    %c0_138 = arith.constant 0 : index
    %c0_139 = arith.constant 0 : index
    %321 = vector.load %arg4[%c0_138, %c0_139] : memref<128x512xf32, #tpu.memory_space<vmem>>, vector<128x512xf32>
    %cst_140 = arith.constant dense<0.000000e+00> : vector<64x512xf32>
    %322 = tpu.matmul %320, %321, %cst_140 {dimension_numbers = #tpu.dot_dimension_numbers<[1], [0], [0], [1], [0, 0, 1, 1], [], []>} : vector<64x128xf32>, vector<128x512xf32>, vector<64x512xf32> -> vector<64x512xf32>
    %c0_141 = arith.constant 0 : index
    %c0_142 = arith.constant 0 : index
    %323 = vector.load %arg6[%c0_141, %c0_142] : memref<1x512xf32, #tpu.memory_space<vmem>>, vector<1x512xf32>
    %324 = vector.broadcast %323 : vector<1x512xf32> to vector<64x512xf32>
    %325 = arith.addf %322, %324 : vector<64x512xf32>
    %c0_143 = arith.constant 0 : index
    %c0_144 = arith.constant 0 : index
    %326 = vector.load %arg10[%c0_143, %c0_144] : memref<64x512xf32, #tpu.memory_space<vmem>>, vector<64x512xf32>
    tpu.vector_store %arg10[%c0_143, %c0_144], %325 {strides = array<i32>} : memref<64x512xf32, #tpu.memory_space<vmem>>, vector<64x512xf32>,
    %c0_145 = arith.constant 0 : index
    %c0_146 = arith.constant 0 : index
    %327 = vector.load %arg10[%c0_145, %c0_146] : memref<64x512xf32, #tpu.memory_space<vmem>>, vector<8x512xf32>
    %c56_147 = arith.constant 56 : index
    %c0_148 = arith.constant 0 : index
    %328 = vector.load %arg10[%c56_147, %c0_148] : memref<64x512xf32, #tpu.memory_space<vmem>>, vector<8x512xf32>
    %329 = arith.select %18, %327, %328 : vector<8x512xi1>, vector<8x512xf32>
    %c0_149 = arith.constant 0 : index
    %c0_150 = arith.constant 0 : index
    %330 = vector.load %arg10[%c0_149, %c0_150] : memref<64x512xf32, #tpu.memory_space<vmem>>, vector<8x512xf32>
    tpu.vector_store %arg10[%c0_149, %c0_150], %329 {strides = array<i32>} : memref<64x512xf32, #tpu.memory_space<vmem>>, vector<8x512xf32>,
    %331 = arith.select %18, %328, %327 : vector<8x512xi1>, vector<8x512xf32>
    %c56_151 = arith.constant 56 : index
    %c0_152 = arith.constant 0 : index
    %332 = vector.load %arg10[%c56_151, %c0_152] : memref<64x512xf32, #tpu.memory_space<vmem>>, vector<8x512xf32>
    tpu.vector_store %arg10[%c56_151, %c0_152], %331 {strides = array<i32>} : memref<64x512xf32, #tpu.memory_space<vmem>>, vector<8x512xf32>,
    %c8_153 = arith.constant 8 : index
    %c0_154 = arith.constant 0 : index
    %333 = vector.load %arg10[%c8_153, %c0_154] : memref<64x512xf32, #tpu.memory_space<vmem>>, vector<8x512xf32>
    %c48_155 = arith.constant 48 : index
    %c0_156 = arith.constant 0 : index
    %334 = vector.load %arg10[%c48_155, %c0_156] : memref<64x512xf32, #tpu.memory_space<vmem>>, vector<8x512xf32>
    %335 = arith.select %18, %333, %334 : vector<8x512xi1>, vector<8x512xf32>
    %c8_157 = arith.constant 8 : index
    %c0_158 = arith.constant 0 : index
    %336 = vector.load %arg10[%c8_157, %c0_158] : memref<64x512xf32, #tpu.memory_space<vmem>>, vector<8x512xf32>
    tpu.vector_store %arg10[%c8_157, %c0_158], %335 {strides = array<i32>} : memref<64x512xf32, #tpu.memory_space<vmem>>, vector<8x512xf32>,
    %337 = arith.select %18, %334, %333 : vector<8x512xi1>, vector<8x512xf32>
    %c48_159 = arith.constant 48 : index
    %c0_160 = arith.constant 0 : index
    %338 = vector.load %arg10[%c48_159, %c0_160] : memref<64x512xf32, #tpu.memory_space<vmem>>, vector<8x512xf32>
    tpu.vector_store %arg10[%c48_159, %c0_160], %337 {strides = array<i32>} : memref<64x512xf32, #tpu.memory_space<vmem>>, vector<8x512xf32>,
    %c16_161 = arith.constant 16 : index
    %c0_162 = arith.constant 0 : index
    %339 = vector.load %arg10[%c16_161, %c0_162] : memref<64x512xf32, #tpu.memory_space<vmem>>, vector<8x512xf32>
    %c40_163 = arith.constant 40 : index
    %c0_164 = arith.constant 0 : index
    %340 = vector.load %arg10[%c40_163, %c0_164] : memref<64x512xf32, #tpu.memory_space<vmem>>, vector<8x512xf32>
    %341 = arith.select %18, %339, %340 : vector<8x512xi1>, vector<8x512xf32>
    %c16_165 = arith.constant 16 : index
    %c0_166 = arith.constant 0 : index
    %342 = vector.load %arg10[%c16_165, %c0_166] : memref<64x512xf32, #tpu.memory_space<vmem>>, vector<8x512xf32>
    tpu.vector_store %arg10[%c16_165, %c0_166], %341 {strides = array<i32>} : memref<64x512xf32, #tpu.memory_space<vmem>>, vector<8x512xf32>,
    %343 = arith.select %18, %340, %339 : vector<8x512xi1>, vector<8x512xf32>
    %c40_167 = arith.constant 40 : index
    %c0_168 = arith.constant 0 : index
    %344 = vector.load %arg10[%c40_167, %c0_168] : memref<64x512xf32, #tpu.memory_space<vmem>>, vector<8x512xf32>
    tpu.vector_store %arg10[%c40_167, %c0_168], %343 {strides = array<i32>} : memref<64x512xf32, #tpu.memory_space<vmem>>, vector<8x512xf32>,
    %c24_169 = arith.constant 24 : index
    %c0_170 = arith.constant 0 : index
    %345 = vector.load %arg10[%c24_169, %c0_170] : memref<64x512xf32, #tpu.memory_space<vmem>>, vector<8x512xf32>
    %c32_171 = arith.constant 32 : index
    %c0_172 = arith.constant 0 : index
    %346 = vector.load %arg10[%c32_171, %c0_172] : memref<64x512xf32, #tpu.memory_space<vmem>>, vector<8x512xf32>
    %347 = arith.select %18, %345, %346 : vector<8x512xi1>, vector<8x512xf32>
    %c24_173 = arith.constant 24 : index
    %c0_174 = arith.constant 0 : index
    %348 = vector.load %arg10[%c24_173, %c0_174] : memref<64x512xf32, #tpu.memory_space<vmem>>, vector<8x512xf32>
    tpu.vector_store %arg10[%c24_173, %c0_174], %347 {strides = array<i32>} : memref<64x512xf32, #tpu.memory_space<vmem>>, vector<8x512xf32>,
    %349 = arith.select %18, %346, %345 : vector<8x512xi1>, vector<8x512xf32>
    %c32_175 = arith.constant 32 : index
    %c0_176 = arith.constant 0 : index
    %350 = vector.load %arg10[%c32_175, %c0_176] : memref<64x512xf32, #tpu.memory_space<vmem>>, vector<8x512xf32>
    tpu.vector_store %arg10[%c32_175, %c0_176], %349 {strides = array<i32>} : memref<64x512xf32, #tpu.memory_space<vmem>>, vector<8x512xf32>,
    %c0_177 = arith.constant 0 : index
    %c0_178 = arith.constant 0 : index
    %351 = vector.load %arg5[%c0_177, %c0_178] : memref<128x512xbf16, #tpu.memory_space<vmem>>, vector<128x512xbf16>
    %cst_179 = arith.constant 0.000000e+00 : f32
    %352 = vector.broadcast %cst_179 : f32 to vector<8x128xf32>
    %cst_180 = arith.constant 0.000000e+00 : f32
    %353 = vector.broadcast %cst_180 : f32 to vector<8x128xf32>
    %c0_181 = arith.constant 0 : index
    %c0_182 = arith.constant 0 : index
    %354 = vector.load %arg10[%c0_181, %c0_182] : memref<64x512xf32, #tpu.memory_space<vmem>>, vector<8x512xf32>
    %355 = arith.truncf %352 : vector<8x128xf32> to vector<8x128xbf16>
    %cst_183 = arith.constant dense<0.000000e+00> : vector<8x512xf32>
    %356 = tpu.matmul %355, %351, %cst_183 {dimension_numbers = #tpu.dot_dimension_numbers<[1], [0], [0], [1], [0, 0, 1, 1], [], []>} : vector<8x128xbf16>, vector<128x512xbf16>, vector<8x512xf32> -> vector<8x512xf32>
    %357 = arith.addf %354, %356 : vector<8x512xf32>
    %358 = vector.extract_strided_slice %357 {offsets = [0, 0], sizes = [8, 128], strides = [1, 1]} : vector<8x512xf32> to vector<8x128xf32>
    %359 = arith.negf %358 : vector<8x128xf32>
    %360 = math.exp %359 : vector<8x128xf32>
    %cst_184 = arith.constant 1.000000e+00 : f32
    %361 = vector.broadcast %cst_184 : f32 to vector<8x128xf32>
    %362 = arith.addf %361, %360 : vector<8x128xf32>
    %363 = arith.divf %361, %362 : vector<8x128xf32>
    %364 = vector.extract_strided_slice %357 {offsets = [0, 128], sizes = [8, 128], strides = [1, 1]} : vector<8x512xf32> to vector<8x128xf32>
    %365 = arith.negf %364 : vector<8x128xf32>
    %366 = math.exp %365 : vector<8x128xf32>
    %cst_185 = arith.constant 1.000000e+00 : f32
    %367 = vector.broadcast %cst_185 : f32 to vector<8x128xf32>
    %368 = arith.addf %367, %366 : vector<8x128xf32>
    %369 = arith.divf %367, %368 : vector<8x128xf32>
    %370 = vector.extract_strided_slice %357 {offsets = [0, 256], sizes = [8, 128], strides = [1, 1]} : vector<8x512xf32> to vector<8x128xf32>
    %371 = math.tanh %370 : vector<8x128xf32>
    %372 = vector.extract_strided_slice %357 {offsets = [0, 384], sizes = [8, 128], strides = [1, 1]} : vector<8x512xf32> to vector<8x128xf32>
    %373 = arith.negf %372 : vector<8x128xf32>
    %374 = math.exp %373 : vector<8x128xf32>
    %cst_186 = arith.constant 1.000000e+00 : f32
    %375 = vector.broadcast %cst_186 : f32 to vector<8x128xf32>
    %376 = arith.addf %375, %374 : vector<8x128xf32>
    %377 = arith.divf %375, %376 : vector<8x128xf32>
    %378 = arith.mulf %369, %353 : vector<8x128xf32>
    %379 = arith.mulf %363, %371 : vector<8x128xf32>
    %380 = arith.addf %378, %379 : vector<8x128xf32>
    %381 = math.tanh %380 : vector<8x128xf32>
    %382 = arith.mulf %377, %381 : vector<8x128xf32>
    %c8_187 = arith.constant 8 : index
    %c0_188 = arith.constant 0 : index
    %383 = vector.load %arg10[%c8_187, %c0_188] : memref<64x512xf32, #tpu.memory_space<vmem>>, vector<8x512xf32>
    %384 = arith.truncf %382 : vector<8x128xf32> to vector<8x128xbf16>
    %cst_189 = arith.constant dense<0.000000e+00> : vector<8x512xf32>
    %385 = tpu.matmul %384, %351, %cst_189 {dimension_numbers = #tpu.dot_dimension_numbers<[1], [0], [0], [1], [0, 0, 1, 1], [], []>} : vector<8x128xbf16>, vector<128x512xbf16>, vector<8x512xf32> -> vector<8x512xf32>
    %386 = arith.addf %383, %385 : vector<8x512xf32>
    %387 = vector.extract_strided_slice %386 {offsets = [0, 0], sizes = [8, 128], strides = [1, 1]} : vector<8x512xf32> to vector<8x128xf32>
    %388 = arith.negf %387 : vector<8x128xf32>
    %389 = math.exp %388 : vector<8x128xf32>
    %cst_190 = arith.constant 1.000000e+00 : f32
    %390 = vector.broadcast %cst_190 : f32 to vector<8x128xf32>
    %391 = arith.addf %390, %389 : vector<8x128xf32>
    %392 = arith.divf %390, %391 : vector<8x128xf32>
    %393 = vector.extract_strided_slice %386 {offsets = [0, 128], sizes = [8, 128], strides = [1, 1]} : vector<8x512xf32> to vector<8x128xf32>
    %394 = arith.negf %393 : vector<8x128xf32>
    %395 = math.exp %394 : vector<8x128xf32>
    %cst_191 = arith.constant 1.000000e+00 : f32
    %396 = vector.broadcast %cst_191 : f32 to vector<8x128xf32>
    %397 = arith.addf %396, %395 : vector<8x128xf32>
    %398 = arith.divf %396, %397 : vector<8x128xf32>
    %399 = vector.extract_strided_slice %386 {offsets = [0, 256], sizes = [8, 128], strides = [1, 1]} : vector<8x512xf32> to vector<8x128xf32>
    %400 = math.tanh %399 : vector<8x128xf32>
    %401 = vector.extract_strided_slice %386 {offsets = [0, 384], sizes = [8, 128], strides = [1, 1]} : vector<8x512xf32> to vector<8x128xf32>
    %402 = arith.negf %401 : vector<8x128xf32>
    %403 = math.exp %402 : vector<8x128xf32>
    %cst_192 = arith.constant 1.000000e+00 : f32
    %404 = vector.broadcast %cst_192 : f32 to vector<8x128xf32>
    %405 = arith.addf %404, %403 : vector<8x128xf32>
    %406 = arith.divf %404, %405 : vector<8x128xf32>
    %407 = arith.mulf %398, %380 : vector<8x128xf32>
    %408 = arith.mulf %392, %400 : vector<8x128xf32>
    %409 = arith.addf %407, %408 : vector<8x128xf32>
    %410 = math.tanh %409 : vector<8x128xf32>
    %411 = arith.mulf %406, %410 : vector<8x128xf32>
    %c16_193 = arith.constant 16 : index
    %c0_194 = arith.constant 0 : index
    %412 = vector.load %arg10[%c16_193, %c0_194] : memref<64x512xf32, #tpu.memory_space<vmem>>, vector<8x512xf32>
    %413 = arith.truncf %411 : vector<8x128xf32> to vector<8x128xbf16>
    %cst_195 = arith.constant dense<0.000000e+00> : vector<8x512xf32>
    %414 = tpu.matmul %413, %351, %cst_195 {dimension_numbers = #tpu.dot_dimension_numbers<[1], [0], [0], [1], [0, 0, 1, 1], [], []>} : vector<8x128xbf16>, vector<128x512xbf16>, vector<8x512xf32> -> vector<8x512xf32>
    %415 = arith.addf %412, %414 : vector<8x512xf32>
    %416 = vector.extract_strided_slice %415 {offsets = [0, 0], sizes = [8, 128], strides = [1, 1]} : vector<8x512xf32> to vector<8x128xf32>
    %417 = arith.negf %416 : vector<8x128xf32>
    %418 = math.exp %417 : vector<8x128xf32>
    %cst_196 = arith.constant 1.000000e+00 : f32
    %419 = vector.broadcast %cst_196 : f32 to vector<8x128xf32>
    %420 = arith.addf %419, %418 : vector<8x128xf32>
    %421 = arith.divf %419, %420 : vector<8x128xf32>
    %422 = vector.extract_strided_slice %415 {offsets = [0, 128], sizes = [8, 128], strides = [1, 1]} : vector<8x512xf32> to vector<8x128xf32>
    %423 = arith.negf %422 : vector<8x128xf32>
    %424 = math.exp %423 : vector<8x128xf32>
    %cst_197 = arith.constant 1.000000e+00 : f32
    %425 = vector.broadcast %cst_197 : f32 to vector<8x128xf32>
    %426 = arith.addf %425, %424 : vector<8x128xf32>
    %427 = arith.divf %425, %426 : vector<8x128xf32>
    %428 = vector.extract_strided_slice %415 {offsets = [0, 256], sizes = [8, 128], strides = [1, 1]} : vector<8x512xf32> to vector<8x128xf32>
    %429 = math.tanh %428 : vector<8x128xf32>
    %430 = vector.extract_strided_slice %415 {offsets = [0, 384], sizes = [8, 128], strides = [1, 1]} : vector<8x512xf32> to vector<8x128xf32>
    %431 = arith.negf %430 : vector<8x128xf32>
    %432 = math.exp %431 : vector<8x128xf32>
    %cst_198 = arith.constant 1.000000e+00 : f32
    %433 = vector.broadcast %cst_198 : f32 to vector<8x128xf32>
    %434 = arith.addf %433, %432 : vector<8x128xf32>
    %435 = arith.divf %433, %434 : vector<8x128xf32>
    %436 = arith.mulf %427, %409 : vector<8x128xf32>
    %437 = arith.mulf %421, %429 : vector<8x128xf32>
    %438 = arith.addf %436, %437 : vector<8x128xf32>
    %439 = math.tanh %438 : vector<8x128xf32>
    %440 = arith.mulf %435, %439 : vector<8x128xf32>
    %c24_199 = arith.constant 24 : index
    %c0_200 = arith.constant 0 : index
    %441 = vector.load %arg10[%c24_199, %c0_200] : memref<64x512xf32, #tpu.memory_space<vmem>>, vector<8x512xf32>
    %442 = arith.truncf %440 : vector<8x128xf32> to vector<8x128xbf16>
    %cst_201 = arith.constant dense<0.000000e+00> : vector<8x512xf32>
    %443 = tpu.matmul %442, %351, %cst_201 {dimension_numbers = #tpu.dot_dimension_numbers<[1], [0], [0], [1], [0, 0, 1, 1], [], []>} : vector<8x128xbf16>, vector<128x512xbf16>, vector<8x512xf32> -> vector<8x512xf32>
    %444 = arith.addf %441, %443 : vector<8x512xf32>
    %445 = vector.extract_strided_slice %444 {offsets = [0, 0], sizes = [8, 128], strides = [1, 1]} : vector<8x512xf32> to vector<8x128xf32>
    %446 = arith.negf %445 : vector<8x128xf32>
    %447 = math.exp %446 : vector<8x128xf32>
    %cst_202 = arith.constant 1.000000e+00 : f32
    %448 = vector.broadcast %cst_202 : f32 to vector<8x128xf32>
    %449 = arith.addf %448, %447 : vector<8x128xf32>
    %450 = arith.divf %448, %449 : vector<8x128xf32>
    %451 = vector.extract_strided_slice %444 {offsets = [0, 128], sizes = [8, 128], strides = [1, 1]} : vector<8x512xf32> to vector<8x128xf32>
    %452 = arith.negf %451 : vector<8x128xf32>
    %453 = math.exp %452 : vector<8x128xf32>
    %cst_203 = arith.constant 1.000000e+00 : f32
    %454 = vector.broadcast %cst_203 : f32 to vector<8x128xf32>
    %455 = arith.addf %454, %453 : vector<8x128xf32>
    %456 = arith.divf %454, %455 : vector<8x128xf32>
    %457 = vector.extract_strided_slice %444 {offsets = [0, 256], sizes = [8, 128], strides = [1, 1]} : vector<8x512xf32> to vector<8x128xf32>
    %458 = math.tanh %457 : vector<8x128xf32>
    %459 = vector.extract_strided_slice %444 {offsets = [0, 384], sizes = [8, 128], strides = [1, 1]} : vector<8x512xf32> to vector<8x128xf32>
    %460 = arith.negf %459 : vector<8x128xf32>
    %461 = math.exp %460 : vector<8x128xf32>
    %cst_204 = arith.constant 1.000000e+00 : f32
    %462 = vector.broadcast %cst_204 : f32 to vector<8x128xf32>
    %463 = arith.addf %462, %461 : vector<8x128xf32>
    %464 = arith.divf %462, %463 : vector<8x128xf32>
    %465 = arith.mulf %456, %438 : vector<8x128xf32>
    %466 = arith.mulf %450, %458 : vector<8x128xf32>
    %467 = arith.addf %465, %466 : vector<8x128xf32>
    %468 = math.tanh %467 : vector<8x128xf32>
    %469 = arith.mulf %464, %468 : vector<8x128xf32>
    %c32_205 = arith.constant 32 : index
    %c0_206 = arith.constant 0 : index
    %470 = vector.load %arg10[%c32_205, %c0_206] : memref<64x512xf32, #tpu.memory_space<vmem>>, vector<8x512xf32>
    %471 = arith.truncf %469 : vector<8x128xf32> to vector<8x128xbf16>
    %cst_207 = arith.constant dense<0.000000e+00> : vector<8x512xf32>
    %472 = tpu.matmul %471, %351, %cst_207 {dimension_numbers = #tpu.dot_dimension_numbers<[1], [0], [0], [1], [0, 0, 1, 1], [], []>} : vector<8x128xbf16>, vector<128x512xbf16>, vector<8x512xf32> -> vector<8x512xf32>
    %473 = arith.addf %470, %472 : vector<8x512xf32>
    %474 = vector.extract_strided_slice %473 {offsets = [0, 0], sizes = [8, 128], strides = [1, 1]} : vector<8x512xf32> to vector<8x128xf32>
    %475 = arith.negf %474 : vector<8x128xf32>
    %476 = math.exp %475 : vector<8x128xf32>
    %cst_208 = arith.constant 1.000000e+00 : f32
    %477 = vector.broadcast %cst_208 : f32 to vector<8x128xf32>
    %478 = arith.addf %477, %476 : vector<8x128xf32>
    %479 = arith.divf %477, %478 : vector<8x128xf32>
    %480 = vector.extract_strided_slice %473 {offsets = [0, 128], sizes = [8, 128], strides = [1, 1]} : vector<8x512xf32> to vector<8x128xf32>
    %481 = arith.negf %480 : vector<8x128xf32>
    %482 = math.exp %481 : vector<8x128xf32>
    %cst_209 = arith.constant 1.000000e+00 : f32
    %483 = vector.broadcast %cst_209 : f32 to vector<8x128xf32>
    %484 = arith.addf %483, %482 : vector<8x128xf32>
    %485 = arith.divf %483, %484 : vector<8x128xf32>
    %486 = vector.extract_strided_slice %473 {offsets = [0, 256], sizes = [8, 128], strides = [1, 1]} : vector<8x512xf32> to vector<8x128xf32>
    %487 = math.tanh %486 : vector<8x128xf32>
    %488 = vector.extract_strided_slice %473 {offsets = [0, 384], sizes = [8, 128], strides = [1, 1]} : vector<8x512xf32> to vector<8x128xf32>
    %489 = arith.negf %488 : vector<8x128xf32>
    %490 = math.exp %489 : vector<8x128xf32>
    %cst_210 = arith.constant 1.000000e+00 : f32
    %491 = vector.broadcast %cst_210 : f32 to vector<8x128xf32>
    %492 = arith.addf %491, %490 : vector<8x128xf32>
    %493 = arith.divf %491, %492 : vector<8x128xf32>
    %494 = arith.mulf %485, %467 : vector<8x128xf32>
    %495 = arith.mulf %479, %487 : vector<8x128xf32>
    %496 = arith.addf %494, %495 : vector<8x128xf32>
    %497 = math.tanh %496 : vector<8x128xf32>
    %498 = arith.mulf %493, %497 : vector<8x128xf32>
    %c40_211 = arith.constant 40 : index
    %c0_212 = arith.constant 0 : index
    %499 = vector.load %arg10[%c40_211, %c0_212] : memref<64x512xf32, #tpu.memory_space<vmem>>, vector<8x512xf32>
    %500 = arith.truncf %498 : vector<8x128xf32> to vector<8x128xbf16>
    %cst_213 = arith.constant dense<0.000000e+00> : vector<8x512xf32>
    %501 = tpu.matmul %500, %351, %cst_213 {dimension_numbers = #tpu.dot_dimension_numbers<[1], [0], [0], [1], [0, 0, 1, 1], [], []>} : vector<8x128xbf16>, vector<128x512xbf16>, vector<8x512xf32> -> vector<8x512xf32>
    %502 = arith.addf %499, %501 : vector<8x512xf32>
    %503 = vector.extract_strided_slice %502 {offsets = [0, 0], sizes = [8, 128], strides = [1, 1]} : vector<8x512xf32> to vector<8x128xf32>
    %504 = arith.negf %503 : vector<8x128xf32>
    %505 = math.exp %504 : vector<8x128xf32>
    %cst_214 = arith.constant 1.000000e+00 : f32
    %506 = vector.broadcast %cst_214 : f32 to vector<8x128xf32>
    %507 = arith.addf %506, %505 : vector<8x128xf32>
    %508 = arith.divf %506, %507 : vector<8x128xf32>
    %509 = vector.extract_strided_slice %502 {offsets = [0, 128], sizes = [8, 128], strides = [1, 1]} : vector<8x512xf32> to vector<8x128xf32>
    %510 = arith.negf %509 : vector<8x128xf32>
    %511 = math.exp %510 : vector<8x128xf32>
    %cst_215 = arith.constant 1.000000e+00 : f32
    %512 = vector.broadcast %cst_215 : f32 to vector<8x128xf32>
    %513 = arith.addf %512, %511 : vector<8x128xf32>
    %514 = arith.divf %512, %513 : vector<8x128xf32>
    %515 = vector.extract_strided_slice %502 {offsets = [0, 256], sizes = [8, 128], strides = [1, 1]} : vector<8x512xf32> to vector<8x128xf32>
    %516 = math.tanh %515 : vector<8x128xf32>
    %517 = vector.extract_strided_slice %502 {offsets = [0, 384], sizes = [8, 128], strides = [1, 1]} : vector<8x512xf32> to vector<8x128xf32>
    %518 = arith.negf %517 : vector<8x128xf32>
    %519 = math.exp %518 : vector<8x128xf32>
    %cst_216 = arith.constant 1.000000e+00 : f32
    %520 = vector.broadcast %cst_216 : f32 to vector<8x128xf32>
    %521 = arith.addf %520, %519 : vector<8x128xf32>
    %522 = arith.divf %520, %521 : vector<8x128xf32>
    %523 = arith.mulf %514, %496 : vector<8x128xf32>
    %524 = arith.mulf %508, %516 : vector<8x128xf32>
    %525 = arith.addf %523, %524 : vector<8x128xf32>
    %526 = math.tanh %525 : vector<8x128xf32>
    %527 = arith.mulf %522, %526 : vector<8x128xf32>
    %c48_217 = arith.constant 48 : index
    %c0_218 = arith.constant 0 : index
    %528 = vector.load %arg10[%c48_217, %c0_218] : memref<64x512xf32, #tpu.memory_space<vmem>>, vector<8x512xf32>
    %529 = arith.truncf %527 : vector<8x128xf32> to vector<8x128xbf16>
    %cst_219 = arith.constant dense<0.000000e+00> : vector<8x512xf32>
    %530 = tpu.matmul %529, %351, %cst_219 {dimension_numbers = #tpu.dot_dimension_numbers<[1], [0], [0], [1], [0, 0, 1, 1], [], []>} : vector<8x128xbf16>, vector<128x512xbf16>, vector<8x512xf32> -> vector<8x512xf32>
    %531 = arith.addf %528, %530 : vector<8x512xf32>
    %532 = vector.extract_strided_slice %531 {offsets = [0, 0], sizes = [8, 128], strides = [1, 1]} : vector<8x512xf32> to vector<8x128xf32>
    %533 = arith.negf %532 : vector<8x128xf32>
    %534 = math.exp %533 : vector<8x128xf32>
    %cst_220 = arith.constant 1.000000e+00 : f32
    %535 = vector.broadcast %cst_220 : f32 to vector<8x128xf32>
    %536 = arith.addf %535, %534 : vector<8x128xf32>
    %537 = arith.divf %535, %536 : vector<8x128xf32>
    %538 = vector.extract_strided_slice %531 {offsets = [0, 128], sizes = [8, 128], strides = [1, 1]} : vector<8x512xf32> to vector<8x128xf32>
    %539 = arith.negf %538 : vector<8x128xf32>
    %540 = math.exp %539 : vector<8x128xf32>
    %cst_221 = arith.constant 1.000000e+00 : f32
    %541 = vector.broadcast %cst_221 : f32 to vector<8x128xf32>
    %542 = arith.addf %541, %540 : vector<8x128xf32>
    %543 = arith.divf %541, %542 : vector<8x128xf32>
    %544 = vector.extract_strided_slice %531 {offsets = [0, 256], sizes = [8, 128], strides = [1, 1]} : vector<8x512xf32> to vector<8x128xf32>
    %545 = math.tanh %544 : vector<8x128xf32>
    %546 = vector.extract_strided_slice %531 {offsets = [0, 384], sizes = [8, 128], strides = [1, 1]} : vector<8x512xf32> to vector<8x128xf32>
    %547 = arith.negf %546 : vector<8x128xf32>
    %548 = math.exp %547 : vector<8x128xf32>
    %cst_222 = arith.constant 1.000000e+00 : f32
    %549 = vector.broadcast %cst_222 : f32 to vector<8x128xf32>
    %550 = arith.addf %549, %548 : vector<8x128xf32>
    %551 = arith.divf %549, %550 : vector<8x128xf32>
    %552 = arith.mulf %543, %525 : vector<8x128xf32>
    %553 = arith.mulf %537, %545 : vector<8x128xf32>
    %554 = arith.addf %552, %553 : vector<8x128xf32>
    %555 = math.tanh %554 : vector<8x128xf32>
    %556 = arith.mulf %551, %555 : vector<8x128xf32>
    %c56_223 = arith.constant 56 : index
    %c0_224 = arith.constant 0 : index
    %557 = vector.load %arg10[%c56_223, %c0_224] : memref<64x512xf32, #tpu.memory_space<vmem>>, vector<8x512xf32>
    %558 = arith.truncf %556 : vector<8x128xf32> to vector<8x128xbf16>
    %cst_225 = arith.constant dense<0.000000e+00> : vector<8x512xf32>
    %559 = tpu.matmul %558, %351, %cst_225 {dimension_numbers = #tpu.dot_dimension_numbers<[1], [0], [0], [1], [0, 0, 1, 1], [], []>} : vector<8x128xbf16>, vector<128x512xbf16>, vector<8x512xf32> -> vector<8x512xf32>
    %560 = arith.addf %557, %559 : vector<8x512xf32>
    %561 = vector.extract_strided_slice %560 {offsets = [0, 0], sizes = [8, 128], strides = [1, 1]} : vector<8x512xf32> to vector<8x128xf32>
    %562 = arith.negf %561 : vector<8x128xf32>
    %563 = math.exp %562 : vector<8x128xf32>
    %cst_226 = arith.constant 1.000000e+00 : f32
    %564 = vector.broadcast %cst_226 : f32 to vector<8x128xf32>
    %565 = arith.addf %564, %563 : vector<8x128xf32>
    %566 = arith.divf %564, %565 : vector<8x128xf32>
    %567 = vector.extract_strided_slice %560 {offsets = [0, 128], sizes = [8, 128], strides = [1, 1]} : vector<8x512xf32> to vector<8x128xf32>
    %568 = arith.negf %567 : vector<8x128xf32>
    %569 = math.exp %568 : vector<8x128xf32>
    %cst_227 = arith.constant 1.000000e+00 : f32
    %570 = vector.broadcast %cst_227 : f32 to vector<8x128xf32>
    %571 = arith.addf %570, %569 : vector<8x128xf32>
    %572 = arith.divf %570, %571 : vector<8x128xf32>
    %573 = vector.extract_strided_slice %560 {offsets = [0, 256], sizes = [8, 128], strides = [1, 1]} : vector<8x512xf32> to vector<8x128xf32>
    %574 = math.tanh %573 : vector<8x128xf32>
    %575 = vector.extract_strided_slice %560 {offsets = [0, 384], sizes = [8, 128], strides = [1, 1]} : vector<8x512xf32> to vector<8x128xf32>
    %576 = arith.negf %575 : vector<8x128xf32>
    %577 = math.exp %576 : vector<8x128xf32>
    %cst_228 = arith.constant 1.000000e+00 : f32
    %578 = vector.broadcast %cst_228 : f32 to vector<8x128xf32>
    %579 = arith.addf %578, %577 : vector<8x128xf32>
    %580 = arith.divf %578, %579 : vector<8x128xf32>
    %581 = arith.mulf %572, %554 : vector<8x128xf32>
    %582 = arith.mulf %566, %574 : vector<8x128xf32>
    %583 = arith.addf %581, %582 : vector<8x128xf32>
    %584 = math.tanh %583 : vector<8x128xf32>
    %585 = arith.mulf %580, %584 : vector<8x128xf32>
    %586 = arith.select %21, %585, %382 : vector<8x128xi1>, vector<8x128xf32>
    %587 = vector.extract_strided_slice %586 {offsets = [0, 0], sizes = [2, 128], strides = [1, 1]} : vector<8x128xf32> to vector<2x128xf32>
    %588 = vector.extract_strided_slice %586 {offsets = [2, 0], sizes = [2, 128], strides = [1, 1]} : vector<8x128xf32> to vector<2x128xf32>
    %589 = vector.extract_strided_slice %586 {offsets = [4, 0], sizes = [2, 128], strides = [1, 1]} : vector<8x128xf32> to vector<2x128xf32>
    %590 = vector.extract_strided_slice %586 {offsets = [6, 0], sizes = [2, 128], strides = [1, 1]} : vector<8x128xf32> to vector<2x128xf32>
    %591 = tpu.concatenate %587, %588, %589, %590 in 1 : vector<2x128xf32>, vector<2x128xf32>, vector<2x128xf32>, vector<2x128xf32> -> vector<2x512xf32>
    %c0_229 = arith.constant 0 : index
    %c0_230 = arith.constant 0 : index
    %592 = vector.load %arg7[%c0_229, %c0_230] : memref<512x2xf32, #tpu.memory_space<vmem>>, vector<512x2xf32>
    %cst_231 = arith.constant dense<0.000000e+00> : vector<2x2xf32>
    %593 = tpu.matmul %591, %592, %cst_231 {dimension_numbers = #tpu.dot_dimension_numbers<[1], [0], [0], [1], [0, 0, 1, 1], [], []>} : vector<2x512xf32>, vector<512x2xf32>, vector<2x2xf32> -> vector<2x2xf32>
    %c0_232 = arith.constant 0 : index
    %c0_233 = arith.constant 0 : index
    %594 = vector.load %arg8[%c0_232, %c0_233] : memref<1x2xf32, #tpu.memory_space<vmem>>, vector<1x2xf32>
    %595 = vector.broadcast %594 : vector<1x2xf32> to vector<2x2xf32>
    %596 = arith.addf %593, %595 : vector<2x2xf32>
    %c0_234 = arith.constant 0 : index
    %c0_235 = arith.constant 0 : index
    %597 = vector.load %arg9[%c0_234, %c0_235] : memref<2x2xf32, #tpu.memory_space<vmem>>, vector<2x2xf32>
    tpu.vector_store %arg9[%c0_234, %c0_235], %596 {strides = array<i32>} : memref<2x2xf32, #tpu.memory_space<vmem>>, vector<2x2xf32>,
    return
  }
}

</mosaic_0001>

<llo_original>
// kernel: lstm_model_forward.1
$region0: #{lstm_model_forward.1}
  #allocation0 [shape = 'u32[]', space=smem, size = 0x4, offset = 0x4, fixed_abs, tag = 'smem constant byte address 0x4 - core index']
  #allocation1 [shape = 'u32[144,128]{1,0:T(1,128)}', space=vmem, size = 0x12000, scoped, tag = 'internal scratch']
  #allocation2 [shape = 'f32[64,512]{1,0:T(8,128)}', space=vmem, size = 0x20000, scoped, tag = 'scratch operand']
  #allocation3 [shape = 'f32[64,128]{1,0:T(8,128)}', space=vmem, size = 0x8000, scoped, tag = 'scratch operand']
  %s0 = inlined_call_operand.vmem [shape: f32[64,16], index: 0, kind: input, shape index: {}]
  %s1 = inlined_call_operand.vmem [shape: f32[16,512], index: 1, kind: input, shape index: {}]
  %s2 = inlined_call_operand.hbm [shape: bf16[128,512], index: 2, kind: input, shape index: {}]
  %s3 = inlined_call_operand.vmem [shape: f32[1,512], index: 3, kind: input, shape index: {}]
  %s4 = inlined_call_operand.vmem [shape: f32[128,512], index: 4, kind: input, shape index: {}]
  %s5 = inlined_call_operand.hbm [shape: bf16[128,512], index: 5, kind: input, shape index: {}]
  %s6 = inlined_call_operand.vmem [shape: f32[1,512], index: 6, kind: input, shape index: {}]
  %s7 = inlined_call_operand.vmem [shape: f32[512,2], index: 7, kind: input, shape index: {}]
  %s8 = inlined_call_operand.vmem [shape: f32[1,2], index: 8, kind: input, shape index: {}]
  %s9 = inlined_call_operand.hbm [shape: f32[2,2], index: 9, kind: output, shape index: {}]
  %s10 = sld [smem:[#allocation0]]
  $region54: #{lstm_model_forward.1} parent=0
    _
  %s12 = ssub.s32 1, %s10
  %s13 = scalar_select 0, %s12, %s10
  $region1: #{lstm_model_forward.1} parent=0
    #allocation4 [shape = 'u8[131072]{0}', space=vmem, size = 0x20000, scoped, tag = 'input window, operand 2, single buffered']
    #allocation5 [shape = 's32[1]{0}', space=sflag, size = 0x4, scoped, tag = 'scoped memory for lstm_model_forward.1']
    #allocation6 [shape = 's32[1]{0}', space=sflag, size = 0x4, scoped, tag = 'scoped memory for lstm_model_forward.1']
    #allocation7 [shape = 'u8[131072]{0}', space=vmem, size = 0x20000, scoped, tag = 'input window, operand 5, single buffered']
    #allocation8 [shape = 's32[1]{0}', space=sflag, size = 0x4, scoped, tag = 'scoped memory for lstm_model_forward.1']
    #allocation9 [shape = 'u8[1024]{0}', space=vmem, size = 0x400, scoped, tag = 'output window, operand 0, single buffered']
    %14 = vsyncpa [#allocation5], 0
    %15 = vsyncpa [#allocation8], 0
    %16 = vsyncpa [#allocation6], 0
    // Predicated region
    $region2: #{lstm_model_forward.1} parent=1 // pred_check
      _
    $region3: #{lstm_model_forward.1} parent=1 // pred_check_branch
      %18 = sbr.rel (0) target = $region5
    $region4: #{lstm_model_forward.1} parent=1 // pred_region
      _
    $region5: #{lstm_model_forward.1} parent=1 // pred_fallthru
      _
    // Predicated region
    $region6: #{lstm_model_forward.1} parent=1 // pred_check
      _
    $region7: #{lstm_model_forward.1} parent=1 // pred_check_branch
      %20 = sbr.rel (0) target = $region9
    $region8: #{lstm_model_forward.1} parent=1 // pred_region
      _
    $region9: #{lstm_model_forward.1} parent=1 // pred_fallthru
      _
    // Predicated region
    $region10: #{lstm_model_forward.1} parent=1 // pred_check
      _
    $region11: #{lstm_model_forward.1} parent=1 // pred_check_branch
      %22 = sbr.rel (0) target = $region13
    $region12: #{lstm_model_forward.1} parent=1 // pred_region
      %s24 = ssub.s32 4096, 4096
      %25 = vsyncadd [#allocation5], %s24
      %s26 = sshll.u32 [#allocation4], 4
      %s27 = int_to_ptr.vmem [resolvable:$true] %s26
      %32 = dma.hbm_to_vmem [thread:$0]  %s2, 4096, %s27, [#allocation5], 256, 256, 16
    $region13: #{lstm_model_forward.1} parent=1 // pred_fallthru
      _
    // Predicated region
    $region14: #{lstm_model_forward.1} parent=1 // pred_check
      _
    $region15: #{lstm_model_forward.1} parent=1 // pred_check_branch
      %34 = sbr.rel (0) target = $region17
    $region16: #{lstm_model_forward.1} parent=1 // pred_region
      _
    $region17: #{lstm_model_forward.1} parent=1 // pred_fallthru
      _
    // Predicated region
    $region18: #{lstm_model_forward.1} parent=1 // pred_check
      _
    $region19: #{lstm_model_forward.1} parent=1 // pred_check_branch
      %36 = sbr.rel (0) target = $region21
    $region20: #{lstm_model_forward.1} parent=1 // pred_region
      _
    $region21: #{lstm_model_forward.1} parent=1 // pred_fallthru
      _
    // Predicated region
    $region22: #{lstm_model_forward.1} parent=1 // pred_check
      _
    $region23: #{lstm_model_forward.1} parent=1 // pred_check_branch
      %38 = sbr.rel (0) target = $region25
    $region24: #{lstm_model_forward.1} parent=1 // pred_region
      %s40 = ssub.s32 4096, 4096
      %41 = vsyncadd [#allocation8], %s40
      %s42 = sshll.u32 [#allocation7], 4
      %s43 = int_to_ptr.vmem [resolvable:$true] %s42
      %48 = dma.hbm_to_vmem [thread:$0]  %s5, 4096, %s43, [#allocation8], 256, 256, 16
    $region25: #{lstm_model_forward.1} parent=1 // pred_fallthru
      _
    // Predicated region
    $region26: #{lstm_model_forward.1} parent=1 // pred_check
      _
    $region27: #{lstm_model_forward.1} parent=1 // pred_check_branch
      %50 = sbr.rel (0) target = $region29
    $region28: #{lstm_model_forward.1} parent=1 // pred_region
      _
    $region29: #{lstm_model_forward.1} parent=1 // pred_fallthru
      _
    // Predicated region
    $region30: #{lstm_model_forward.1} parent=1 // pred_check
      _
    $region31: #{lstm_model_forward.1} parent=1 // pred_check_branch
      %52 = sbr.rel (0) target = $region33
    $region32: #{lstm_model_forward.1} parent=1 // pred_region
      _
    $region33: #{lstm_model_forward.1} parent=1 // pred_fallthru
      _
    // Predicated region
    $region34: #{lstm_model_forward.1} parent=1 // pred_check
      _
    $region35: #{lstm_model_forward.1} parent=1 // pred_check_branch
      %54 = sbr.rel (0) target = $region37
    $region36: #{lstm_model_forward.1} parent=1 // pred_region
      _
    $region37: #{lstm_model_forward.1} parent=1 // pred_fallthru
      _
    // Predicated region
    $region38: #{lstm_model_forward.1} parent=1 // pred_check
      _
    $region39: #{lstm_model_forward.1} parent=1 // pred_check_branch
      %56 = sbr.rel (0) target = $region41
    $region40: #{lstm_model_forward.1} parent=1 // pred_region
      %57 = dma.done [#allocation5], 4096
    $region41: #{lstm_model_forward.1} parent=1 // pred_fallthru
      _
    // Predicated region
    $region42: #{lstm_model_forward.1} parent=1 // pred_check
      _
    $region43: #{lstm_model_forward.1} parent=1 // pred_check_branch
      %59 = sbr.rel (0) target = $region45
    $region44: #{lstm_model_forward.1} parent=1 // pred_region
      %60 = dma.done [#allocation8], 4096
    $region45: #{lstm_model_forward.1} parent=1 // pred_fallthru
      _
    %v62 = vlaneseq
    %v63 = vand.u32 %v62, 127
    %v64 = vadd.s32 %v63, 128
    %v65 = vadd.s32 %v63, 256
    %v66 = vadd.s32 %v63, 384
    %vm67 = vcmp.lt.s32.totalorder %v63, 0
    %v68 = vsub.s32 0, %v63
    %v69 = vsel %vm67, %v68, %v63
    %v70 = vshrl.u32 %v69, 7
    %v71 = vand.u32 %v69, 127
    %v72 = vsub.s32 0, %v71
    %v73 = vsel %vm67, %v72, %v71
    %vm74 = vcmp.lt.s32.totalorder %v64, 0
    %v75 = vsub.s32 0, %v64
    %v76 = vsel %vm74, %v75, %v64
    %v77 = vshrl.u32 %v76, 7
    %v78 = vand.u32 %v76, 127
    %v79 = vsub.s32 0, %v78
    %v80 = vsel %vm74, %v79, %v78
    %vm81 = vcmp.lt.s32.totalorder %v65, 0
    %v82 = vsub.s32 0, %v65
    %v83 = vsel %vm81, %v82, %v65
    %v84 = vshrl.u32 %v83, 7
    %v85 = vand.u32 %v83, 127
    %v86 = vsub.s32 0, %v85
    %v87 = vsel %vm81, %v86, %v85
    %vm88 = vcmp.lt.s32.totalorder %v66, 0
    %v89 = vsub.s32 0, %v66
    %v90 = vsel %vm88, %v89, %v66
    %v91 = vshrl.u32 %v90, 7
    %v92 = vand.u32 %v90, 127
    %v93 = vsub.s32 0, %v92
    %v94 = vsel %vm88, %v93, %v92
    %vm95 = vcmp.ne.s32.totalorder %v73, 0
    %vm96 = vcmp.ne.s32.totalorder %v80, 0
    %vm97 = vcmp.ne.s32.totalorder %v87, 0
    %vm98 = vcmp.ne.s32.totalorder %v94, 0
    %vm99 = vcmp.lt.s32.totalorder %v73, 0
    %vm100 = vcmp.lt.s32.totalorder %v80, 0
    %vm101 = vcmp.lt.s32.totalorder %v87, 0
    %vm102 = vcmp.lt.s32.totalorder %v94, 0
    %vm103 = vmand %vm99, %vm95
    %vm104 = vmand %vm100, %vm96
    %vm105 = vmand %vm101, %vm97
    %vm106 = vmand %vm102, %vm98
    %v107 = vadd.s32 %v73, 128
    %v108 = vadd.s32 %v80, 128
    %v109 = vadd.s32 %v87, 128
    %v110 = vadd.s32 %v94, 128
    %v111 = vsel %vm103, %v107, %v73
    %v112 = vsel %vm104, %v108, %v80
    %v113 = vsel %vm105, %v109, %v87
    %v114 = vsel %vm106, %v110, %v94
    %vm115 = vcmp.lt.s32.totalorder %v111, 64
    %vm116 = vcmp.lt.s32.totalorder %v112, 64
    %vm117 = vcmp.lt.s32.totalorder %v113, 64
    %vm118 = vcmp.lt.s32.totalorder %v114, 64
    %vm119 = vcmp.lt.s32.totalorder %v63, 64
    %v120 = vld [vmem:[%s0] sm:$0xff]
    %v121 = vld [vmem:[%s0 + $0x8] sm:$0xff]
    %v122 = vld [vmem:[%s0 + $0x10] sm:$0xff]
    %v123 = vld [vmem:[%s0 + $0x18] sm:$0xff]
    %v124 = vld [vmem:[%s0 + $0x20] sm:$0xff]
    %v125 = vld [vmem:[%s0 + $0x28] sm:$0xff]
    %v126 = vld [vmem:[%s0 + $0x30] sm:$0xff]
    %v127 = vld [vmem:[%s0 + $0x38] sm:$0xff]
    %v128 = vld [vmem:[%s1] sm:$0xff]
    %v129 = vld [vmem:[%s1 + $0x8] sm:$0xff]
    %v130 = vld [vmem:[%s1 + $0x10] sm:$0xff]
    %v131 = vld [vmem:[%s1 + $0x18] sm:$0xff]
    %v132 = vld [vmem:[%s1 + $0x20] sm:$0xff]
    %v133 = vld [vmem:[%s1 + $0x28] sm:$0xff]
    %v134 = vld [vmem:[%s1 + $0x30] sm:$0xff]
    %v135 = vld [vmem:[%s1 + $0x38] sm:$0xff]
    %v136 = vld [vmem:[%s3] sm:$0xf]
    %v138 = vlaneseq
    %v139 = vshrl.u32 %v138, 7
    %v140 = vsub.s32 0, %v139
    %v141 = vrot.slane %v136, %v140
    %v142 = vlaneseq
    %v143 = vshrl.u32 %v142, 7
    %v144 = vsub.s32 1, %v143
    %v145 = vrot.slane %v136, %v144
    %v146 = vlaneseq
    %v147 = vshrl.u32 %v146, 7
    %v148 = vsub.s32 2, %v147
    %v149 = vrot.slane %v136, %v148
    %v150 = vlaneseq
    %v151 = vshrl.u32 %v150, 7
    %v152 = vsub.s32 3, %v151
    %v153 = vrot.slane %v136, %v152
    %vm158 = vcmask 130048
    %v160 = vsel %vm158, %v120, 0
    %v163 = vsel %vm158, %v121, 0
    %v166 = vsel %vm158, %v122, 0
    %v169 = vsel %vm158, %v123, 0
    %v172 = vsel %vm158, %v124, 0
    %v175 = vsel %vm158, %v125, 0
    %v178 = vsel %vm158, %v126, 0
    %v181 = vsel %vm158, %v127, 0
    %183 = vmatprep.subr.mxu0 0.0
    %184 = vmatpush1.msra.mxu0 0.0
    %185 = vmatprep.subr.mxu0 0.0
    %186 = vmatpush1.msra.mxu0 0.0
    %187 = vmatprep.subr.mxu0 0.0
    %188 = vmatpush1.msra.mxu0 0.0
    %189 = vmatprep.subr.mxu0 0.0
    %190 = vmatpush1.msra.mxu0 0.0
    %191 = vmatprep.subr.mxu0 0.0
    %192 = vmatpush1.msra.mxu0 0.0
    %193 = vmatprep.subr.mxu0 0.0
    %194 = vmatpush1.msra.mxu0 0.0
    %195 = vmatprep.subr.mxu0 0.0
    %196 = vmatpush1.msra.mxu0 0.0
    %197 = vmatprep.subr.mxu0 0.0
    %198 = vmatpush1.msra.mxu0 0.0
    %199 = vmatprep.subr.mxu0 0.0
    %200 = vmatpush1.msra.mxu0 0.0
    %201 = vmatprep.subr.mxu0 0.0
    %202 = vmatpush1.msra.mxu0 0.0
    %203 = vmatprep.subr.mxu0 0.0
    %204 = vmatpush1.msra.mxu0 0.0
    %205 = vmatprep.subr.mxu0 0.0
    %206 = vmatpush1.msra.mxu0 0.0
    %207 = vmatprep.subr.mxu0 0.0
    %208 = vmatpush1.msra.mxu0 0.0
    %209 = vmatprep.subr.mxu0 0.0
    %210 = vmatpush1.msra.mxu0 0.0
    %211 = vmatprep.subr.mxu0 %v133
    %212 = vmatpush1.msra.mxu0 %v132
    %213 = vmatprep.subr.mxu0 %v129
    %214 = vmatpush1.msra.mxu0 %v128
    %215 = vmatprep.subr.mxu0 0.0
    %216 = vmatpush2.msra.mxu0 0.0
    %217 = vmatprep.subr.mxu0 0.0
    %218 = vmatpush2.msra.mxu0 0.0
    %219 = vmatprep.subr.mxu0 0.0
    %220 = vmatpush2.msra.mxu0 0.0
    %221 = vmatprep.subr.mxu0 0.0
    %222 = vmatpush2.msra.mxu0 0.0
    %223 = vmatprep.subr.mxu0 0.0
    %224 = vmatpush2.msra.mxu0 0.0
    %225 = vmatprep.subr.mxu0 0.0
    %226 = vmatpush2.msra.mxu0 0.0
    %227 = vmatprep.subr.mxu0 0.0
    %228 = vmatpush2.msra.mxu0 0.0
    %229 = vmatprep.subr.mxu0 0.0
    %230 = vmatpush2.msra.mxu0 0.0
    %231 = vmatprep.subr.mxu0 0.0
    %232 = vmatpush2.msra.mxu0 0.0
    %233 = vmatprep.subr.mxu0 0.0
    %234 = vmatpush2.msra.mxu0 0.0
    %235 = vmatprep.subr.mxu0 0.0
    %236 = vmatpush2.msra.mxu0 0.0
    %237 = vmatprep.subr.mxu0 0.0
    %238 = vmatpush2.msra.mxu0 0.0
    %239 = vmatprep.subr.mxu0 0.0
    %240 = vmatpush2.msra.mxu0 0.0
    %241 = vmatprep.subr.mxu0 0.0
    %242 = vmatpush2.msra.mxu0 0.0
    %243 = vmatprep.subr.mxu0 0.0
    %244 = vmatpush2.msra.mxu0 0.0
    %245 = vmatprep.subr.mxu0 0.0
    %246 = vmatpush2.msra.mxu0 0.0
    %247 = vmatprep.mubr.f32.mxu0 0.0
    %248 = vmatmul.mubr.f32.gmra.mxu0 %v160
    %v249 = vpop.f32.mrf.mxu0
    %v250 = vadd.f32 %v141, %v249
    %v251 = vpop.f32.mrf.mxu0
    %v252 = vadd.f32 %v145, %v251
    %253 = vmatprep.mubr.f32.mxu0 0.0
    %254 = vmatmul.mubr.f32.gmra.mxu0 %v163
    %v255 = vpop.f32.mrf.mxu0
    %v256 = vadd.f32 %v141, %v255
    %v257 = vpop.f32.mrf.mxu0
    %v258 = vadd.f32 %v145, %v257
    %259 = vmatprep.mubr.f32.mxu0 0.0
    %260 = vmatmul.mubr.f32.gmra.mxu0 %v166
    %v261 = vpop.f32.mrf.mxu0
    %v262 = vadd.f32 %v141, %v261
    %v263 = vpop.f32.mrf.mxu0
    %v264 = vadd.f32 %v145, %v263
    %265 = vmatprep.mubr.f32.mxu0 0.0
    %266 = vmatmul.mubr.f32.gmra.mxu0 %v169
    %v267 = vpop.f32.mrf.mxu0
    %v268 = vadd.f32 %v141, %v267
    %v269 = vpop.f32.mrf.mxu0
    %v270 = vadd.f32 %v145, %v269
    %271 = vmatprep.mubr.f32.mxu0 0.0
    %272 = vmatmul.mubr.f32.gmra.mxu0 %v172
    %v273 = vpop.f32.mrf.mxu0
    %v274 = vadd.f32 %v141, %v273
    %v275 = vpop.f32.mrf.mxu0
    %v276 = vadd.f32 %v145, %v275
    %277 = vmatprep.mubr.f32.mxu0 0.0
    %278 = vmatmul.mubr.f32.gmra.mxu0 %v175
    %v279 = vpop.f32.mrf.mxu0
    %v280 = vadd.f32 %v141, %v279
    %v281 = vpop.f32.mrf.mxu0
    %v282 = vadd.f32 %v145, %v281
    %283 = vmatprep.mubr.f32.mxu0 0.0
    %284 = vmatmul.mubr.f32.gmra.mxu0 %v178
    %v285 = vpop.f32.mrf.mxu0
    %v286 = vadd.f32 %v141, %v285
    %v287 = vpop.f32.mrf.mxu0
    %v288 = vadd.f32 %v145, %v287
    %289 = vmatprep.mubr.f32.mxu0 0.0
    %290 = vmatmul.mubr.f32.gmra.mxu0 %v181
    %v291 = vpop.f32.mrf.mxu0
    %v292 = vadd.f32 %v141, %v291
    %v293 = vpop.f32.mrf.mxu0
    %v294 = vadd.f32 %v145, %v293
    %295 = vdwg.mxu0
    %296 = vmatprep.subr.mxu0 0.0
    %297 = vmatpush1.msra.mxu0 0.0
    %298 = vmatprep.subr.mxu0 0.0
    %299 = vmatpush1.msra.mxu0 0.0
    %300 = vmatprep.subr.mxu0 0.0
    %301 = vmatpush1.msra.mxu0 0.0
    %302 = vmatprep.subr.mxu0 0.0
    %303 = vmatpush1.msra.mxu0 0.0
    %304 = vmatprep.subr.mxu0 0.0
    %305 = vmatpush1.msra.mxu0 0.0
    %306 = vmatprep.subr.mxu0 0.0
    %307 = vmatpush1.msra.mxu0 0.0
    %308 = vmatprep.subr.mxu0 0.0
    %309 = vmatpush1.msra.mxu0 0.0
    %310 = vmatprep.subr.mxu0 0.0
    %311 = vmatpush1.msra.mxu0 0.0
    %312 = vmatprep.subr.mxu0 0.0
    %313 = vmatpush1.msra.mxu0 0.0
    %314 = vmatprep.subr.mxu0 0.0
    %315 = vmatpush1.msra.mxu0 0.0
    %316 = vmatprep.subr.mxu0 0.0
    %317 = vmatpush1.msra.mxu0 0.0
    %318 = vmatprep.subr.mxu0 0.0
    %319 = vmatpush1.msra.mxu0 0.0
    %320 = vmatprep.subr.mxu0 0.0
    %321 = vmatpush1.msra.mxu0 0.0
    %322 = vmatprep.subr.mxu0 0.0
    %323 = vmatpush1.msra.mxu0 0.0
    %324 = vmatprep.subr.mxu0 %v135
    %325 = vmatpush1.msra.mxu0 %v134
    %326 = vmatprep.subr.mxu0 %v131
    %327 = vmatpush1.msra.mxu0 %v130
    %328 = vmatprep.subr.mxu0 0.0
    %329 = vmatpush2.msra.mxu0 0.0
    %330 = vmatprep.subr.mxu0 0.0
    %331 = vmatpush2.msra.mxu0 0.0
    %332 = vmatprep.subr.mxu0 0.0
    %333 = vmatpush2.msra.mxu0 0.0
    %334 = vmatprep.subr.mxu0 0.0
    %335 = vmatpush2.msra.mxu0 0.0
    %336 = vmatprep.subr.mxu0 0.0
    %337 = vmatpush2.msra.mxu0 0.0
    %338 = vmatprep.subr.mxu0 0.0
    %339 = vmatpush2.msra.mxu0 0.0
    %340 = vmatprep.subr.mxu0 0.0
    %341 = vmatpush2.msra.mxu0 0.0
    %342 = vmatprep.subr.mxu0 0.0
    %343 = vmatpush2.msra.mxu0 0.0
    %344 = vmatprep.subr.mxu0 0.0
    %345 = vmatpush2.msra.mxu0 0.0
    %346 = vmatprep.subr.mxu0 0.0
    %347 = vmatpush2.msra.mxu0 0.0
    %348 = vmatprep.subr.mxu0 0.0
    %349 = vmatpush2.msra.mxu0 0.0
    %350 = vmatprep.subr.mxu0 0.0
    %351 = vmatpush2.msra.mxu0 0.0
    %352 = vmatprep.subr.mxu0 0.0
    %353 = vmatpush2.msra.mxu0 0.0
    %354 = vmatprep.subr.mxu0 0.0
    %355 = vmatpush2.msra.mxu0 0.0
    %356 = vmatprep.subr.mxu0 0.0
    %357 = vmatpush2.msra.mxu0 0.0
    %358 = vmatprep.subr.mxu0 0.0
    %359 = vmatpush2.msra.mxu0 0.0
    %360 = vmatprep.mubr.f32.mxu0 0.0
    %361 = vmatmul.mubr.f32.gmra.mxu0 %v160
    %v362 = vpop.f32.mrf.mxu0
    %v363 = vadd.f32 %v149, %v362
    %v364 = vpop.f32.mrf.mxu0
    %v365 = vadd.f32 %v153, %v364
    %366 = vmatprep.mubr.f32.mxu0 0.0
    %367 = vmatmul.mubr.f32.gmra.mxu0 %v163
    %v368 = vpop.f32.mrf.mxu0
    %v369 = vadd.f32 %v149, %v368
    %v370 = vpop.f32.mrf.mxu0
    %v371 = vadd.f32 %v153, %v370
    %372 = vmatprep.mubr.f32.mxu0 0.0
    %373 = vmatmul.mubr.f32.gmra.mxu0 %v166
    %v374 = vpop.f32.mrf.mxu0
    %v375 = vadd.f32 %v149, %v374
    %v376 = vpop.f32.mrf.mxu0
    %v377 = vadd.f32 %v153, %v376
    %378 = vmatprep.mubr.f32.mxu0 0.0
    %379 = vmatmul.mubr.f32.gmra.mxu0 %v169
    %v380 = vpop.f32.mrf.mxu0
    %v381 = vadd.f32 %v149, %v380
    %v382 = vpop.f32.mrf.mxu0
    %v383 = vadd.f32 %v153, %v382
    %384 = vmatprep.mubr.f32.mxu0 0.0
    %385 = vmatmul.mubr.f32.gmra.mxu0 %v172
    %v386 = vpop.f32.mrf.mxu0
    %v387 = vadd.f32 %v149, %v386
    %v388 = vpop.f32.mrf.mxu0
    %v389 = vadd.f32 %v153, %v388
    %390 = vmatprep.mubr.f32.mxu0 0.0
    %391 = vmatmul.mubr.f32.gmra.mxu0 %v175
    %v392 = vpop.f32.mrf.mxu0
    %v393 = vadd.f32 %v149, %v392
    %v394 = vpop.f32.mrf.mxu0
    %v395 = vadd.f32 %v153, %v394
    %396 = vmatprep.mubr.f32.mxu0 0.0
    %397 = vmatmul.mubr.f32.gmra.mxu0 %v178
    %v398 = vpop.f32.mrf.mxu0
    %v399 = vadd.f32 %v149, %v398
    %v400 = vpop.f32.mrf.mxu0
    %v401 = vadd.f32 %v153, %v400
    %402 = vmatprep.mubr.f32.mxu0 0.0
    %403 = vmatmul.mubr.f32.gmra.mxu0 %v181
    %v404 = vpop.f32.mrf.mxu0
    %v405 = vadd.f32 %v149, %v404
    %v406 = vpop.f32.mrf.mxu0
    %v407 = vadd.f32 %v153, %v406
    %408 = vdwg.mxu0
    %409 = vst [vmem:[#allocation2] sm:$0xff] %v250
    %410 = vst [vmem:[#allocation2 + $0x8] sm:$0xff] %v252
    %411 = vst [vmem:[#allocation2 + $0x10] sm:$0xff] %v363
    %412 = vst [vmem:[#allocation2 + $0x18] sm:$0xff] %v365
    %413 = vst [vmem:[#allocation2 + $0x20] sm:$0xff] %v256
    %414 = vst [vmem:[#allocation2 + $0x28] sm:$0xff] %v258
    %415 = vst [vmem:[#allocation2 + $0x30] sm:$0xff] %v369
    %416 = vst [vmem:[#allocation2 + $0x38] sm:$0xff] %v371
    %417 = vst [vmem:[#allocation2 + $0x40] sm:$0xff] %v262
    %418 = vst [vmem:[#allocation2 + $0x48] sm:$0xff] %v264
    %419 = vst [vmem:[#allocation2 + $0x50] sm:$0xff] %v375
    %420 = vst [vmem:[#allocation2 + $0x58] sm:$0xff] %v377
    %421 = vst [vmem:[#allocation2 + $0x60] sm:$0xff] %v268
    %422 = vst [vmem:[#allocation2 + $0x68] sm:$0xff] %v270
    %423 = vst [vmem:[#allocation2 + $0x70] sm:$0xff] %v381
    %424 = vst [vmem:[#allocation2 + $0x78] sm:$0xff] %v383
    %425 = vst [vmem:[#allocation2 + $0x80] sm:$0xff] %v274
    %426 = vst [vmem:[#allocation2 + $0x88] sm:$0xff] %v276
    %427 = vst [vmem:[#allocation2 + $0x90] sm:$0xff] %v387
    %428 = vst [vmem:[#allocation2 + $0x98] sm:$0xff] %v389
    %429 = vst [vmem:[#allocation2 + $0xa0] sm:$0xff] %v280
    %430 = vst [vmem:[#allocation2 + $0xa8] sm:$0xff] %v282
    %431 = vst [vmem:[#allocation2 + $0xb0] sm:$0xff] %v393
    %432 = vst [vmem:[#allocation2 + $0xb8] sm:$0xff] %v395
    %433 = vst [vmem:[#allocation2 + $0xc0] sm:$0xff] %v286
    %434 = vst [vmem:[#allocation2 + $0xc8] sm:$0xff] %v288
    %435 = vst [vmem:[#allocation2 + $0xd0] sm:$0xff] %v399
    %436 = vst [vmem:[#allocation2 + $0xd8] sm:$0xff] %v401
    %437 = vst [vmem:[#allocation2 + $0xe0] sm:$0xff] %v292
    %438 = vst [vmem:[#allocation2 + $0xe8] sm:$0xff] %v294
    %439 = vst [vmem:[#allocation2 + $0xf0] sm:$0xff] %v405
    %440 = vst [vmem:[#allocation2 + $0xf8] sm:$0xff] %v407
    %v441 = vld [vmem:[#allocation2] sm:$0xff]
    %v442 = vld [vmem:[#allocation2 + $0x8] sm:$0xff]
    %v443 = vld [vmem:[#allocation2 + $0x10] sm:$0xff]
    %v444 = vld [vmem:[#allocation2 + $0x18] sm:$0xff]
    %v445 = vld [vmem:[#allocation2 + $0xe0] sm:$0xff]
    %v446 = vld [vmem:[#allocation2 + $0xe8] sm:$0xff]
    %v447 = vld [vmem:[#allocation2 + $0xf0] sm:$0xff]
    %v448 = vld [vmem:[#allocation2 + $0xf8] sm:$0xff]
    %v449 = vsel %vm115, %v441, %v445
    %v450 = vsel %vm116, %v442, %v446
    %v451 = vsel %vm117, %v443, %v447
    %v452 = vsel %vm118, %v444, %v448
    %453 = vst [vmem:[#allocation2] sm:$0xff] %v449
    %454 = vst [vmem:[#allocation2 + $0x8] sm:$0xff] %v450
    %455 = vst [vmem:[#allocation2 + $0x10] sm:$0xff] %v451
    %456 = vst [vmem:[#allocation2 + $0x18] sm:$0xff] %v452
    %v457 = vsel %vm115, %v445, %v441
    %v458 = vsel %vm116, %v446, %v442
    %v459 = vsel %vm117, %v447, %v443
    %v460 = vsel %vm118, %v448, %v444
    %461 = vst [vmem:[#allocation2 + $0xe0] sm:$0xff] %v457
    %462 = vst [vmem:[#allocation2 + $0xe8] sm:$0xff] %v458
    %463 = vst [vmem:[#allocation2 + $0xf0] sm:$0xff] %v459
    %464 = vst [vmem:[#allocation2 + $0xf8] sm:$0xff] %v460
    %v465 = vld [vmem:[#allocation2 + $0x20] sm:$0xff]
    %v466 = vld [vmem:[#allocation2 + $0x28] sm:$0xff]
    %v467 = vld [vmem:[#allocation2 + $0x30] sm:$0xff]
    %v468 = vld [vmem:[#allocation2 + $0x38] sm:$0xff]
    %v469 = vld [vmem:[#allocation2 + $0xc0] sm:$0xff]
    %v470 = vld [vmem:[#allocation2 + $0xc8] sm:$0xff]
    %v471 = vld [vmem:[#allocation2 + $0xd0] sm:$0xff]
    %v472 = vld [vmem:[#allocation2 + $0xd8] sm:$0xff]
    %v473 = vsel %vm115, %v465, %v469
    %v474 = vsel %vm116, %v466, %v470
    %v475 = vsel %vm117, %v467, %v471
    %v476 = vsel %vm118, %v468, %v472
    %477 = vst [vmem:[#allocation2 + $0x20] sm:$0xff] %v473
    %478 = vst [vmem:[#allocation2 + $0x28] sm:$0xff] %v474
    %479 = vst [vmem:[#allocation2 + $0x30] sm:$0xff] %v475
    %480 = vst [vmem:[#allocation2 + $0x38] sm:$0xff] %v476
    %v481 = vsel %vm115, %v469, %v465
    %v482 = vsel %vm116, %v470, %v466
    %v483 = vsel %vm117, %v471, %v467
    %v484 = vsel %vm118, %v472, %v468
    %485 = vst [vmem:[#allocation2 + $0xc0] sm:$0xff] %v481
    %486 = vst [vmem:[#allocation2 + $0xc8] sm:$0xff] %v482
    %487 = vst [vmem:[#allocation2 + $0xd0] sm:$0xff] %v483
    %488 = vst [vmem:[#allocation2 + $0xd8] sm:$0xff] %v484
    %v489 = vld [vmem:[#allocation2 + $0x40] sm:$0xff]
    %v490 = vld [vmem:[#allocation2 + $0x48] sm:$0xff]
    %v491 = vld [vmem:[#allocation2 + $0x50] sm:$0xff]
    %v492 = vld [vmem:[#allocation2 + $0x58] sm:$0xff]
    %v493 = vld [vmem:[#allocation2 + $0xa0] sm:$0xff]
    %v494 = vld [vmem:[#allocation2 + $0xa8] sm:$0xff]
    %v495 = vld [vmem:[#allocation2 + $0xb0] sm:$0xff]
    %v496 = vld [vmem:[#allocation2 + $0xb8] sm:$0xff]
    %v497 = vsel %vm115, %v489, %v493
    %v498 = vsel %vm116, %v490, %v494
    %v499 = vsel %vm117, %v491, %v495
    %v500 = vsel %vm118, %v492, %v496
    %501 = vst [vmem:[#allocation2 + $0x40] sm:$0xff] %v497
    %502 = vst [vmem:[#allocation2 + $0x48] sm:$0xff] %v498
    %503 = vst [vmem:[#allocation2 + $0x50] sm:$0xff] %v499
    %504 = vst [vmem:[#allocation2 + $0x58] sm:$0xff] %v500
    %v505 = vsel %vm115, %v493, %v489
    %v506 = vsel %vm116, %v494, %v490
    %v507 = vsel %vm117, %v495, %v491
    %v508 = vsel %vm118, %v496, %v492
    %509 = vst [vmem:[#allocation2 + $0xa0] sm:$0xff] %v505
    %510 = vst [vmem:[#allocation2 + $0xa8] sm:$0xff] %v506
    %511 = vst [vmem:[#allocation2 + $0xb0] sm:$0xff] %v507
    %512 = vst [vmem:[#allocation2 + $0xb8] sm:$0xff] %v508
    %v513 = vld [vmem:[#allocation2 + $0x60] sm:$0xff]
    %v514 = vld [vmem:[#allocation2 + $0x68] sm:$0xff]
    %v515 = vld [vmem:[#allocation2 + $0x70] sm:$0xff]
    %v516 = vld [vmem:[#allocation2 + $0x78] sm:$0xff]
    %v517 = vld [vmem:[#allocation2 + $0x80] sm:$0xff]
    %v518 = vld [vmem:[#allocation2 + $0x88] sm:$0xff]
    %v519 = vld [vmem:[#allocation2 + $0x90] sm:$0xff]
    %v520 = vld [vmem:[#allocation2 + $0x98] sm:$0xff]
    %v521 = vsel %vm115, %v513, %v517
    %v522 = vsel %vm116, %v514, %v518
    %v523 = vsel %vm117, %v515, %v519
    %v524 = vsel %vm118, %v516, %v520
    %525 = vst [vmem:[#allocation2 + $0x60] sm:$0xff] %v521
    %526 = vst [vmem:[#allocation2 + $0x68] sm:$0xff] %v522
    %527 = vst [vmem:[#allocation2 + $0x70] sm:$0xff] %v523
    %528 = vst [vmem:[#allocation2 + $0x78] sm:$0xff] %v524
    %v529 = vsel %vm115, %v517, %v513
    %v530 = vsel %vm116, %v518, %v514
    %v531 = vsel %vm117, %v519, %v515
    %v532 = vsel %vm118, %v520, %v516
    %533 = vst [vmem:[#allocation2 + $0x80] sm:$0xff] %v529
    %534 = vst [vmem:[#allocation2 + $0x88] sm:$0xff] %v530
    %535 = vst [vmem:[#allocation2 + $0x90] sm:$0xff] %v531
    %536 = vst [vmem:[#allocation2 + $0x98] sm:$0xff] %v532
    %v537 = vld [vmem:[#allocation4] sm:$0xff]
    %v538 = vld [vmem:[#allocation4 + $0x8] sm:$0xff]
    %v539 = vld [vmem:[#allocation4 + $0x10] sm:$0xff]
    %v540 = vld [vmem:[#allocation4 + $0x18] sm:$0xff]
    %v541 = vld [vmem:[#allocation4 + $0x20] sm:$0xff]
    %v542 = vld [vmem:[#allocation4 + $0x28] sm:$0xff]
    %v543 = vld [vmem:[#allocation4 + $0x30] sm:$0xff]
    %v544 = vld [vmem:[#allocation4 + $0x38] sm:$0xff]
    %v545 = vld [vmem:[#allocation4 + $0x40] sm:$0xff]
    %v546 = vld [vmem:[#allocation4 + $0x48] sm:$0xff]
    %v547 = vld [vmem:[#allocation4 + $0x50] sm:$0xff]
    %v548 = vld [vmem:[#allocation4 + $0x58] sm:$0xff]
    %v549 = vld [vmem:[#allocation4 + $0x60] sm:$0xff]
    %v550 = vld [vmem:[#allocation4 + $0x68] sm:$0xff]
    %v551 = vld [vmem:[#allocation4 + $0x70] sm:$0xff]
    %v552 = vld [vmem:[#allocation4 + $0x78] sm:$0xff]
    %v553 = vld [vmem:[#allocation4 + $0x80] sm:$0xff]
    %v554 = vld [vmem:[#allocation4 + $0x88] sm:$0xff]
    %v555 = vld [vmem:[#allocation4 + $0x90] sm:$0xff]
    %v556 = vld [vmem:[#allocation4 + $0x98] sm:$0xff]
    %v557 = vld [vmem:[#allocation4 + $0xa0] sm:$0xff]
    %v558 = vld [vmem:[#allocation4 + $0xa8] sm:$0xff]
    %v559 = vld [vmem:[#allocation4 + $0xb0] sm:$0xff]
    %v560 = vld [vmem:[#allocation4 + $0xb8] sm:$0xff]
    %v561 = vld [vmem:[#allocation4 + $0xc0] sm:$0xff]
    %v562 = vld [vmem:[#allocation4 + $0xc8] sm:$0xff]
    %v563 = vld [vmem:[#allocation4 + $0xd0] sm:$0xff]
    %v564 = vld [vmem:[#allocation4 + $0xd8] sm:$0xff]
    %v565 = vld [vmem:[#allocation4 + $0xe0] sm:$0xff]
    %v566 = vld [vmem:[#allocation4 + $0xe8] sm:$0xff]
    %v567 = vld [vmem:[#allocation4 + $0xf0] sm:$0xff]
    %v568 = vld [vmem:[#allocation4 + $0xf8] sm:$0xff]
    %v569 = vld [vmem:[#allocation2] sm:$0xff]
    %v570 = vld [vmem:[#allocation2 + $0x8] sm:$0xff]
    %v571 = vld [vmem:[#allocation2 + $0x10] sm:$0xff]
    %v572 = vld [vmem:[#allocation2 + $0x18] sm:$0xff]
    %v605 = vunpack.c.l.b16 %v537
    %v606 = vunpack.c.h.b16 %v537
    %v607 = vunpack.c.l.b16 %v538
    %v608 = vunpack.c.h.b16 %v538
    %v609 = vunpack.c.l.b16 %v539
    %v610 = vunpack.c.h.b16 %v539
    %v611 = vunpack.c.l.b16 %v540
    %v612 = vunpack.c.h.b16 %v540
    %v613 = vunpack.c.l.b16 %v541
    %v614 = vunpack.c.h.b16 %v541
    %v615 = vunpack.c.l.b16 %v542
    %v616 = vunpack.c.h.b16 %v542
    %v617 = vunpack.c.l.b16 %v543
    %v618 = vunpack.c.h.b16 %v543
    %v619 = vunpack.c.l.b16 %v544
    %v620 = vunpack.c.h.b16 %v544
    %v621 = vunpack.c.l.b16 %v545
    %v622 = vunpack.c.h.b16 %v545
    %v623 = vunpack.c.l.b16 %v546
    %v624 = vunpack.c.h.b16 %v546
    %v625 = vunpack.c.l.b16 %v547
    %v626 = vunpack.c.h.b16 %v547
    %v627 = vunpack.c.l.b16 %v548
    %v628 = vunpack.c.h.b16 %v548
    %v629 = vunpack.c.l.b16 %v549
    %v630 = vunpack.c.h.b16 %v549
    %v631 = vunpack.c.l.b16 %v550
    %v632 = vunpack.c.h.b16 %v550
    %v633 = vunpack.c.l.b16 %v551
    %v634 = vunpack.c.h.b16 %v551
    %v635 = vunpack.c.l.b16 %v552
    %v636 = vunpack.c.h.b16 %v552
    %v637 = vunpack.c.l.b16 %v553
    %v638 = vunpack.c.h.b16 %v553
    %v639 = vunpack.c.l.b16 %v554
    %v640 = vunpack.c.h.b16 %v554
    %v641 = vunpack.c.l.b16 %v555
    %v642 = vunpack.c.h.b16 %v555
    %v643 = vunpack.c.l.b16 %v556
    %v644 = vunpack.c.h.b16 %v556
    %v645 = vunpack.c.l.b16 %v557
    %v646 = vunpack.c.h.b16 %v557
    %v647 = vunpack.c.l.b16 %v558
    %v648 = vunpack.c.h.b16 %v558
    %v649 = vunpack.c.l.b16 %v559
    %v650 = vunpack.c.h.b16 %v559
    %v651 = vunpack.c.l.b16 %v560
    %v652 = vunpack.c.h.b16 %v560
    %v653 = vunpack.c.l.b16 %v561
    %v654 = vunpack.c.h.b16 %v561
    %v655 = vunpack.c.l.b16 %v562
    %v656 = vunpack.c.h.b16 %v562
    %v657 = vunpack.c.l.b16 %v563
    %v658 = vunpack.c.h.b16 %v563
    %v659 = vunpack.c.l.b16 %v564
    %v660 = vunpack.c.h.b16 %v564
    %v661 = vunpack.c.l.b16 %v565
    %v662 = vunpack.c.h.b16 %v565
    %v663 = vunpack.c.l.b16 %v566
    %v664 = vunpack.c.h.b16 %v566
    %v665 = vunpack.c.l.b16 %v567
    %v666 = vunpack.c.h.b16 %v567
    %v667 = vunpack.c.l.b16 %v568
    %v668 = vunpack.c.h.b16 %v568
    %v669 = vpack.c.b16 %v609, %v605
    %v670 = vpack.c.b16 %v610, %v606
    %v671 = vpack.c.b16 %v611, %v607
    %v672 = vpack.c.b16 %v612, %v608
    %v673 = vpack.c.b16 %v617, %v613
    %v674 = vpack.c.b16 %v618, %v614
    %v675 = vpack.c.b16 %v619, %v615
    %v676 = vpack.c.b16 %v620, %v616
    %v677 = vpack.c.b16 %v625, %v621
    %v678 = vpack.c.b16 %v626, %v622
    %v679 = vpack.c.b16 %v627, %v623
    %v680 = vpack.c.b16 %v628, %v624
    %v681 = vpack.c.b16 %v633, %v629
    %v682 = vpack.c.b16 %v634, %v630
    %v683 = vpack.c.b16 %v635, %v631
    %v684 = vpack.c.b16 %v636, %v632
    %v685 = vpack.c.b16 %v641, %v637
    %v686 = vpack.c.b16 %v642, %v638
    %v687 = vpack.c.b16 %v643, %v639
    %v688 = vpack.c.b16 %v644, %v640
    %v689 = vpack.c.b16 %v649, %v645
    %v690 = vpack.c.b16 %v650, %v646
    %v691 = vpack.c.b16 %v651, %v647
    %v692 = vpack.c.b16 %v652, %v648
    %v693 = vpack.c.b16 %v657, %v653
    %v694 = vpack.c.b16 %v658, %v654
    %v695 = vpack.c.b16 %v659, %v655
    %v696 = vpack.c.b16 %v660, %v656
    %v697 = vpack.c.b16 %v665, %v661
    %v698 = vpack.c.b16 %v666, %v662
    %v699 = vpack.c.b16 %v667, %v663
    %v700 = vpack.c.b16 %v668, %v664
    %733 = vmatprep.subr.bf16.mxu0 %v698
    %734 = vmatpush1.bf16.msra.mxu0 %v697
    %735 = vmatprep.subr.bf16.mxu0 %v694
    %736 = vmatpush1.bf16.msra.mxu0 %v693
    %737 = vmatprep.subr.bf16.mxu0 %v690
    %738 = vmatpush1.bf16.msra.mxu0 %v689
    %739 = vmatprep.subr.bf16.mxu0 %v686
    %740 = vmatpush1.bf16.msra.mxu0 %v685
    %741 = vmatprep.subr.bf16.mxu0 %v682
    %742 = vmatpush1.bf16.msra.mxu0 %v681
    %743 = vmatprep.subr.bf16.mxu0 %v678
    %744 = vmatpush1.bf16.msra.mxu0 %v677
    %745 = vmatprep.subr.bf16.mxu0 %v674
    %746 = vmatpush1.bf16.msra.mxu0 %v673
    %747 = vmatprep.subr.bf16.mxu0 %v670
    %748 = vmatpush1.bf16.msra.mxu0 %v669
    %749 = vmatprep.subr.bf16.mxu0 0
    %750 = vmatpush2.bf16.msra.mxu0 0
    %751 = vmatprep.subr.bf16.mxu0 0
    %752 = vmatpush2.bf16.msra.mxu0 0
    %753 = vmatprep.subr.bf16.mxu0 0
    %754 = vmatpush2.bf16.msra.mxu0 0
    %755 = vmatprep.subr.bf16.mxu0 0
    %756 = vmatpush2.bf16.msra.mxu0 0
    %757 = vmatprep.subr.bf16.mxu0 0
    %758 = vmatpush2.bf16.msra.mxu0 0
    %759 = vmatprep.subr.bf16.mxu0 0
    %760 = vmatpush2.bf16.msra.mxu0 0
    %761 = vmatprep.subr.bf16.mxu0 0
    %762 = vmatpush2.bf16.msra.mxu0 0
    %763 = vmatprep.subr.bf16.mxu0 0
    %764 = vmatpush2.bf16.msra.mxu0 0
    %765 = vmatprep.mubr.bf16.mxu0 0
    %766 = vmatmul.mubr.bf16.gmra.mxu0 0
    %v767 = vpop.f32.mrf.mxu0
    %v768 = vadd.f32 0.0, %v767
    %v769 = vpop.f32.mrf.mxu0
    %v770 = vadd.f32 0.0, %v769
    %v771 = vpop.f32.mrf.mxu0
    %v772 = vpop.f32.mrf.mxu0
    %773 = vdwg.mxu0
    %774 = vmatprep.subr.bf16.mxu0 %v700
    %775 = vmatpush1.bf16.msra.mxu0 %v699
    %776 = vmatprep.subr.bf16.mxu0 %v696
    %777 = vmatpush1.bf16.msra.mxu0 %v695
    %778 = vmatprep.subr.bf16.mxu0 %v692
    %779 = vmatpush1.bf16.msra.mxu0 %v691
    %780 = vmatprep.subr.bf16.mxu0 %v688
    %781 = vmatpush1.bf16.msra.mxu0 %v687
    %782 = vmatprep.subr.bf16.mxu0 %v684
    %783 = vmatpush1.bf16.msra.mxu0 %v683
    %784 = vmatprep.subr.bf16.mxu0 %v680
    %785 = vmatpush1.bf16.msra.mxu0 %v679
    %786 = vmatprep.subr.bf16.mxu0 %v676
    %787 = vmatpush1.bf16.msra.mxu0 %v675
    %788 = vmatprep.subr.bf16.mxu0 %v672
    %789 = vmatpush1.bf16.msra.mxu0 %v671
    %790 = vmatprep.subr.bf16.mxu0 0
    %791 = vmatpush2.bf16.msra.mxu0 0
    %792 = vmatprep.subr.bf16.mxu0 0
    %793 = vmatpush2.bf16.msra.mxu0 0
    %794 = vmatprep.subr.bf16.mxu0 0
    %795 = vmatpush2.bf16.msra.mxu0 0
    %796 = vmatprep.subr.bf16.mxu0 0
    %797 = vmatpush2.bf16.msra.mxu0 0
    %798 = vmatprep.subr.bf16.mxu0 0
    %799 = vmatpush2.bf16.msra.mxu0 0
    %800 = vmatprep.subr.bf16.mxu0 0
    %801 = vmatpush2.bf16.msra.mxu0 0
    %802 = vmatprep.subr.bf16.mxu0 0
    %803 = vmatpush2.bf16.msra.mxu0 0
    %804 = vmatprep.subr.bf16.mxu0 0
    %805 = vmatpush2.bf16.msra.mxu0 0
    %806 = vmatprep.mubr.bf16.mxu0 0
    %807 = vmatmul.mubr.bf16.gmra.mxu0 0
    %v808 = vpop.f32.mrf.mxu0
    %v809 = vadd.f32 0.0, %v808
    %v810 = vpop.f32.mrf.mxu0
    %v811 = vadd.f32 0.0, %v810
    %v812 = vpop.f32.mrf.mxu0
    %v813 = vpop.f32.mrf.mxu0
    %814 = vdwg.mxu0
    %v815 = vadd.f32 %v569, %v768
    %v816 = vadd.f32 %v570, %v770
    %v817 = vadd.f32 %v571, %v809
    %v818 = vadd.f32 %v572, %v811
    %v819 = vxor.u32 %v815, 2147483648
    %v820 = vmul.f32 %v819, 1.442695
    %v821 = vpow.pop %v820
    %v822 = vadd.f32 %v821, 1.0
    %v823 = vrcp.pop %v822
    %v824 = vmul.f32 1.0, %v823
    %v825 = vxor.u32 %v816, 2147483648
    %v826 = vmul.f32 %v825, 1.442695
    %v827 = vpow.pop %v826
    %v828 = vadd.f32 %v827, 1.0
    %v829 = vrcp.pop %v828
    %v830 = vmul.f32 1.0, %v829
    %v831 = vtanh.pop %v817
    %v832 = vxor.u32 %v818, 2147483648
    %v833 = vmul.f32 %v832, 1.442695
    %v834 = vpow.pop %v833
    %v835 = vadd.f32 %v834, 1.0
    %v836 = vrcp.pop %v835
    %v837 = vmul.f32 1.0, %v836
    %v838 = vmul.f32 %v830, 0.0
    %v839 = vmul.f32 %v824, %v831
    %v840 = vadd.f32 %v838, %v839
    %v841 = vtanh.pop %v840
    %v842 = vmul.f32 %v837, %v841
    %843 = vst [vmem:[#allocation3] sm:$0xff] %v842
    %v844 = vld [vmem:[#allocation2 + $0x20] sm:$0xff]
    %v845 = vld [vmem:[#allocation2 + $0x28] sm:$0xff]
    %v846 = vld [vmem:[#allocation2 + $0x30] sm:$0xff]
    %v847 = vld [vmem:[#allocation2 + $0x38] sm:$0xff]
    %v848 = vpack.c.bf16 %v842, %v842
    %849 = vmatprep.subr.bf16.mxu0 %v698
    %850 = vmatpush1.bf16.msra.mxu0 %v697
    %851 = vmatprep.subr.bf16.mxu0 %v694
    %852 = vmatpush1.bf16.msra.mxu0 %v693
    %853 = vmatprep.subr.bf16.mxu0 %v690
    %854 = vmatpush1.bf16.msra.mxu0 %v689
    %855 = vmatprep.subr.bf16.mxu0 %v686
    %856 = vmatpush1.bf16.msra.mxu0 %v685
    %857 = vmatprep.subr.bf16.mxu0 %v682
    %858 = vmatpush1.bf16.msra.mxu0 %v681
    %859 = vmatprep.subr.bf16.mxu0 %v678
    %860 = vmatpush1.bf16.msra.mxu0 %v677
    %861 = vmatprep.subr.bf16.mxu0 %v674
    %862 = vmatpush1.bf16.msra.mxu0 %v673
    %863 = vmatprep.subr.bf16.mxu0 %v670
    %864 = vmatpush1.bf16.msra.mxu0 %v669
    %865 = vmatprep.subr.bf16.mxu0 0
    %866 = vmatpush2.bf16.msra.mxu0 0
    %867 = vmatprep.subr.bf16.mxu0 0
    %868 = vmatpush2.bf16.msra.mxu0 0
    %869 = vmatprep.subr.bf16.mxu0 0
    %870 = vmatpush2.bf16.msra.mxu0 0
    %871 = vmatprep.subr.bf16.mxu0 0
    %872 = vmatpush2.bf16.msra.mxu0 0
    %873 = vmatprep.subr.bf16.mxu0 0
    %874 = vmatpush2.bf16.msra.mxu0 0
    %875 = vmatprep.subr.bf16.mxu0 0
    %876 = vmatpush2.bf16.msra.mxu0 0
    %877 = vmatprep.subr.bf16.mxu0 0
    %878 = vmatpush2.bf16.msra.mxu0 0
    %879 = vmatprep.subr.bf16.mxu0 0
    %880 = vmatpush2.bf16.msra.mxu0 0
    %881 = vmatprep.mubr.bf16.mxu0 0
    %882 = vmatmul.mubr.bf16.gmra.mxu0 %v848
    %v883 = vpop.f32.mrf.mxu0
    %v884 = vadd.f32 0.0, %v883
    %v885 = vpop.f32.mrf.mxu0
    %v886 = vadd.f32 0.0, %v885
    %v887 = vpop.f32.mrf.mxu0
    %v888 = vpop.f32.mrf.mxu0
    %889 = vdwg.mxu0
    %890 = vmatprep.subr.bf16.mxu0 %v700
    %891 = vmatpush1.bf16.msra.mxu0 %v699
    %892 = vmatprep.subr.bf16.mxu0 %v696
    %893 = vmatpush1.bf16.msra.mxu0 %v695
    %894 = vmatprep.subr.bf16.mxu0 %v692
    %895 = vmatpush1.bf16.msra.mxu0 %v691
    %896 = vmatprep.subr.bf16.mxu0 %v688
    %897 = vmatpush1.bf16.msra.mxu0 %v687
    %898 = vmatprep.subr.bf16.mxu0 %v684
    %899 = vmatpush1.bf16.msra.mxu0 %v683
    %900 = vmatprep.subr.bf16.mxu0 %v680
    %901 = vmatpush1.bf16.msra.mxu0 %v679
    %902 = vmatprep.subr.bf16.mxu0 %v676
    %903 = vmatpush1.bf16.msra.mxu0 %v675
    %904 = vmatprep.subr.bf16.mxu0 %v672
    %905 = vmatpush1.bf16.msra.mxu0 %v671
    %906 = vmatprep.subr.bf16.mxu0 0
    %907 = vmatpush2.bf16.msra.mxu0 0
    %908 = vmatprep.subr.bf16.mxu0 0
    %909 = vmatpush2.bf16.msra.mxu0 0
    %910 = vmatprep.subr.bf16.mxu0 0
    %911 = vmatpush2.bf16.msra.mxu0 0
    %912 = vmatprep.subr.bf16.mxu0 0
    %913 = vmatpush2.bf16.msra.mxu0 0
    %914 = vmatprep.subr.bf16.mxu0 0
    %915 = vmatpush2.bf16.msra.mxu0 0
    %916 = vmatprep.subr.bf16.mxu0 0
    %917 = vmatpush2.bf16.msra.mxu0 0
    %918 = vmatprep.subr.bf16.mxu0 0
    %919 = vmatpush2.bf16.msra.mxu0 0
    %920 = vmatprep.subr.bf16.mxu0 0
    %921 = vmatpush2.bf16.msra.mxu0 0
    %922 = vmatprep.mubr.bf16.mxu0 0
    %923 = vmatmul.mubr.bf16.gmra.mxu0 %v848
    %v924 = vpop.f32.mrf.mxu0
    %v925 = vadd.f32 0.0, %v924
    %v926 = vpop.f32.mrf.mxu0
    %v927 = vadd.f32 0.0, %v926
    %v928 = vpop.f32.mrf.mxu0
    %v929 = vpop.f32.mrf.mxu0
    %930 = vdwg.mxu0
    %v931 = vadd.f32 %v844, %v884
    %v932 = vadd.f32 %v845, %v886
    %v933 = vadd.f32 %v846, %v925
    %v934 = vadd.f32 %v847, %v927
    %v935 = vxor.u32 %v931, 2147483648
    %v936 = vmul.f32 %v935, 1.442695
    %v937 = vpow.pop %v936
    %v938 = vadd.f32 %v937, 1.0
    %v939 = vrcp.pop %v938
    %v940 = vmul.f32 1.0, %v939
    %v941 = vxor.u32 %v932, 2147483648
    %v942 = vmul.f32 %v941, 1.442695
    %v943 = vpow.pop %v942
    %v944 = vadd.f32 %v943, 1.0
    %v945 = vrcp.pop %v944
    %v946 = vmul.f32 1.0, %v945
    %v947 = vtanh.pop %v933
    %v948 = vxor.u32 %v934, 2147483648
    %v949 = vmul.f32 %v948, 1.442695
    %v950 = vpow.pop %v949
    %v951 = vadd.f32 %v950, 1.0
    %v952 = vrcp.pop %v951
    %v953 = vmul.f32 1.0, %v952
    %v954 = vmul.f32 %v946, %v840
    %v955 = vmul.f32 %v940, %v947
    %v956 = vadd.f32 %v954, %v955
    %v957 = vtanh.pop %v956
    %v958 = vmul.f32 %v953, %v957
    %959 = vst [vmem:[#allocation3 + $0x8] sm:$0xff] %v958
    %v960 = vld [vmem:[#allocation2 + $0x40] sm:$0xff]
    %v961 = vld [vmem:[#allocation2 + $0x48] sm:$0xff]
    %v962 = vld [vmem:[#allocation2 + $0x50] sm:$0xff]
    %v963 = vld [vmem:[#allocation2 + $0x58] sm:$0xff]
    %v964 = vpack.c.bf16 %v958, %v958
    %965 = vmatprep.subr.bf16.mxu0 %v698
    %966 = vmatpush1.bf16.msra.mxu0 %v697
    %967 = vmatprep.subr.bf16.mxu0 %v694
    %968 = vmatpush1.bf16.msra.mxu0 %v693
    %969 = vmatprep.subr.bf16.mxu0 %v690
    %970 = vmatpush1.bf16.msra.mxu0 %v689
    %971 = vmatprep.subr.bf16.mxu0 %v686
    %972 = vmatpush1.bf16.msra.mxu0 %v685
    %973 = vmatprep.subr.bf16.mxu0 %v682
    %974 = vmatpush1.bf16.msra.mxu0 %v681
    %975 = vmatprep.subr.bf16.mxu0 %v678
    %976 = vmatpush1.bf16.msra.mxu0 %v677
    %977 = vmatprep.subr.bf16.mxu0 %v674
    %978 = vmatpush1.bf16.msra.mxu0 %v673
    %979 = vmatprep.subr.bf16.mxu0 %v670
    %980 = vmatpush1.bf16.msra.mxu0 %v669
    %981 = vmatprep.subr.bf16.mxu0 0
    %982 = vmatpush2.bf16.msra.mxu0 0
    %983 = vmatprep.subr.bf16.mxu0 0
    %984 = vmatpush2.bf16.msra.mxu0 0
    %985 = vmatprep.subr.bf16.mxu0 0
    %986 = vmatpush2.bf16.msra.mxu0 0
    %987 = vmatprep.subr.bf16.mxu0 0
    %988 = vmatpush2.bf16.msra.mxu0 0
    %989 = vmatprep.subr.bf16.mxu0 0
    %990 = vmatpush2.bf16.msra.mxu0 0
    %991 = vmatprep.subr.bf16.mxu0 0
    %992 = vmatpush2.bf16.msra.mxu0 0
    %993 = vmatprep.subr.bf16.mxu0 0
    %994 = vmatpush2.bf16.msra.mxu0 0
    %995 = vmatprep.subr.bf16.mxu0 0
    %996 = vmatpush2.bf16.msra.mxu0 0
    %997 = vmatprep.mubr.bf16.mxu0 0
    %998 = vmatmul.mubr.bf16.gmra.mxu0 %v964
    %v999 = vpop.f32.mrf.mxu0
    %v1000 = vadd.f32 0.0, %v999
    %v1001 = vpop.f32.mrf.mxu0
    %v1002 = vadd.f32 0.0, %v1001
    %v1003 = vpop.f32.mrf.mxu0
    %v1004 = vpop.f32.mrf.mxu0
    %1005 = vdwg.mxu0
    %1006 = vmatprep.subr.bf16.mxu0 %v700
    %1007 = vmatpush1.bf16.msra.mxu0 %v699
    %1008 = vmatprep.subr.bf16.mxu0 %v696
    %1009 = vmatpush1.bf16.msra.mxu0 %v695
    %1010 = vmatprep.subr.bf16.mxu0 %v692
    %1011 = vmatpush1.bf16.msra.mxu0 %v691
    %1012 = vmatprep.subr.bf16.mxu0 %v688
    %1013 = vmatpush1.bf16.msra.mxu0 %v687
    %1014 = vmatprep.subr.bf16.mxu0 %v684
    %1015 = vmatpush1.bf16.msra.mxu0 %v683
    %1016 = vmatprep.subr.bf16.mxu0 %v680
    %1017 = vmatpush1.bf16.msra.mxu0 %v679
    %1018 = vmatprep.subr.bf16.mxu0 %v676
    %1019 = vmatpush1.bf16.msra.mxu0 %v675
    %1020 = vmatprep.subr.bf16.mxu0 %v672
    %1021 = vmatpush1.bf16.msra.mxu0 %v671
    %1022 = vmatprep.subr.bf16.mxu0 0
    %1023 = vmatpush2.bf16.msra.mxu0 0
    %1024 = vmatprep.subr.bf16.mxu0 0
    %1025 = vmatpush2.bf16.msra.mxu0 0
    %1026 = vmatprep.subr.bf16.mxu0 0
    %1027 = vmatpush2.bf16.msra.mxu0 0
    %1028 = vmatprep.subr.bf16.mxu0 0
    %1029 = vmatpush2.bf16.msra.mxu0 0
    %1030 = vmatprep.subr.bf16.mxu0 0
    %1031 = vmatpush2.bf16.msra.mxu0 0
    %1032 = vmatprep.subr.bf16.mxu0 0
    %1033 = vmatpush2.bf16.msra.mxu0 0
    %1034 = vmatprep.subr.bf16.mxu0 0
    %1035 = vmatpush2.bf16.msra.mxu0 0
    %1036 = vmatprep.subr.bf16.mxu0 0
    %1037 = vmatpush2.bf16.msra.mxu0 0
    %1038 = vmatprep.mubr.bf16.mxu0 0
    %1039 = vmatmul.mubr.bf16.gmra.mxu0 %v964
    %v1040 = vpop.f32.mrf.mxu0
    %v1041 = vadd.f32 0.0, %v1040
    %v1042 = vpop.f32.mrf.mxu0
    %v1043 = vadd.f32 0.0, %v1042
    %v1044 = vpop.f32.mrf.mxu0
    %v1045 = vpop.f32.mrf.mxu0
    %1046 = vdwg.mxu0
    %v1047 = vadd.f32 %v960, %v1000
    %v1048 = vadd.f32 %v961, %v1002
    %v1049 = vadd.f32 %v962, %v1041
    %v1050 = vadd.f32 %v963, %v1043
    %v1051 = vxor.u32 %v1047, 2147483648
    %v1052 = vmul.f32 %v1051, 1.442695
    %v1053 = vpow.pop %v1052
    %v1054 = vadd.f32 %v1053, 1.0
    %v1055 = vrcp.pop %v1054
    %v1056 = vmul.f32 1.0, %v1055
    %v1057 = vxor.u32 %v1048, 2147483648
    %v1058 = vmul.f32 %v1057, 1.442695
    %v1059 = vpow.pop %v1058
    %v1060 = vadd.f32 %v1059, 1.0
    %v1061 = vrcp.pop %v1060
    %v1062 = vmul.f32 1.0, %v1061
    %v1063 = vtanh.pop %v1049
    %v1064 = vxor.u32 %v1050, 2147483648
    %v1065 = vmul.f32 %v1064, 1.442695
    %v1066 = vpow.pop %v1065
    %v1067 = vadd.f32 %v1066, 1.0
    %v1068 = vrcp.pop %v1067
    %v1069 = vmul.f32 1.0, %v1068
    %v1070 = vmul.f32 %v1062, %v956
    %v1071 = vmul.f32 %v1056, %v1063
    %v1072 = vadd.f32 %v1070, %v1071
    %v1073 = vtanh.pop %v1072
    %v1074 = vmul.f32 %v1069, %v1073
    %1075 = vst [vmem:[#allocation3 + $0x10] sm:$0xff] %v1074
    %v1076 = vld [vmem:[#allocation2 + $0x60] sm:$0xff]
    %v1077 = vld [vmem:[#allocation2 + $0x68] sm:$0xff]
    %v1078 = vld [vmem:[#allocation2 + $0x70] sm:$0xff]
    %v1079 = vld [vmem:[#allocation2 + $0x78] sm:$0xff]
    %v1080 = vpack.c.bf16 %v1074, %v1074
    %1081 = vmatprep.subr.bf16.mxu0 %v698
    %1082 = vmatpush1.bf16.msra.mxu0 %v697
    %1083 = vmatprep.subr.bf16.mxu0 %v694
    %1084 = vmatpush1.bf16.msra.mxu0 %v693
    %1085 = vmatprep.subr.bf16.mxu0 %v690
    %1086 = vmatpush1.bf16.msra.mxu0 %v689
    %1087 = vmatprep.subr.bf16.mxu0 %v686
    %1088 = vmatpush1.bf16.msra.mxu0 %v685
    %1089 = vmatprep.subr.bf16.mxu0 %v682
    %1090 = vmatpush1.bf16.msra.mxu0 %v681
    %1091 = vmatprep.subr.bf16.mxu0 %v678
    %1092 = vmatpush1.bf16.msra.mxu0 %v677
    %1093 = vmatprep.subr.bf16.mxu0 %v674
    %1094 = vmatpush1.bf16.msra.mxu0 %v673
    %1095 = vmatprep.subr.bf16.mxu0 %v670
    %1096 = vmatpush1.bf16.msra.mxu0 %v669
    %1097 = vmatprep.subr.bf16.mxu0 0
    %1098 = vmatpush2.bf16.msra.mxu0 0
    %1099 = vmatprep.subr.bf16.mxu0 0
    %1100 = vmatpush2.bf16.msra.mxu0 0
    %1101 = vmatprep.subr.bf16.mxu0 0
    %1102 = vmatpush2.bf16.msra.mxu0 0
    %1103 = vmatprep.subr.bf16.mxu0 0
    %1104 = vmatpush2.bf16.msra.mxu0 0
    %1105 = vmatprep.subr.bf16.mxu0 0
    %1106 = vmatpush2.bf16.msra.mxu0 0
    %1107 = vmatprep.subr.bf16.mxu0 0
    %1108 = vmatpush2.bf16.msra.mxu0 0
    %1109 = vmatprep.subr.bf16.mxu0 0
    %1110 = vmatpush2.bf16.msra.mxu0 0
    %1111 = vmatprep.subr.bf16.mxu0 0
    %1112 = vmatpush2.bf16.msra.mxu0 0
    %1113 = vmatprep.mubr.bf16.mxu0 0
    %1114 = vmatmul.mubr.bf16.gmra.mxu0 %v1080
    %v1115 = vpop.f32.mrf.mxu0
    %v1116 = vadd.f32 0.0, %v1115
    %v1117 = vpop.f32.mrf.mxu0
    %v1118 = vadd.f32 0.0, %v1117
    %v1119 = vpop.f32.mrf.mxu0
    %v1120 = vpop.f32.mrf.mxu0
    %1121 = vdwg.mxu0
    %1122 = vmatprep.subr.bf16.mxu0 %v700
    %1123 = vmatpush1.bf16.msra.mxu0 %v699
    %1124 = vmatprep.subr.bf16.mxu0 %v696
    %1125 = vmatpush1.bf16.msra.mxu0 %v695
    %1126 = vmatprep.subr.bf16.mxu0 %v692
    %1127 = vmatpush1.bf16.msra.mxu0 %v691
    %1128 = vmatprep.subr.bf16.mxu0 %v688
    %1129 = vmatpush1.bf16.msra.mxu0 %v687
    %1130 = vmatprep.subr.bf16.mxu0 %v684
    %1131 = vmatpush1.bf16.msra.mxu0 %v683
    %1132 = vmatprep.subr.bf16.mxu0 %v680
    %1133 = vmatpush1.bf16.msra.mxu0 %v679
    %1134 = vmatprep.subr.bf16.mxu0 %v676
    %1135 = vmatpush1.bf16.msra.mxu0 %v675
    %1136 = vmatprep.subr.bf16.mxu0 %v672
    %1137 = vmatpush1.bf16.msra.mxu0 %v671
    %1138 = vmatprep.subr.bf16.mxu0 0
    %1139 = vmatpush2.bf16.msra.mxu0 0
    %1140 = vmatprep.subr.bf16.mxu0 0
    %1141 = vmatpush2.bf16.msra.mxu0 0
    %1142 = vmatprep.subr.bf16.mxu0 0
    %1143 = vmatpush2.bf16.msra.mxu0 0
    %1144 = vmatprep.subr.bf16.mxu0 0
    %1145 = vmatpush2.bf16.msra.mxu0 0
    %1146 = vmatprep.subr.bf16.mxu0 0
    %1147 = vmatpush2.bf16.msra.mxu0 0
    %1148 = vmatprep.subr.bf16.mxu0 0
    %1149 = vmatpush2.bf16.msra.mxu0 0
    %1150 = vmatprep.subr.bf16.mxu0 0
    %1151 = vmatpush2.bf16.msra.mxu0 0
    %1152 = vmatprep.subr.bf16.mxu0 0
    %1153 = vmatpush2.bf16.msra.mxu0 0
    %1154 = vmatprep.mubr.bf16.mxu0 0
    %1155 = vmatmul.mubr.bf16.gmra.mxu0 %v1080
    %v1156 = vpop.f32.mrf.mxu0
    %v1157 = vadd.f32 0.0, %v1156
    %v1158 = vpop.f32.mrf.mxu0
    %v1159 = vadd.f32 0.0, %v1158
    %v1160 = vpop.f32.mrf.mxu0
    %v1161 = vpop.f32.mrf.mxu0
    %1162 = vdwg.mxu0
    %v1163 = vadd.f32 %v1076, %v1116
    %v1164 = vadd.f32 %v1077, %v1118
    %v1165 = vadd.f32 %v1078, %v1157
    %v1166 = vadd.f32 %v1079, %v1159
    %v1167 = vxor.u32 %v1163, 2147483648
    %v1168 = vmul.f32 %v1167, 1.442695
    %v1169 = vpow.pop %v1168
    %v1170 = vadd.f32 %v1169, 1.0
    %v1171 = vrcp.pop %v1170
    %v1172 = vmul.f32 1.0, %v1171
    %v1173 = vxor.u32 %v1164, 2147483648
    %v1174 = vmul.f32 %v1173, 1.442695
    %v1175 = vpow.pop %v1174
    %v1176 = vadd.f32 %v1175, 1.0
    %v1177 = vrcp.pop %v1176
    %v1178 = vmul.f32 1.0, %v1177
    %v1179 = vtanh.pop %v1165
    %v1180 = vxor.u32 %v1166, 2147483648
    %v1181 = vmul.f32 %v1180, 1.442695
    %v1182 = vpow.pop %v1181
    %v1183 = vadd.f32 %v1182, 1.0
    %v1184 = vrcp.pop %v1183
    %v1185 = vmul.f32 1.0, %v1184
    %v1186 = vmul.f32 %v1178, %v1072
    %v1187 = vmul.f32 %v1172, %v1179
    %v1188 = vadd.f32 %v1186, %v1187
    %v1189 = vtanh.pop %v1188
    %v1190 = vmul.f32 %v1185, %v1189
    %1191 = vst [vmem:[#allocation3 + $0x18] sm:$0xff] %v1190
    %v1192 = vld [vmem:[#allocation2 + $0x80] sm:$0xff]
    %v1193 = vld [vmem:[#allocation2 + $0x88] sm:$0xff]
    %v1194 = vld [vmem:[#allocation2 + $0x90] sm:$0xff]
    %v1195 = vld [vmem:[#allocation2 + $0x98] sm:$0xff]
    %v1196 = vpack.c.bf16 %v1190, %v1190
    %1197 = vmatprep.subr.bf16.mxu0 %v698
    %1198 = vmatpush1.bf16.msra.mxu0 %v697
    %1199 = vmatprep.subr.bf16.mxu0 %v694
    %1200 = vmatpush1.bf16.msra.mxu0 %v693
    %1201 = vmatprep.subr.bf16.mxu0 %v690
    %1202 = vmatpush1.bf16.msra.mxu0 %v689
    %1203 = vmatprep.subr.bf16.mxu0 %v686
    %1204 = vmatpush1.bf16.msra.mxu0 %v685
    %1205 = vmatprep.subr.bf16.mxu0 %v682
    %1206 = vmatpush1.bf16.msra.mxu0 %v681
    %1207 = vmatprep.subr.bf16.mxu0 %v678
    %1208 = vmatpush1.bf16.msra.mxu0 %v677
    %1209 = vmatprep.subr.bf16.mxu0 %v674
    %1210 = vmatpush1.bf16.msra.mxu0 %v673
    %1211 = vmatprep.subr.bf16.mxu0 %v670
    %1212 = vmatpush1.bf16.msra.mxu0 %v669
    %1213 = vmatprep.subr.bf16.mxu0 0
    %1214 = vmatpush2.bf16.msra.mxu0 0
    %1215 = vmatprep.subr.bf16.mxu0 0
    %1216 = vmatpush2.bf16.msra.mxu0 0
    %1217 = vmatprep.subr.bf16.mxu0 0
    %1218 = vmatpush2.bf16.msra.mxu0 0
    %1219 = vmatprep.subr.bf16.mxu0 0
    %1220 = vmatpush2.bf16.msra.mxu0 0
    %1221 = vmatprep.subr.bf16.mxu0 0
    %1222 = vmatpush2.bf16.msra.mxu0 0
    %1223 = vmatprep.subr.bf16.mxu0 0
    %1224 = vmatpush2.bf16.msra.mxu0 0
    %1225 = vmatprep.subr.bf16.mxu0 0
    %1226 = vmatpush2.bf16.msra.mxu0 0
    %1227 = vmatprep.subr.bf16.mxu0 0
    %1228 = vmatpush2.bf16.msra.mxu0 0
    %1229 = vmatprep.mubr.bf16.mxu0 0
    %1230 = vmatmul.mubr.bf16.gmra.mxu0 %v1196
    %v1231 = vpop.f32.mrf.mxu0
    %v1232 = vadd.f32 0.0, %v1231
    %v1233 = vpop.f32.mrf.mxu0
    %v1234 = vadd.f32 0.0, %v1233
    %v1235 = vpop.f32.mrf.mxu0
    %v1236 = vpop.f32.mrf.mxu0
    %1237 = vdwg.mxu0
    %1238 = vmatprep.subr.bf16.mxu0 %v700
    %1239 = vmatpush1.bf16.msra.mxu0 %v699
    %1240 = vmatprep.subr.bf16.mxu0 %v696
    %1241 = vmatpush1.bf16.msra.mxu0 %v695
    %1242 = vmatprep.subr.bf16.mxu0 %v692
    %1243 = vmatpush1.bf16.msra.mxu0 %v691
    %1244 = vmatprep.subr.bf16.mxu0 %v688
    %1245 = vmatpush1.bf16.msra.mxu0 %v687
    %1246 = vmatprep.subr.bf16.mxu0 %v684
    %1247 = vmatpush1.bf16.msra.mxu0 %v683
    %1248 = vmatprep.subr.bf16.mxu0 %v680
    %1249 = vmatpush1.bf16.msra.mxu0 %v679
    %1250 = vmatprep.subr.bf16.mxu0 %v676
    %1251 = vmatpush1.bf16.msra.mxu0 %v675
    %1252 = vmatprep.subr.bf16.mxu0 %v672
    %1253 = vmatpush1.bf16.msra.mxu0 %v671
    %1254 = vmatprep.subr.bf16.mxu0 0
    %1255 = vmatpush2.bf16.msra.mxu0 0
    %1256 = vmatprep.subr.bf16.mxu0 0
    %1257 = vmatpush2.bf16.msra.mxu0 0
    %1258 = vmatprep.subr.bf16.mxu0 0
    %1259 = vmatpush2.bf16.msra.mxu0 0
    %1260 = vmatprep.subr.bf16.mxu0 0
    %1261 = vmatpush2.bf16.msra.mxu0 0
    %1262 = vmatprep.subr.bf16.mxu0 0
    %1263 = vmatpush2.bf16.msra.mxu0 0
    %1264 = vmatprep.subr.bf16.mxu0 0
    %1265 = vmatpush2.bf16.msra.mxu0 0
    %1266 = vmatprep.subr.bf16.mxu0 0
    %1267 = vmatpush2.bf16.msra.mxu0 0
    %1268 = vmatprep.subr.bf16.mxu0 0
    %1269 = vmatpush2.bf16.msra.mxu0 0
    %1270 = vmatprep.mubr.bf16.mxu0 0
    %1271 = vmatmul.mubr.bf16.gmra.mxu0 %v1196
    %v1272 = vpop.f32.mrf.mxu0
    %v1273 = vadd.f32 0.0, %v1272
    %v1274 = vpop.f32.mrf.mxu0
    %v1275 = vadd.f32 0.0, %v1274
    %v1276 = vpop.f32.mrf.mxu0
    %v1277 = vpop.f32.mrf.mxu0
    %1278 = vdwg.mxu0
    %v1279 = vadd.f32 %v1192, %v1232
    %v1280 = vadd.f32 %v1193, %v1234
    %v1281 = vadd.f32 %v1194, %v1273
    %v1282 = vadd.f32 %v1195, %v1275
    %v1283 = vxor.u32 %v1279, 2147483648
    %v1284 = vmul.f32 %v1283, 1.442695
    %v1285 = vpow.pop %v1284
    %v1286 = vadd.f32 %v1285, 1.0
    %v1287 = vrcp.pop %v1286
    %v1288 = vmul.f32 1.0, %v1287
    %v1289 = vxor.u32 %v1280, 2147483648
    %v1290 = vmul.f32 %v1289, 1.442695
    %v1291 = vpow.pop %v1290
    %v1292 = vadd.f32 %v1291, 1.0
    %v1293 = vrcp.pop %v1292
    %v1294 = vmul.f32 1.0, %v1293
    %v1295 = vtanh.pop %v1281
    %v1296 = vxor.u32 %v1282, 2147483648
    %v1297 = vmul.f32 %v1296, 1.442695
    %v1298 = vpow.pop %v1297
    %v1299 = vadd.f32 %v1298, 1.0
    %v1300 = vrcp.pop %v1299
    %v1301 = vmul.f32 1.0, %v1300
    %v1302 = vmul.f32 %v1294, %v1188
    %v1303 = vmul.f32 %v1288, %v1295
    %v1304 = vadd.f32 %v1302, %v1303
    %v1305 = vtanh.pop %v1304
    %v1306 = vmul.f32 %v1301, %v1305
    %1307 = vst [vmem:[#allocation3 + $0x20] sm:$0xff] %v1306
    %v1308 = vld [vmem:[#allocation2 + $0xa0] sm:$0xff]
    %v1309 = vld [vmem:[#allocation2 + $0xa8] sm:$0xff]
    %v1310 = vld [vmem:[#allocation2 + $0xb0] sm:$0xff]
    %v1311 = vld [vmem:[#allocation2 + $0xb8] sm:$0xff]
    %v1312 = vpack.c.bf16 %v1306, %v1306
    %1313 = vmatprep.subr.bf16.mxu0 %v698
    %1314 = vmatpush1.bf16.msra.mxu0 %v697
    %1315 = vmatprep.subr.bf16.mxu0 %v694
    %1316 = vmatpush1.bf16.msra.mxu0 %v693
    %1317 = vmatprep.subr.bf16.mxu0 %v690
    %1318 = vmatpush1.bf16.msra.mxu0 %v689
    %1319 = vmatprep.subr.bf16.mxu0 %v686
    %1320 = vmatpush1.bf16.msra.mxu0 %v685
    %1321 = vmatprep.subr.bf16.mxu0 %v682
    %1322 = vmatpush1.bf16.msra.mxu0 %v681
    %1323 = vmatprep.subr.bf16.mxu0 %v678
    %1324 = vmatpush1.bf16.msra.mxu0 %v677
    %1325 = vmatprep.subr.bf16.mxu0 %v674
    %1326 = vmatpush1.bf16.msra.mxu0 %v673
    %1327 = vmatprep.subr.bf16.mxu0 %v670
    %1328 = vmatpush1.bf16.msra.mxu0 %v669
    %1329 = vmatprep.subr.bf16.mxu0 0
    %1330 = vmatpush2.bf16.msra.mxu0 0
    %1331 = vmatprep.subr.bf16.mxu0 0
    %1332 = vmatpush2.bf16.msra.mxu0 0
    %1333 = vmatprep.subr.bf16.mxu0 0
    %1334 = vmatpush2.bf16.msra.mxu0 0
    %1335 = vmatprep.subr.bf16.mxu0 0
    %1336 = vmatpush2.bf16.msra.mxu0 0
    %1337 = vmatprep.subr.bf16.mxu0 0
    %1338 = vmatpush2.bf16.msra.mxu0 0
    %1339 = vmatprep.subr.bf16.mxu0 0
    %1340 = vmatpush2.bf16.msra.mxu0 0
    %1341 = vmatprep.subr.bf16.mxu0 0
    %1342 = vmatpush2.bf16.msra.mxu0 0
    %1343 = vmatprep.subr.bf16.mxu0 0
    %1344 = vmatpush2.bf16.msra.mxu0 0
    %1345 = vmatprep.mubr.bf16.mxu0 0
    %1346 = vmatmul.mubr.bf16.gmra.mxu0 %v1312
    %v1347 = vpop.f32.mrf.mxu0
    %v1348 = vadd.f32 0.0, %v1347
    %v1349 = vpop.f32.mrf.mxu0
    %v1350 = vadd.f32 0.0, %v1349
    %v1351 = vpop.f32.mrf.mxu0
    %v1352 = vpop.f32.mrf.mxu0
    %1353 = vdwg.mxu0
    %1354 = vmatprep.subr.bf16.mxu0 %v700
    %1355 = vmatpush1.bf16.msra.mxu0 %v699
    %1356 = vmatprep.subr.bf16.mxu0 %v696
    %1357 = vmatpush1.bf16.msra.mxu0 %v695
    %1358 = vmatprep.subr.bf16.mxu0 %v692
    %1359 = vmatpush1.bf16.msra.mxu0 %v691
    %1360 = vmatprep.subr.bf16.mxu0 %v688
    %1361 = vmatpush1.bf16.msra.mxu0 %v687
    %1362 = vmatprep.subr.bf16.mxu0 %v684
    %1363 = vmatpush1.bf16.msra.mxu0 %v683
    %1364 = vmatprep.subr.bf16.mxu0 %v680
    %1365 = vmatpush1.bf16.msra.mxu0 %v679
    %1366 = vmatprep.subr.bf16.mxu0 %v676
    %1367 = vmatpush1.bf16.msra.mxu0 %v675
    %1368 = vmatprep.subr.bf16.mxu0 %v672
    %1369 = vmatpush1.bf16.msra.mxu0 %v671
    %1370 = vmatprep.subr.bf16.mxu0 0
    %1371 = vmatpush2.bf16.msra.mxu0 0
    %1372 = vmatprep.subr.bf16.mxu0 0
    %1373 = vmatpush2.bf16.msra.mxu0 0
    %1374 = vmatprep.subr.bf16.mxu0 0
    %1375 = vmatpush2.bf16.msra.mxu0 0
    %1376 = vmatprep.subr.bf16.mxu0 0
    %1377 = vmatpush2.bf16.msra.mxu0 0
    %1378 = vmatprep.subr.bf16.mxu0 0
    %1379 = vmatpush2.bf16.msra.mxu0 0
    %1380 = vmatprep.subr.bf16.mxu0 0
    %1381 = vmatpush2.bf16.msra.mxu0 0
    %1382 = vmatprep.subr.bf16.mxu0 0
    %1383 = vmatpush2.bf16.msra.mxu0 0
    %1384 = vmatprep.subr.bf16.mxu0 0
    %1385 = vmatpush2.bf16.msra.mxu0 0
    %1386 = vmatprep.mubr.bf16.mxu0 0
    %1387 = vmatmul.mubr.bf16.gmra.mxu0 %v1312
    %v1388 = vpop.f32.mrf.mxu0
    %v1389 = vadd.f32 0.0, %v1388
    %v1390 = vpop.f32.mrf.mxu0
    %v1391 = vadd.f32 0.0, %v1390
    %v1392 = vpop.f32.mrf.mxu0
    %v1393 = vpop.f32.mrf.mxu0
    %1394 = vdwg.mxu0
    %v1395 = vadd.f32 %v1308, %v1348
    %v1396 = vadd.f32 %v1309, %v1350
    %v1397 = vadd.f32 %v1310, %v1389
    %v1398 = vadd.f32 %v1311, %v1391
    %v1399 = vxor.u32 %v1395, 2147483648
    %v1400 = vmul.f32 %v1399, 1.442695
    %v1401 = vpow.pop %v1400
    %v1402 = vadd.f32 %v1401, 1.0
    %v1403 = vrcp.pop %v1402
    %v1404 = vmul.f32 1.0, %v1403
    %v1405 = vxor.u32 %v1396, 2147483648
    %v1406 = vmul.f32 %v1405, 1.442695
    %v1407 = vpow.pop %v1406
    %v1408 = vadd.f32 %v1407, 1.0
    %v1409 = vrcp.pop %v1408
    %v1410 = vmul.f32 1.0, %v1409
    %v1411 = vtanh.pop %v1397
    %v1412 = vxor.u32 %v1398, 2147483648
    %v1413 = vmul.f32 %v1412, 1.442695
    %v1414 = vpow.pop %v1413
    %v1415 = vadd.f32 %v1414, 1.0
    %v1416 = vrcp.pop %v1415
    %v1417 = vmul.f32 1.0, %v1416
    %v1418 = vmul.f32 %v1410, %v1304
    %v1419 = vmul.f32 %v1404, %v1411
    %v1420 = vadd.f32 %v1418, %v1419
    %v1421 = vtanh.pop %v1420
    %v1422 = vmul.f32 %v1417, %v1421
    %1423 = vst [vmem:[#allocation3 + $0x28] sm:$0xff] %v1422
    %v1424 = vld [vmem:[#allocation2 + $0xc0] sm:$0xff]
    %v1425 = vld [vmem:[#allocation2 + $0xc8] sm:$0xff]
    %v1426 = vld [vmem:[#allocation2 + $0xd0] sm:$0xff]
    %v1427 = vld [vmem:[#allocation2 + $0xd8] sm:$0xff]
    %v1428 = vpack.c.bf16 %v1422, %v1422
    %1429 = vmatprep.subr.bf16.mxu0 %v698
    %1430 = vmatpush1.bf16.msra.mxu0 %v697
    %1431 = vmatprep.subr.bf16.mxu0 %v694
    %1432 = vmatpush1.bf16.msra.mxu0 %v693
    %1433 = vmatprep.subr.bf16.mxu0 %v690
    %1434 = vmatpush1.bf16.msra.mxu0 %v689
    %1435 = vmatprep.subr.bf16.mxu0 %v686
    %1436 = vmatpush1.bf16.msra.mxu0 %v685
    %1437 = vmatprep.subr.bf16.mxu0 %v682
    %1438 = vmatpush1.bf16.msra.mxu0 %v681
    %1439 = vmatprep.subr.bf16.mxu0 %v678
    %1440 = vmatpush1.bf16.msra.mxu0 %v677
    %1441 = vmatprep.subr.bf16.mxu0 %v674
    %1442 = vmatpush1.bf16.msra.mxu0 %v673
    %1443 = vmatprep.subr.bf16.mxu0 %v670
    %1444 = vmatpush1.bf16.msra.mxu0 %v669
    %1445 = vmatprep.subr.bf16.mxu0 0
    %1446 = vmatpush2.bf16.msra.mxu0 0
    %1447 = vmatprep.subr.bf16.mxu0 0
    %1448 = vmatpush2.bf16.msra.mxu0 0
    %1449 = vmatprep.subr.bf16.mxu0 0
    %1450 = vmatpush2.bf16.msra.mxu0 0
    %1451 = vmatprep.subr.bf16.mxu0 0
    %1452 = vmatpush2.bf16.msra.mxu0 0
    %1453 = vmatprep.subr.bf16.mxu0 0
    %1454 = vmatpush2.bf16.msra.mxu0 0
    %1455 = vmatprep.subr.bf16.mxu0 0
    %1456 = vmatpush2.bf16.msra.mxu0 0
    %1457 = vmatprep.subr.bf16.mxu0 0
    %1458 = vmatpush2.bf16.msra.mxu0 0
    %1459 = vmatprep.subr.bf16.mxu0 0
    %1460 = vmatpush2.bf16.msra.mxu0 0
    %1461 = vmatprep.mubr.bf16.mxu0 0
    %1462 = vmatmul.mubr.bf16.gmra.mxu0 %v1428
    %v1463 = vpop.f32.mrf.mxu0
    %v1464 = vadd.f32 0.0, %v1463
    %v1465 = vpop.f32.mrf.mxu0
    %v1466 = vadd.f32 0.0, %v1465
    %v1467 = vpop.f32.mrf.mxu0
    %v1468 = vpop.f32.mrf.mxu0
    %1469 = vdwg.mxu0
    %1470 = vmatprep.subr.bf16.mxu0 %v700
    %1471 = vmatpush1.bf16.msra.mxu0 %v699
    %1472 = vmatprep.subr.bf16.mxu0 %v696
    %1473 = vmatpush1.bf16.msra.mxu0 %v695
    %1474 = vmatprep.subr.bf16.mxu0 %v692
    %1475 = vmatpush1.bf16.msra.mxu0 %v691
    %1476 = vmatprep.subr.bf16.mxu0 %v688
    %1477 = vmatpush1.bf16.msra.mxu0 %v687
    %1478 = vmatprep.subr.bf16.mxu0 %v684
    %1479 = vmatpush1.bf16.msra.mxu0 %v683
    %1480 = vmatprep.subr.bf16.mxu0 %v680
    %1481 = vmatpush1.bf16.msra.mxu0 %v679
    %1482 = vmatprep.subr.bf16.mxu0 %v676
    %1483 = vmatpush1.bf16.msra.mxu0 %v675
    %1484 = vmatprep.subr.bf16.mxu0 %v672
    %1485 = vmatpush1.bf16.msra.mxu0 %v671
    %1486 = vmatprep.subr.bf16.mxu0 0
    %1487 = vmatpush2.bf16.msra.mxu0 0
    %1488 = vmatprep.subr.bf16.mxu0 0
    %1489 = vmatpush2.bf16.msra.mxu0 0
    %1490 = vmatprep.subr.bf16.mxu0 0
    %1491 = vmatpush2.bf16.msra.mxu0 0
    %1492 = vmatprep.subr.bf16.mxu0 0
    %1493 = vmatpush2.bf16.msra.mxu0 0
    %1494 = vmatprep.subr.bf16.mxu0 0
    %1495 = vmatpush2.bf16.msra.mxu0 0
    %1496 = vmatprep.subr.bf16.mxu0 0
    %1497 = vmatpush2.bf16.msra.mxu0 0
    %1498 = vmatprep.subr.bf16.mxu0 0
    %1499 = vmatpush2.bf16.msra.mxu0 0
    %1500 = vmatprep.subr.bf16.mxu0 0
    %1501 = vmatpush2.bf16.msra.mxu0 0
    %1502 = vmatprep.mubr.bf16.mxu0 0
    %1503 = vmatmul.mubr.bf16.gmra.mxu0 %v1428
    %v1504 = vpop.f32.mrf.mxu0
    %v1505 = vadd.f32 0.0, %v1504
    %v1506 = vpop.f32.mrf.mxu0
    %v1507 = vadd.f32 0.0, %v1506
    %v1508 = vpop.f32.mrf.mxu0
    %v1509 = vpop.f32.mrf.mxu0
    %1510 = vdwg.mxu0
    %v1511 = vadd.f32 %v1424, %v1464
    %v1512 = vadd.f32 %v1425, %v1466
    %v1513 = vadd.f32 %v1426, %v1505
    %v1514 = vadd.f32 %v1427, %v1507
    %v1515 = vxor.u32 %v1511, 2147483648
    %v1516 = vmul.f32 %v1515, 1.442695
    %v1517 = vpow.pop %v1516
    %v1518 = vadd.f32 %v1517, 1.0
    %v1519 = vrcp.pop %v1518
    %v1520 = vmul.f32 1.0, %v1519
    %v1521 = vxor.u32 %v1512, 2147483648
    %v1522 = vmul.f32 %v1521, 1.442695
    %v1523 = vpow.pop %v1522
    %v1524 = vadd.f32 %v1523, 1.0
    %v1525 = vrcp.pop %v1524
    %v1526 = vmul.f32 1.0, %v1525
    %v1527 = vtanh.pop %v1513
    %v1528 = vxor.u32 %v1514, 2147483648
    %v1529 = vmul.f32 %v1528, 1.442695
    %v1530 = vpow.pop %v1529
    %v1531 = vadd.f32 %v1530, 1.0
    %v1532 = vrcp.pop %v1531
    %v1533 = vmul.f32 1.0, %v1532
    %v1534 = vmul.f32 %v1526, %v1420
    %v1535 = vmul.f32 %v1520, %v1527
    %v1536 = vadd.f32 %v1534, %v1535
    %v1537 = vtanh.pop %v1536
    %v1538 = vmul.f32 %v1533, %v1537
    %1539 = vst [vmem:[#allocation3 + $0x30] sm:$0xff] %v1538
    %v1540 = vld [vmem:[#allocation2 + $0xe0] sm:$0xff]
    %v1541 = vld [vmem:[#allocation2 + $0xe8] sm:$0xff]
    %v1542 = vld [vmem:[#allocation2 + $0xf0] sm:$0xff]
    %v1543 = vld [vmem:[#allocation2 + $0xf8] sm:$0xff]
    %v1544 = vpack.c.bf16 %v1538, %v1538
    %1545 = vmatprep.subr.bf16.mxu0 %v698
    %1546 = vmatpush1.bf16.msra.mxu0 %v697
    %1547 = vmatprep.subr.bf16.mxu0 %v694
    %1548 = vmatpush1.bf16.msra.mxu0 %v693
    %1549 = vmatprep.subr.bf16.mxu0 %v690
    %1550 = vmatpush1.bf16.msra.mxu0 %v689
    %1551 = vmatprep.subr.bf16.mxu0 %v686
    %1552 = vmatpush1.bf16.msra.mxu0 %v685
    %1553 = vmatprep.subr.bf16.mxu0 %v682
    %1554 = vmatpush1.bf16.msra.mxu0 %v681
    %1555 = vmatprep.subr.bf16.mxu0 %v678
    %1556 = vmatpush1.bf16.msra.mxu0 %v677
    %1557 = vmatprep.subr.bf16.mxu0 %v674
    %1558 = vmatpush1.bf16.msra.mxu0 %v673
    %1559 = vmatprep.subr.bf16.mxu0 %v670
    %1560 = vmatpush1.bf16.msra.mxu0 %v669
    %1561 = vmatprep.subr.bf16.mxu0 0
    %1562 = vmatpush2.bf16.msra.mxu0 0
    %1563 = vmatprep.subr.bf16.mxu0 0
    %1564 = vmatpush2.bf16.msra.mxu0 0
    %1565 = vmatprep.subr.bf16.mxu0 0
    %1566 = vmatpush2.bf16.msra.mxu0 0
    %1567 = vmatprep.subr.bf16.mxu0 0
    %1568 = vmatpush2.bf16.msra.mxu0 0
    %1569 = vmatprep.subr.bf16.mxu0 0
    %1570 = vmatpush2.bf16.msra.mxu0 0
    %1571 = vmatprep.subr.bf16.mxu0 0
    %1572 = vmatpush2.bf16.msra.mxu0 0
    %1573 = vmatprep.subr.bf16.mxu0 0
    %1574 = vmatpush2.bf16.msra.mxu0 0
    %1575 = vmatprep.subr.bf16.mxu0 0
    %1576 = vmatpush2.bf16.msra.mxu0 0
    %1577 = vmatprep.mubr.bf16.mxu0 0
    %1578 = vmatmul.mubr.bf16.gmra.mxu0 %v1544
    %v1579 = vpop.f32.mrf.mxu0
    %v1580 = vadd.f32 0.0, %v1579
    %v1581 = vpop.f32.mrf.mxu0
    %v1582 = vadd.f32 0.0, %v1581
    %v1583 = vpop.f32.mrf.mxu0
    %v1584 = vpop.f32.mrf.mxu0
    %1585 = vdwg.mxu0
    %1586 = vmatprep.subr.bf16.mxu0 %v700
    %1587 = vmatpush1.bf16.msra.mxu0 %v699
    %1588 = vmatprep.subr.bf16.mxu0 %v696
    %1589 = vmatpush1.bf16.msra.mxu0 %v695
    %1590 = vmatprep.subr.bf16.mxu0 %v692
    %1591 = vmatpush1.bf16.msra.mxu0 %v691
    %1592 = vmatprep.subr.bf16.mxu0 %v688
    %1593 = vmatpush1.bf16.msra.mxu0 %v687
    %1594 = vmatprep.subr.bf16.mxu0 %v684
    %1595 = vmatpush1.bf16.msra.mxu0 %v683
    %1596 = vmatprep.subr.bf16.mxu0 %v680
    %1597 = vmatpush1.bf16.msra.mxu0 %v679
    %1598 = vmatprep.subr.bf16.mxu0 %v676
    %1599 = vmatpush1.bf16.msra.mxu0 %v675
    %1600 = vmatprep.subr.bf16.mxu0 %v672
    %1601 = vmatpush1.bf16.msra.mxu0 %v671
    %1602 = vmatprep.subr.bf16.mxu0 0
    %1603 = vmatpush2.bf16.msra.mxu0 0
    %1604 = vmatprep.subr.bf16.mxu0 0
    %1605 = vmatpush2.bf16.msra.mxu0 0
    %1606 = vmatprep.subr.bf16.mxu0 0
    %1607 = vmatpush2.bf16.msra.mxu0 0
    %1608 = vmatprep.subr.bf16.mxu0 0
    %1609 = vmatpush2.bf16.msra.mxu0 0
    %1610 = vmatprep.subr.bf16.mxu0 0
    %1611 = vmatpush2.bf16.msra.mxu0 0
    %1612 = vmatprep.subr.bf16.mxu0 0
    %1613 = vmatpush2.bf16.msra.mxu0 0
    %1614 = vmatprep.subr.bf16.mxu0 0
    %1615 = vmatpush2.bf16.msra.mxu0 0
    %1616 = vmatprep.subr.bf16.mxu0 0
    %1617 = vmatpush2.bf16.msra.mxu0 0
    %1618 = vmatprep.mubr.bf16.mxu0 0
    %1619 = vmatmul.mubr.bf16.gmra.mxu0 %v1544
    %v1620 = vpop.f32.mrf.mxu0
    %v1621 = vadd.f32 0.0, %v1620
    %v1622 = vpop.f32.mrf.mxu0
    %v1623 = vadd.f32 0.0, %v1622
    %v1624 = vpop.f32.mrf.mxu0
    %v1625 = vpop.f32.mrf.mxu0
    %1626 = vdwg.mxu0
    %v1627 = vadd.f32 %v1540, %v1580
    %v1628 = vadd.f32 %v1541, %v1582
    %v1629 = vadd.f32 %v1542, %v1621
    %v1630 = vadd.f32 %v1543, %v1623
    %v1631 = vxor.u32 %v1627, 2147483648
    %v1632 = vmul.f32 %v1631, 1.442695
    %v1633 = vpow.pop %v1632
    %v1634 = vadd.f32 %v1633, 1.0
    %v1635 = vrcp.pop %v1634
    %v1636 = vmul.f32 1.0, %v1635
    %v1637 = vxor.u32 %v1628, 2147483648
    %v1638 = vmul.f32 %v1637, 1.442695
    %v1639 = vpow.pop %v1638
    %v1640 = vadd.f32 %v1639, 1.0
    %v1641 = vrcp.pop %v1640
    %v1642 = vmul.f32 1.0, %v1641
    %v1643 = vtanh.pop %v1629
    %v1644 = vxor.u32 %v1630, 2147483648
    %v1645 = vmul.f32 %v1644, 1.442695
    %v1646 = vpow.pop %v1645
    %v1647 = vadd.f32 %v1646, 1.0
    %v1648 = vrcp.pop %v1647
    %v1649 = vmul.f32 1.0, %v1648
    %v1650 = vmul.f32 %v1642, %v1536
    %v1651 = vmul.f32 %v1636, %v1643
    %v1652 = vadd.f32 %v1650, %v1651
    %v1653 = vtanh.pop %v1652
    %v1654 = vmul.f32 %v1649, %v1653
    %1655 = vst [vmem:[#allocation3 + $0x38] sm:$0xff] %v1654
    %v1656 = vld [vmem:[#allocation3] sm:$0xff]
    %v1657 = vld [vmem:[#allocation3 + $0x38] sm:$0xff]
    %v1658 = vsel %vm119, %v1656, %v1657
    %1659 = vst [vmem:[#allocation3] sm:$0xff] %v1658
    %v1660 = vsel %vm119, %v1657, %v1656
    %1661 = vst [vmem:[#allocation3 + $0x38] sm:$0xff] %v1660
    %v1662 = vld [vmem:[#allocation3 + $0x8] sm:$0xff]
    %v1663 = vld [vmem:[#allocation3 + $0x30] sm:$0xff]
    %v1664 = vsel %vm119, %v1662, %v1663
    %1665 = vst [vmem:[#allocation3 + $0x8] sm:$0xff] %v1664
    %v1666 = vsel %vm119, %v1663, %v1662
    %1667 = vst [vmem:[#allocation3 + $0x30] sm:$0xff] %v1666
    %v1668 = vld [vmem:[#allocation3 + $0x10] sm:$0xff]
    %v1669 = vld [vmem:[#allocation3 + $0x28] sm:$0xff]
    %v1670 = vsel %vm119, %v1668, %v1669
    %1671 = vst [vmem:[#allocation3 + $0x10] sm:$0xff] %v1670
    %v1672 = vsel %vm119, %v1669, %v1668
    %1673 = vst [vmem:[#allocation3 + $0x28] sm:$0xff] %v1672
    %v1674 = vld [vmem:[#allocation3 + $0x18] sm:$0xff]
    %v1675 = vld [vmem:[#allocation3 + $0x20] sm:$0xff]
    %v1676 = vsel %vm119, %v1674, %v1675
    %1677 = vst [vmem:[#allocation3 + $0x18] sm:$0xff] %v1676
    %v1678 = vsel %vm119, %v1675, %v1674
    %1679 = vst [vmem:[#allocation3 + $0x20] sm:$0xff] %v1678
    %v1680 = vld [vmem:[#allocation3] sm:$0xff]
    %v1681 = vld [vmem:[#allocation3 + $0x8] sm:$0xff]
    %v1682 = vld [vmem:[#allocation3 + $0x10] sm:$0xff]
    %v1683 = vld [vmem:[#allocation3 + $0x18] sm:$0xff]
    %v1684 = vld [vmem:[#allocation3 + $0x20] sm:$0xff]
    %v1685 = vld [vmem:[#allocation3 + $0x28] sm:$0xff]
    %v1686 = vld [vmem:[#allocation3 + $0x30] sm:$0xff]
    %v1687 = vld [vmem:[#allocation3 + $0x38] sm:$0xff]
    %v1688 = vld [vmem:[%s4] sm:$0xff]
    %v1689 = vld [vmem:[%s4 + $0x8] sm:$0xff]
    %v1690 = vld [vmem:[%s4 + $0x10] sm:$0xff]
    %v1691 = vld [vmem:[%s4 + $0x18] sm:$0xff]
    %v1692 = vld [vmem:[%s4 + $0x20] sm:$0xff]
    %v1693 = vld [vmem:[%s4 + $0x28] sm:$0xff]
    %v1694 = vld [vmem:[%s4 + $0x30] sm:$0xff]
    %v1695 = vld [vmem:[%s4 + $0x38] sm:$0xff]
    %v1696 = vld [vmem:[%s4 + $0x40] sm:$0xff]
    %v1697 = vld [vmem:[%s4 + $0x48] sm:$0xff]
    %v1698 = vld [vmem:[%s4 + $0x50] sm:$0xff]
    %v1699 = vld [vmem:[%s4 + $0x58] sm:$0xff]
    %v1700 = vld [vmem:[%s4 + $0x60] sm:$0xff]
    %v1701 = vld [vmem:[%s4 + $0x68] sm:$0xff]
    %v1702 = vld [vmem:[%s4 + $0x70] sm:$0xff]
    %v1703 = vld [vmem:[%s4 + $0x78] sm:$0xff]
    %v1704 = vld [vmem:[%s4 + $0x80] sm:$0xff]
    %v1705 = vld [vmem:[%s4 + $0x88] sm:$0xff]
    %v1706 = vld [vmem:[%s4 + $0x90] sm:$0xff]
    %v1707 = vld [vmem:[%s4 + $0x98] sm:$0xff]
    %v1708 = vld [vmem:[%s4 + $0xa0] sm:$0xff]
    %v1709 = vld [vmem:[%s4 + $0xa8] sm:$0xff]
    %v1710 = vld [vmem:[%s4 + $0xb0] sm:$0xff]
    %v1711 = vld [vmem:[%s4 + $0xb8] sm:$0xff]
    %v1712 = vld [vmem:[%s4 + $0xc0] sm:$0xff]
    %v1713 = vld [vmem:[%s4 + $0xc8] sm:$0xff]
    %v1714 = vld [vmem:[%s4 + $0xd0] sm:$0xff]
    %v1715 = vld [vmem:[%s4 + $0xd8] sm:$0xff]
    %v1716 = vld [vmem:[%s4 + $0xe0] sm:$0xff]
    %v1717 = vld [vmem:[%s4 + $0xe8] sm:$0xff]
    %v1718 = vld [vmem:[%s4 + $0xf0] sm:$0xff]
    %v1719 = vld [vmem:[%s4 + $0xf8] sm:$0xff]
    %v1720 = vld [vmem:[%s4 + $0x100] sm:$0xff]
    %v1721 = vld [vmem:[%s4 + $0x108] sm:$0xff]
    %v1722 = vld [vmem:[%s4 + $0x110] sm:$0xff]
    %v1723 = vld [vmem:[%s4 + $0x118] sm:$0xff]
    %v1724 = vld [vmem:[%s4 + $0x120] sm:$0xff]
    %v1725 = vld [vmem:[%s4 + $0x128] sm:$0xff]
    %v1726 = vld [vmem:[%s4 + $0x130] sm:$0xff]
    %v1727 = vld [vmem:[%s4 + $0x138] sm:$0xff]
    %v1728 = vld [vmem:[%s4 + $0x140] sm:$0xff]
    %v1729 = vld [vmem:[%s4 + $0x148] sm:$0xff]
    %v1730 = vld [vmem:[%s4 + $0x150] sm:$0xff]
    %v1731 = vld [vmem:[%s4 + $0x158] sm:$0xff]
    %v1732 = vld [vmem:[%s4 + $0x160] sm:$0xff]
    %v1733 = vld [vmem:[%s4 + $0x168] sm:$0xff]
    %v1734 = vld [vmem:[%s4 + $0x170] sm:$0xff]
    %v1735 = vld [vmem:[%s4 + $0x178] sm:$0xff]
    %v1736 = vld [vmem:[%s4 + $0x180] sm:$0xff]
    %v1737 = vld [vmem:[%s4 + $0x188] sm:$0xff]
    %v1738 = vld [vmem:[%s4 + $0x190] sm:$0xff]
    %v1739 = vld [vmem:[%s4 + $0x198] sm:$0xff]
    %v1740 = vld [vmem:[%s4 + $0x1a0] sm:$0xff]
    %v1741 = vld [vmem:[%s4 + $0x1a8] sm:$0xff]
    %v1742 = vld [vmem:[%s4 + $0x1b0] sm:$0xff]
    %v1743 = vld [vmem:[%s4 + $0x1b8] sm:$0xff]
    %v1744 = vld [vmem:[%s4 + $0x1c0] sm:$0xff]
    %v1745 = vld [vmem:[%s4 + $0x1c8] sm:$0xff]
    %v1746 = vld [vmem:[%s4 + $0x1d0] sm:$0xff]
    %v1747 = vld [vmem:[%s4 + $0x1d8] sm:$0xff]
    %v1748 = vld [vmem:[%s4 + $0x1e0] sm:$0xff]
    %v1749 = vld [vmem:[%s4 + $0x1e8] sm:$0xff]
    %v1750 = vld [vmem:[%s4 + $0x1f0] sm:$0xff]
    %v1751 = vld [vmem:[%s4 + $0x1f8] sm:$0xff]
    %v1752 = vld [vmem:[%s6] sm:$0xf]
    %v1754 = vlaneseq
    %v1755 = vshrl.u32 %v1754, 7
    %v1756 = vsub.s32 0, %v1755
    %v1757 = vrot.slane %v1752, %v1756
    %v1758 = vlaneseq
    %v1759 = vshrl.u32 %v1758, 7
    %v1760 = vsub.s32 1, %v1759
    %v1761 = vrot.slane %v1752, %v1760
    %v1762 = vlaneseq
    %v1763 = vshrl.u32 %v1762, 7
    %v1764 = vsub.s32 2, %v1763
    %v1765 = vrot.slane %v1752, %v1764
    %v1766 = vlaneseq
    %v1767 = vshrl.u32 %v1766, 7
    %v1768 = vsub.s32 3, %v1767
    %v1769 = vrot.slane %v1752, %v1768
    %1774 = vmatprep.subr.mxu0 %v1749
    %1775 = vmatpush1.msra.mxu0 %v1748
    %1776 = vmatprep.subr.mxu0 %v1745
    %1777 = vmatpush1.msra.mxu0 %v1744
    %1778 = vmatprep.subr.mxu0 %v1741
    %1779 = vmatpush1.msra.mxu0 %v1740
    %1780 = vmatprep.subr.mxu0 %v1737
    %1781 = vmatpush1.msra.mxu0 %v1736
    %1782 = vmatprep.subr.mxu0 %v1733
    %1783 = vmatpush1.msra.mxu0 %v1732
    %1784 = vmatprep.subr.mxu0 %v1729
    %1785 = vmatpush1.msra.mxu0 %v1728
    %1786 = vmatprep.subr.mxu0 %v1725
    %1787 = vmatpush1.msra.mxu0 %v1724
    %1788 = vmatprep.subr.mxu0 %v1721
    %1789 = vmatpush1.msra.mxu0 %v1720
    %1790 = vmatprep.subr.mxu0 %v1717
    %1791 = vmatpush1.msra.mxu0 %v1716
    %1792 = vmatprep.subr.mxu0 %v1713
    %1793 = vmatpush1.msra.mxu0 %v1712
    %1794 = vmatprep.subr.mxu0 %v1709
    %1795 = vmatpush1.msra.mxu0 %v1708
    %1796 = vmatprep.subr.mxu0 %v1705
    %1797 = vmatpush1.msra.mxu0 %v1704
    %1798 = vmatprep.subr.mxu0 %v1701
    %1799 = vmatpush1.msra.mxu0 %v1700
    %1800 = vmatprep.subr.mxu0 %v1697
    %1801 = vmatpush1.msra.mxu0 %v1696
    %1802 = vmatprep.subr.mxu0 %v1693
    %1803 = vmatpush1.msra.mxu0 %v1692
    %1804 = vmatprep.subr.mxu0 %v1689
    %1805 = vmatpush1.msra.mxu0 %v1688
    %1806 = vmatprep.subr.mxu0 0.0
    %1807 = vmatpush2.msra.mxu0 0.0
    %1808 = vmatprep.subr.mxu0 0.0
    %1809 = vmatpush2.msra.mxu0 0.0
    %1810 = vmatprep.subr.mxu0 0.0
    %1811 = vmatpush2.msra.mxu0 0.0
    %1812 = vmatprep.subr.mxu0 0.0
    %1813 = vmatpush2.msra.mxu0 0.0
    %1814 = vmatprep.subr.mxu0 0.0
    %1815 = vmatpush2.msra.mxu0 0.0
    %1816 = vmatprep.subr.mxu0 0.0
    %1817 = vmatpush2.msra.mxu0 0.0
    %1818 = vmatprep.subr.mxu0 0.0
    %1819 = vmatpush2.msra.mxu0 0.0
    %1820 = vmatprep.subr.mxu0 0.0
    %1821 = vmatpush2.msra.mxu0 0.0
    %1822 = vmatprep.subr.mxu0 0.0
    %1823 = vmatpush2.msra.mxu0 0.0
    %1824 = vmatprep.subr.mxu0 0.0
    %1825 = vmatpush2.msra.mxu0 0.0
    %1826 = vmatprep.subr.mxu0 0.0
    %1827 = vmatpush2.msra.mxu0 0.0
    %1828 = vmatprep.subr.mxu0 0.0
    %1829 = vmatpush2.msra.mxu0 0.0
    %1830 = vmatprep.subr.mxu0 0.0
    %1831 = vmatpush2.msra.mxu0 0.0
    %1832 = vmatprep.subr.mxu0 0.0
    %1833 = vmatpush2.msra.mxu0 0.0
    %1834 = vmatprep.subr.mxu0 0.0
    %1835 = vmatpush2.msra.mxu0 0.0
    %1836 = vmatprep.subr.mxu0 0.0
    %1837 = vmatpush2.msra.mxu0 0.0
    %1838 = vmatprep.mubr.f32.mxu0 0.0
    %1839 = vmatmul.mubr.f32.gmra.mxu0 %v1680
    %v1840 = vpop.f32.mrf.mxu0
    %v1841 = vadd.f32 %v1757, %v1840
    %v1842 = vpop.f32.mrf.mxu0
    %v1843 = vadd.f32 %v1761, %v1842
    %1844 = vmatprep.mubr.f32.mxu0 0.0
    %1845 = vmatmul.mubr.f32.gmra.mxu0 %v1681
    %v1846 = vpop.f32.mrf.mxu0
    %v1847 = vadd.f32 %v1757, %v1846
    %v1848 = vpop.f32.mrf.mxu0
    %v1849 = vadd.f32 %v1761, %v1848
    %1850 = vmatprep.mubr.f32.mxu0 0.0
    %1851 = vmatmul.mubr.f32.gmra.mxu0 %v1682
    %v1852 = vpop.f32.mrf.mxu0
    %v1853 = vadd.f32 %v1757, %v1852
    %v1854 = vpop.f32.mrf.mxu0
    %v1855 = vadd.f32 %v1761, %v1854
    %1856 = vmatprep.mubr.f32.mxu0 0.0
    %1857 = vmatmul.mubr.f32.gmra.mxu0 %v1683
    %v1858 = vpop.f32.mrf.mxu0
    %v1859 = vadd.f32 %v1757, %v1858
    %v1860 = vpop.f32.mrf.mxu0
    %v1861 = vadd.f32 %v1761, %v1860
    %1862 = vmatprep.mubr.f32.mxu0 0.0
    %1863 = vmatmul.mubr.f32.gmra.mxu0 %v1684
    %v1864 = vpop.f32.mrf.mxu0
    %v1865 = vadd.f32 %v1757, %v1864
    %v1866 = vpop.f32.mrf.mxu0
    %v1867 = vadd.f32 %v1761, %v1866
    %1868 = vmatprep.mubr.f32.mxu0 0.0
    %1869 = vmatmul.mubr.f32.gmra.mxu0 %v1685
    %v1870 = vpop.f32.mrf.mxu0
    %v1871 = vadd.f32 %v1757, %v1870
    %v1872 = vpop.f32.mrf.mxu0
    %v1873 = vadd.f32 %v1761, %v1872
    %1874 = vmatprep.mubr.f32.mxu0 0.0
    %1875 = vmatmul.mubr.f32.gmra.mxu0 %v1686
    %v1876 = vpop.f32.mrf.mxu0
    %v1877 = vadd.f32 %v1757, %v1876
    %v1878 = vpop.f32.mrf.mxu0
    %v1879 = vadd.f32 %v1761, %v1878
    %1880 = vmatprep.mubr.f32.mxu0 0.0
    %1881 = vmatmul.mubr.f32.gmra.mxu0 %v1687
    %v1882 = vpop.f32.mrf.mxu0
    %v1883 = vadd.f32 %v1757, %v1882
    %v1884 = vpop.f32.mrf.mxu0
    %v1885 = vadd.f32 %v1761, %v1884
    %1886 = vdwg.mxu0
    %1887 = vmatprep.subr.mxu0 %v1751
    %1888 = vmatpush1.msra.mxu0 %v1750
    %1889 = vmatprep.subr.mxu0 %v1747
    %1890 = vmatpush1.msra.mxu0 %v1746
    %1891 = vmatprep.subr.mxu0 %v1743
    %1892 = vmatpush1.msra.mxu0 %v1742
    %1893 = vmatprep.subr.mxu0 %v1739
    %1894 = vmatpush1.msra.mxu0 %v1738
    %1895 = vmatprep.subr.mxu0 %v1735
    %1896 = vmatpush1.msra.mxu0 %v1734
    %1897 = vmatprep.subr.mxu0 %v1731
    %1898 = vmatpush1.msra.mxu0 %v1730
    %1899 = vmatprep.subr.mxu0 %v1727
    %1900 = vmatpush1.msra.mxu0 %v1726
    %1901 = vmatprep.subr.mxu0 %v1723
    %1902 = vmatpush1.msra.mxu0 %v1722
    %1903 = vmatprep.subr.mxu0 %v1719
    %1904 = vmatpush1.msra.mxu0 %v1718
    %1905 = vmatprep.subr.mxu0 %v1715
    %1906 = vmatpush1.msra.mxu0 %v1714
    %1907 = vmatprep.subr.mxu0 %v1711
    %1908 = vmatpush1.msra.mxu0 %v1710
    %1909 = vmatprep.subr.mxu0 %v1707
    %1910 = vmatpush1.msra.mxu0 %v1706
    %1911 = vmatprep.subr.mxu0 %v1703
    %1912 = vmatpush1.msra.mxu0 %v1702
    %1913 = vmatprep.subr.mxu0 %v1699
    %1914 = vmatpush1.msra.mxu0 %v1698
    %1915 = vmatprep.subr.mxu0 %v1695
    %1916 = vmatpush1.msra.mxu0 %v1694
    %1917 = vmatprep.subr.mxu0 %v1691
    %1918 = vmatpush1.msra.mxu0 %v1690
    %1919 = vmatprep.subr.mxu0 0.0
    %1920 = vmatpush2.msra.mxu0 0.0
    %1921 = vmatprep.subr.mxu0 0.0
    %1922 = vmatpush2.msra.mxu0 0.0
    %1923 = vmatprep.subr.mxu0 0.0
    %1924 = vmatpush2.msra.mxu0 0.0
    %1925 = vmatprep.subr.mxu0 0.0
    %1926 = vmatpush2.msra.mxu0 0.0
    %1927 = vmatprep.subr.mxu0 0.0
    %1928 = vmatpush2.msra.mxu0 0.0
    %1929 = vmatprep.subr.mxu0 0.0
    %1930 = vmatpush2.msra.mxu0 0.0
    %1931 = vmatprep.subr.mxu0 0.0
    %1932 = vmatpush2.msra.mxu0 0.0
    %1933 = vmatprep.subr.mxu0 0.0
    %1934 = vmatpush2.msra.mxu0 0.0
    %1935 = vmatprep.subr.mxu0 0.0
    %1936 = vmatpush2.msra.mxu0 0.0
    %1937 = vmatprep.subr.mxu0 0.0
    %1938 = vmatpush2.msra.mxu0 0.0
    %1939 = vmatprep.subr.mxu0 0.0
    %1940 = vmatpush2.msra.mxu0 0.0
    %1941 = vmatprep.subr.mxu0 0.0
    %1942 = vmatpush2.msra.mxu0 0.0
    %1943 = vmatprep.subr.mxu0 0.0
    %1944 = vmatpush2.msra.mxu0 0.0
    %1945 = vmatprep.subr.mxu0 0.0
    %1946 = vmatpush2.msra.mxu0 0.0
    %1947 = vmatprep.subr.mxu0 0.0
    %1948 = vmatpush2.msra.mxu0 0.0
    %1949 = vmatprep.subr.mxu0 0.0
    %1950 = vmatpush2.msra.mxu0 0.0
    %1951 = vmatprep.mubr.f32.mxu0 0.0
    %1952 = vmatmul.mubr.f32.gmra.mxu0 %v1680
    %v1953 = vpop.f32.mrf.mxu0
    %v1954 = vadd.f32 %v1765, %v1953
    %v1955 = vpop.f32.mrf.mxu0
    %v1956 = vadd.f32 %v1769, %v1955
    %1957 = vmatprep.mubr.f32.mxu0 0.0
    %1958 = vmatmul.mubr.f32.gmra.mxu0 %v1681
    %v1959 = vpop.f32.mrf.mxu0
    %v1960 = vadd.f32 %v1765, %v1959
    %v1961 = vpop.f32.mrf.mxu0
    %v1962 = vadd.f32 %v1769, %v1961
    %1963 = vmatprep.mubr.f32.mxu0 0.0
    %1964 = vmatmul.mubr.f32.gmra.mxu0 %v1682
    %v1965 = vpop.f32.mrf.mxu0
    %v1966 = vadd.f32 %v1765, %v1965
    %v1967 = vpop.f32.mrf.mxu0
    %v1968 = vadd.f32 %v1769, %v1967
    %1969 = vmatprep.mubr.f32.mxu0 0.0
    %1970 = vmatmul.mubr.f32.gmra.mxu0 %v1683
    %v1971 = vpop.f32.mrf.mxu0
    %v1972 = vadd.f32 %v1765, %v1971
    %v1973 = vpop.f32.mrf.mxu0
    %v1974 = vadd.f32 %v1769, %v1973
    %1975 = vmatprep.mubr.f32.mxu0 0.0
    %1976 = vmatmul.mubr.f32.gmra.mxu0 %v1684
    %v1977 = vpop.f32.mrf.mxu0
    %v1978 = vadd.f32 %v1765, %v1977
    %v1979 = vpop.f32.mrf.mxu0
    %v1980 = vadd.f32 %v1769, %v1979
    %1981 = vmatprep.mubr.f32.mxu0 0.0
    %1982 = vmatmul.mubr.f32.gmra.mxu0 %v1685
    %v1983 = vpop.f32.mrf.mxu0
    %v1984 = vadd.f32 %v1765, %v1983
    %v1985 = vpop.f32.mrf.mxu0
    %v1986 = vadd.f32 %v1769, %v1985
    %1987 = vmatprep.mubr.f32.mxu0 0.0
    %1988 = vmatmul.mubr.f32.gmra.mxu0 %v1686
    %v1989 = vpop.f32.mrf.mxu0
    %v1990 = vadd.f32 %v1765, %v1989
    %v1991 = vpop.f32.mrf.mxu0
    %v1992 = vadd.f32 %v1769, %v1991
    %1993 = vmatprep.mubr.f32.mxu0 0.0
    %1994 = vmatmul.mubr.f32.gmra.mxu0 %v1687
    %v1995 = vpop.f32.mrf.mxu0
    %v1996 = vadd.f32 %v1765, %v1995
    %v1997 = vpop.f32.mrf.mxu0
    %v1998 = vadd.f32 %v1769, %v1997
    %1999 = vdwg.mxu0
    %2000 = vst [vmem:[#allocation2] sm:$0xff] %v1841
    %2001 = vst [vmem:[#allocation2 + $0x8] sm:$0xff] %v1843
    %2002 = vst [vmem:[#allocation2 + $0x10] sm:$0xff] %v1954
    %2003 = vst [vmem:[#allocation2 + $0x18] sm:$0xff] %v1956
    %2004 = vst [vmem:[#allocation2 + $0x20] sm:$0xff] %v1847
    %2005 = vst [vmem:[#allocation2 + $0x28] sm:$0xff] %v1849
    %2006 = vst [vmem:[#allocation2 + $0x30] sm:$0xff] %v1960
    %2007 = vst [vmem:[#allocation2 + $0x38] sm:$0xff] %v1962
    %2008 = vst [vmem:[#allocation2 + $0x40] sm:$0xff] %v1853
    %2009 = vst [vmem:[#allocation2 + $0x48] sm:$0xff] %v1855
    %2010 = vst [vmem:[#allocation2 + $0x50] sm:$0xff] %v1966
    %2011 = vst [vmem:[#allocation2 + $0x58] sm:$0xff] %v1968
    %2012 = vst [vmem:[#allocation2 + $0x60] sm:$0xff] %v1859
    %2013 = vst [vmem:[#allocation2 + $0x68] sm:$0xff] %v1861
    %2014 = vst [vmem:[#allocation2 + $0x70] sm:$0xff] %v1972
    %2015 = vst [vmem:[#allocation2 + $0x78] sm:$0xff] %v1974
    %2016 = vst [vmem:[#allocation2 + $0x80] sm:$0xff] %v1865
    %2017 = vst [vmem:[#allocation2 + $0x88] sm:$0xff] %v1867
    %2018 = vst [vmem:[#allocation2 + $0x90] sm:$0xff] %v1978
    %2019 = vst [vmem:[#allocation2 + $0x98] sm:$0xff] %v1980
    %2020 = vst [vmem:[#allocation2 + $0xa0] sm:$0xff] %v1871
    %2021 = vst [vmem:[#allocation2 + $0xa8] sm:$0xff] %v1873
    %2022 = vst [vmem:[#allocation2 + $0xb0] sm:$0xff] %v1984
    %2023 = vst [vmem:[#allocation2 + $0xb8] sm:$0xff] %v1986
    %2024 = vst [vmem:[#allocation2 + $0xc0] sm:$0xff] %v1877
    %2025 = vst [vmem:[#allocation2 + $0xc8] sm:$0xff] %v1879
    %2026 = vst [vmem:[#allocation2 + $0xd0] sm:$0xff] %v1990
    %2027 = vst [vmem:[#allocation2 + $0xd8] sm:$0xff] %v1992
    %2028 = vst [vmem:[#allocation2 + $0xe0] sm:$0xff] %v1883
    %2029 = vst [vmem:[#allocation2 + $0xe8] sm:$0xff] %v1885
    %2030 = vst [vmem:[#allocation2 + $0xf0] sm:$0xff] %v1996
    %2031 = vst [vmem:[#allocation2 + $0xf8] sm:$0xff] %v1998
    %v2032 = vld [vmem:[#allocation2] sm:$0xff]
    %v2033 = vld [vmem:[#allocation2 + $0x8] sm:$0xff]
    %v2034 = vld [vmem:[#allocation2 + $0x10] sm:$0xff]
    %v2035 = vld [vmem:[#allocation2 + $0x18] sm:$0xff]
    %v2036 = vld [vmem:[#allocation2 + $0xe0] sm:$0xff]
    %v2037 = vld [vmem:[#allocation2 + $0xe8] sm:$0xff]
    %v2038 = vld [vmem:[#allocation2 + $0xf0] sm:$0xff]
    %v2039 = vld [vmem:[#allocation2 + $0xf8] sm:$0xff]
    %v2040 = vsel %vm115, %v2032, %v2036
    %v2041 = vsel %vm116, %v2033, %v2037
    %v2042 = vsel %vm117, %v2034, %v2038
    %v2043 = vsel %vm118, %v2035, %v2039
    %2044 = vst [vmem:[#allocation2] sm:$0xff] %v2040
    %2045 = vst [vmem:[#allocation2 + $0x8] sm:$0xff] %v2041
    %2046 = vst [vmem:[#allocation2 + $0x10] sm:$0xff] %v2042
    %2047 = vst [vmem:[#allocation2 + $0x18] sm:$0xff] %v2043
    %v2048 = vsel %vm115, %v2036, %v2032
    %v2049 = vsel %vm116, %v2037, %v2033
    %v2050 = vsel %vm117, %v2038, %v2034
    %v2051 = vsel %vm118, %v2039, %v2035
    %2052 = vst [vmem:[#allocation2 + $0xe0] sm:$0xff] %v2048
    %2053 = vst [vmem:[#allocation2 + $0xe8] sm:$0xff] %v2049
    %2054 = vst [vmem:[#allocation2 + $0xf0] sm:$0xff] %v2050
    %2055 = vst [vmem:[#allocation2 + $0xf8] sm:$0xff] %v2051
    %v2056 = vld [vmem:[#allocation2 + $0x20] sm:$0xff]
    %v2057 = vld [vmem:[#allocation2 + $0x28] sm:$0xff]
    %v2058 = vld [vmem:[#allocation2 + $0x30] sm:$0xff]
    %v2059 = vld [vmem:[#allocation2 + $0x38] sm:$0xff]
    %v2060 = vld [vmem:[#allocation2 + $0xc0] sm:$0xff]
    %v2061 = vld [vmem:[#allocation2 + $0xc8] sm:$0xff]
    %v2062 = vld [vmem:[#allocation2 + $0xd0] sm:$0xff]
    %v2063 = vld [vmem:[#allocation2 + $0xd8] sm:$0xff]
    %v2064 = vsel %vm115, %v2056, %v2060
    %v2065 = vsel %vm116, %v2057, %v2061
    %v2066 = vsel %vm117, %v2058, %v2062
    %v2067 = vsel %vm118, %v2059, %v2063
    %2068 = vst [vmem:[#allocation2 + $0x20] sm:$0xff] %v2064
    %2069 = vst [vmem:[#allocation2 + $0x28] sm:$0xff] %v2065
    %2070 = vst [vmem:[#allocation2 + $0x30] sm:$0xff] %v2066
    %2071 = vst [vmem:[#allocation2 + $0x38] sm:$0xff] %v2067
    %v2072 = vsel %vm115, %v2060, %v2056
    %v2073 = vsel %vm116, %v2061, %v2057
    %v2074 = vsel %vm117, %v2062, %v2058
    %v2075 = vsel %vm118, %v2063, %v2059
    %2076 = vst [vmem:[#allocation2 + $0xc0] sm:$0xff] %v2072
    %2077 = vst [vmem:[#allocation2 + $0xc8] sm:$0xff] %v2073
    %2078 = vst [vmem:[#allocation2 + $0xd0] sm:$0xff] %v2074
    %2079 = vst [vmem:[#allocation2 + $0xd8] sm:$0xff] %v2075
    %v2080 = vld [vmem:[#allocation2 + $0x40] sm:$0xff]
    %v2081 = vld [vmem:[#allocation2 + $0x48] sm:$0xff]
    %v2082 = vld [vmem:[#allocation2 + $0x50] sm:$0xff]
    %v2083 = vld [vmem:[#allocation2 + $0x58] sm:$0xff]
    %v2084 = vld [vmem:[#allocation2 + $0xa0] sm:$0xff]
    %v2085 = vld [vmem:[#allocation2 + $0xa8] sm:$0xff]
    %v2086 = vld [vmem:[#allocation2 + $0xb0] sm:$0xff]
    %v2087 = vld [vmem:[#allocation2 + $0xb8] sm:$0xff]
    %v2088 = vsel %vm115, %v2080, %v2084
    %v2089 = vsel %vm116, %v2081, %v2085
    %v2090 = vsel %vm117, %v2082, %v2086
    %v2091 = vsel %vm118, %v2083, %v2087
    %2092 = vst [vmem:[#allocation2 + $0x40] sm:$0xff] %v2088
    %2093 = vst [vmem:[#allocation2 + $0x48] sm:$0xff] %v2089
    %2094 = vst [vmem:[#allocation2 + $0x50] sm:$0xff] %v2090
    %2095 = vst [vmem:[#allocation2 + $0x58] sm:$0xff] %v2091
    %v2096 = vsel %vm115, %v2084, %v2080
    %v2097 = vsel %vm116, %v2085, %v2081
    %v2098 = vsel %vm117, %v2086, %v2082
    %v2099 = vsel %vm118, %v2087, %v2083
    %2100 = vst [vmem:[#allocation2 + $0xa0] sm:$0xff] %v2096
    %2101 = vst [vmem:[#allocation2 + $0xa8] sm:$0xff] %v2097
    %2102 = vst [vmem:[#allocation2 + $0xb0] sm:$0xff] %v2098
    %2103 = vst [vmem:[#allocation2 + $0xb8] sm:$0xff] %v2099
    %v2104 = vld [vmem:[#allocation2 + $0x60] sm:$0xff]
    %v2105 = vld [vmem:[#allocation2 + $0x68] sm:$0xff]
    %v2106 = vld [vmem:[#allocation2 + $0x70] sm:$0xff]
    %v2107 = vld [vmem:[#allocation2 + $0x78] sm:$0xff]
    %v2108 = vld [vmem:[#allocation2 + $0x80] sm:$0xff]
    %v2109 = vld [vmem:[#allocation2 + $0x88] sm:$0xff]
    %v2110 = vld [vmem:[#allocation2 + $0x90] sm:$0xff]
    %v2111 = vld [vmem:[#allocation2 + $0x98] sm:$0xff]
    %v2112 = vsel %vm115, %v2104, %v2108
    %v2113 = vsel %vm116, %v2105, %v2109
    %v2114 = vsel %vm117, %v2106, %v2110
    %v2115 = vsel %vm118, %v2107, %v2111
    %2116 = vst [vmem:[#allocation2 + $0x60] sm:$0xff] %v2112
    %2117 = vst [vmem:[#allocation2 + $0x68] sm:$0xff] %v2113
    %2118 = vst [vmem:[#allocation2 + $0x70] sm:$0xff] %v2114
    %2119 = vst [vmem:[#allocation2 + $0x78] sm:$0xff] %v2115
    %v2120 = vsel %vm115, %v2108, %v2104
    %v2121 = vsel %vm116, %v2109, %v2105
    %v2122 = vsel %vm117, %v2110, %v2106
    %v2123 = vsel %vm118, %v2111, %v2107
    %2124 = vst [vmem:[#allocation2 + $0x80] sm:$0xff] %v2120
    %2125 = vst [vmem:[#allocation2 + $0x88] sm:$0xff] %v2121
    %2126 = vst [vmem:[#allocation2 + $0x90] sm:$0xff] %v2122
    %2127 = vst [vmem:[#allocation2 + $0x98] sm:$0xff] %v2123
    %v2128 = vld [vmem:[#allocation7] sm:$0xff]
    %v2129 = vld [vmem:[#allocation7 + $0x8] sm:$0xff]
    %v2130 = vld [vmem:[#allocation7 + $0x10] sm:$0xff]
    %v2131 = vld [vmem:[#allocation7 + $0x18] sm:$0xff]
    %v2132 = vld [vmem:[#allocation7 + $0x20] sm:$0xff]
    %v2133 = vld [vmem:[#allocation7 + $0x28] sm:$0xff]
    %v2134 = vld [vmem:[#allocation7 + $0x30] sm:$0xff]
    %v2135 = vld [vmem:[#allocation7 + $0x38] sm:$0xff]
    %v2136 = vld [vmem:[#allocation7 + $0x40] sm:$0xff]
    %v2137 = vld [vmem:[#allocation7 + $0x48] sm:$0xff]
    %v2138 = vld [vmem:[#allocation7 + $0x50] sm:$0xff]
    %v2139 = vld [vmem:[#allocation7 + $0x58] sm:$0xff]
    %v2140 = vld [vmem:[#allocation7 + $0x60] sm:$0xff]
    %v2141 = vld [vmem:[#allocation7 + $0x68] sm:$0xff]
    %v2142 = vld [vmem:[#allocation7 + $0x70] sm:$0xff]
    %v2143 = vld [vmem:[#allocation7 + $0x78] sm:$0xff]
    %v2144 = vld [vmem:[#allocation7 + $0x80] sm:$0xff]
    %v2145 = vld [vmem:[#allocation7 + $0x88] sm:$0xff]
    %v2146 = vld [vmem:[#allocation7 + $0x90] sm:$0xff]
    %v2147 = vld [vmem:[#allocation7 + $0x98] sm:$0xff]
    %v2148 = vld [vmem:[#allocation7 + $0xa0] sm:$0xff]
    %v2149 = vld [vmem:[#allocation7 + $0xa8] sm:$0xff]
    %v2150 = vld [vmem:[#allocation7 + $0xb0] sm:$0xff]
    %v2151 = vld [vmem:[#allocation7 + $0xb8] sm:$0xff]
    %v2152 = vld [vmem:[#allocation7 + $0xc0] sm:$0xff]
    %v2153 = vld [vmem:[#allocation7 + $0xc8] sm:$0xff]
    %v2154 = vld [vmem:[#allocation7 + $0xd0] sm:$0xff]
    %v2155 = vld [vmem:[#allocation7 + $0xd8] sm:$0xff]
    %v2156 = vld [vmem:[#allocation7 + $0xe0] sm:$0xff]
    %v2157 = vld [vmem:[#allocation7 + $0xe8] sm:$0xff]
    %v2158 = vld [vmem:[#allocation7 + $0xf0] sm:$0xff]
    %v2159 = vld [vmem:[#allocation7 + $0xf8] sm:$0xff]
    %v2160 = vld [vmem:[#allocation2] sm:$0xff]
    %v2161 = vld [vmem:[#allocation2 + $0x8] sm:$0xff]
    %v2162 = vld [vmem:[#allocation2 + $0x10] sm:$0xff]
    %v2163 = vld [vmem:[#allocation2 + $0x18] sm:$0xff]
    %v2196 = vunpack.c.l.b16 %v2128
    %v2197 = vunpack.c.h.b16 %v2128
    %v2198 = vunpack.c.l.b16 %v2129
    %v2199 = vunpack.c.h.b16 %v2129
    %v2200 = vunpack.c.l.b16 %v2130
    %v2201 = vunpack.c.h.b16 %v2130
    %v2202 = vunpack.c.l.b16 %v2131
    %v2203 = vunpack.c.h.b16 %v2131
    %v2204 = vunpack.c.l.b16 %v2132
    %v2205 = vunpack.c.h.b16 %v2132
    %v2206 = vunpack.c.l.b16 %v2133
    %v2207 = vunpack.c.h.b16 %v2133
    %v2208 = vunpack.c.l.b16 %v2134
    %v2209 = vunpack.c.h.b16 %v2134
    %v2210 = vunpack.c.l.b16 %v2135
    %v2211 = vunpack.c.h.b16 %v2135
    %v2212 = vunpack.c.l.b16 %v2136
    %v2213 = vunpack.c.h.b16 %v2136
    %v2214 = vunpack.c.l.b16 %v2137
    %v2215 = vunpack.c.h.b16 %v2137
    %v2216 = vunpack.c.l.b16 %v2138
    %v2217 = vunpack.c.h.b16 %v2138
    %v2218 = vunpack.c.l.b16 %v2139
    %v2219 = vunpack.c.h.b16 %v2139
    %v2220 = vunpack.c.l.b16 %v2140
    %v2221 = vunpack.c.h.b16 %v2140
    %v2222 = vunpack.c.l.b16 %v2141
    %v2223 = vunpack.c.h.b16 %v2141
    %v2224 = vunpack.c.l.b16 %v2142
    %v2225 = vunpack.c.h.b16 %v2142
    %v2226 = vunpack.c.l.b16 %v2143
    %v2227 = vunpack.c.h.b16 %v2143
    %v2228 = vunpack.c.l.b16 %v2144
    %v2229 = vunpack.c.h.b16 %v2144
    %v2230 = vunpack.c.l.b16 %v2145
    %v2231 = vunpack.c.h.b16 %v2145
    %v2232 = vunpack.c.l.b16 %v2146
    %v2233 = vunpack.c.h.b16 %v2146
    %v2234 = vunpack.c.l.b16 %v2147
    %v2235 = vunpack.c.h.b16 %v2147
    %v2236 = vunpack.c.l.b16 %v2148
    %v2237 = vunpack.c.h.b16 %v2148
    %v2238 = vunpack.c.l.b16 %v2149
    %v2239 = vunpack.c.h.b16 %v2149
    %v2240 = vunpack.c.l.b16 %v2150
    %v2241 = vunpack.c.h.b16 %v2150
    %v2242 = vunpack.c.l.b16 %v2151
    %v2243 = vunpack.c.h.b16 %v2151
    %v2244 = vunpack.c.l.b16 %v2152
    %v2245 = vunpack.c.h.b16 %v2152
    %v2246 = vunpack.c.l.b16 %v2153
    %v2247 = vunpack.c.h.b16 %v2153
    %v2248 = vunpack.c.l.b16 %v2154
    %v2249 = vunpack.c.h.b16 %v2154
    %v2250 = vunpack.c.l.b16 %v2155
    %v2251 = vunpack.c.h.b16 %v2155
    %v2252 = vunpack.c.l.b16 %v2156
    %v2253 = vunpack.c.h.b16 %v2156
    %v2254 = vunpack.c.l.b16 %v2157
    %v2255 = vunpack.c.h.b16 %v2157
    %v2256 = vunpack.c.l.b16 %v2158
    %v2257 = vunpack.c.h.b16 %v2158
    %v2258 = vunpack.c.l.b16 %v2159
    %v2259 = vunpack.c.h.b16 %v2159
    %v2260 = vpack.c.b16 %v2200, %v2196
    %v2261 = vpack.c.b16 %v2201, %v2197
    %v2262 = vpack.c.b16 %v2202, %v2198
    %v2263 = vpack.c.b16 %v2203, %v2199
    %v2264 = vpack.c.b16 %v2208, %v2204
    %v2265 = vpack.c.b16 %v2209, %v2205
    %v2266 = vpack.c.b16 %v2210, %v2206
    %v2267 = vpack.c.b16 %v2211, %v2207
    %v2268 = vpack.c.b16 %v2216, %v2212
    %v2269 = vpack.c.b16 %v2217, %v2213
    %v2270 = vpack.c.b16 %v2218, %v2214
    %v2271 = vpack.c.b16 %v2219, %v2215
    %v2272 = vpack.c.b16 %v2224, %v2220
    %v2273 = vpack.c.b16 %v2225, %v2221
    %v2274 = vpack.c.b16 %v2226, %v2222
    %v2275 = vpack.c.b16 %v2227, %v2223
    %v2276 = vpack.c.b16 %v2232, %v2228
    %v2277 = vpack.c.b16 %v2233, %v2229
    %v2278 = vpack.c.b16 %v2234, %v2230
    %v2279 = vpack.c.b16 %v2235, %v2231
    %v2280 = vpack.c.b16 %v2240, %v2236
    %v2281 = vpack.c.b16 %v2241, %v2237
    %v2282 = vpack.c.b16 %v2242, %v2238
    %v2283 = vpack.c.b16 %v2243, %v2239
    %v2284 = vpack.c.b16 %v2248, %v2244
    %v2285 = vpack.c.b16 %v2249, %v2245
    %v2286 = vpack.c.b16 %v2250, %v2246
    %v2287 = vpack.c.b16 %v2251, %v2247
    %v2288 = vpack.c.b16 %v2256, %v2252
    %v2289 = vpack.c.b16 %v2257, %v2253
    %v2290 = vpack.c.b16 %v2258, %v2254
    %v2291 = vpack.c.b16 %v2259, %v2255
    %2324 = vmatprep.subr.bf16.mxu0 %v2289
    %2325 = vmatpush1.bf16.msra.mxu0 %v2288
    %2326 = vmatprep.subr.bf16.mxu0 %v2285
    %2327 = vmatpush1.bf16.msra.mxu0 %v2284
    %2328 = vmatprep.subr.bf16.mxu0 %v2281
    %2329 = vmatpush1.bf16.msra.mxu0 %v2280
    %2330 = vmatprep.subr.bf16.mxu0 %v2277
    %2331 = vmatpush1.bf16.msra.mxu0 %v2276
    %2332 = vmatprep.subr.bf16.mxu0 %v2273
    %2333 = vmatpush1.bf16.msra.mxu0 %v2272
    %2334 = vmatprep.subr.bf16.mxu0 %v2269
    %2335 = vmatpush1.bf16.msra.mxu0 %v2268
    %2336 = vmatprep.subr.bf16.mxu0 %v2265
    %2337 = vmatpush1.bf16.msra.mxu0 %v2264
    %2338 = vmatprep.subr.bf16.mxu0 %v2261
    %2339 = vmatpush1.bf16.msra.mxu0 %v2260
    %2340 = vmatprep.subr.bf16.mxu0 0
    %2341 = vmatpush2.bf16.msra.mxu0 0
    %2342 = vmatprep.subr.bf16.mxu0 0
    %2343 = vmatpush2.bf16.msra.mxu0 0
    %2344 = vmatprep.subr.bf16.mxu0 0
    %2345 = vmatpush2.bf16.msra.mxu0 0
    %2346 = vmatprep.subr.bf16.mxu0 0
    %2347 = vmatpush2.bf16.msra.mxu0 0
    %2348 = vmatprep.subr.bf16.mxu0 0
    %2349 = vmatpush2.bf16.msra.mxu0 0
    %2350 = vmatprep.subr.bf16.mxu0 0
    %2351 = vmatpush2.bf16.msra.mxu0 0
    %2352 = vmatprep.subr.bf16.mxu0 0
    %2353 = vmatpush2.bf16.msra.mxu0 0
    %2354 = vmatprep.subr.bf16.mxu0 0
    %2355 = vmatpush2.bf16.msra.mxu0 0
    %2356 = vmatprep.mubr.bf16.mxu0 0
    %2357 = vmatmul.mubr.bf16.gmra.mxu0 0
    %v2358 = vpop.f32.mrf.mxu0
    %v2359 = vadd.f32 0.0, %v2358
    %v2360 = vpop.f32.mrf.mxu0
    %v2361 = vadd.f32 0.0, %v2360
    %v2362 = vpop.f32.mrf.mxu0
    %v2363 = vpop.f32.mrf.mxu0
    %2364 = vdwg.mxu0
    %2365 = vmatprep.subr.bf16.mxu0 %v2291
    %2366 = vmatpush1.bf16.msra.mxu0 %v2290
    %2367 = vmatprep.subr.bf16.mxu0 %v2287
    %2368 = vmatpush1.bf16.msra.mxu0 %v2286
    %2369 = vmatprep.subr.bf16.mxu0 %v2283
    %2370 = vmatpush1.bf16.msra.mxu0 %v2282
    %2371 = vmatprep.subr.bf16.mxu0 %v2279
    %2372 = vmatpush1.bf16.msra.mxu0 %v2278
    %2373 = vmatprep.subr.bf16.mxu0 %v2275
    %2374 = vmatpush1.bf16.msra.mxu0 %v2274
    %2375 = vmatprep.subr.bf16.mxu0 %v2271
    %2376 = vmatpush1.bf16.msra.mxu0 %v2270
    %2377 = vmatprep.subr.bf16.mxu0 %v2267
    %2378 = vmatpush1.bf16.msra.mxu0 %v2266
    %2379 = vmatprep.subr.bf16.mxu0 %v2263
    %2380 = vmatpush1.bf16.msra.mxu0 %v2262
    %2381 = vmatprep.subr.bf16.mxu0 0
    %2382 = vmatpush2.bf16.msra.mxu0 0
    %2383 = vmatprep.subr.bf16.mxu0 0
    %2384 = vmatpush2.bf16.msra.mxu0 0
    %2385 = vmatprep.subr.bf16.mxu0 0
    %2386 = vmatpush2.bf16.msra.mxu0 0
    %2387 = vmatprep.subr.bf16.mxu0 0
    %2388 = vmatpush2.bf16.msra.mxu0 0
    %2389 = vmatprep.subr.bf16.mxu0 0
    %2390 = vmatpush2.bf16.msra.mxu0 0
    %2391 = vmatprep.subr.bf16.mxu0 0
    %2392 = vmatpush2.bf16.msra.mxu0 0
    %2393 = vmatprep.subr.bf16.mxu0 0
    %2394 = vmatpush2.bf16.msra.mxu0 0
    %2395 = vmatprep.subr.bf16.mxu0 0
    %2396 = vmatpush2.bf16.msra.mxu0 0
    %2397 = vmatprep.mubr.bf16.mxu0 0
    %2398 = vmatmul.mubr.bf16.gmra.mxu0 0
    %v2399 = vpop.f32.mrf.mxu0
    %v2400 = vadd.f32 0.0, %v2399
    %v2401 = vpop.f32.mrf.mxu0
    %v2402 = vadd.f32 0.0, %v2401
    %v2403 = vpop.f32.mrf.mxu0
    %v2404 = vpop.f32.mrf.mxu0
    %2405 = vdwg.mxu0
    %v2406 = vadd.f32 %v2160, %v2359
    %v2407 = vadd.f32 %v2161, %v2361
    %v2408 = vadd.f32 %v2162, %v2400
    %v2409 = vadd.f32 %v2163, %v2402
    %v2410 = vxor.u32 %v2406, 2147483648
    %v2411 = vmul.f32 %v2410, 1.442695
    %v2412 = vpow.pop %v2411
    %v2413 = vadd.f32 %v2412, 1.0
    %v2414 = vrcp.pop %v2413
    %v2415 = vmul.f32 1.0, %v2414
    %v2416 = vxor.u32 %v2407, 2147483648
    %v2417 = vmul.f32 %v2416, 1.442695
    %v2418 = vpow.pop %v2417
    %v2419 = vadd.f32 %v2418, 1.0
    %v2420 = vrcp.pop %v2419
    %v2421 = vmul.f32 1.0, %v2420
    %v2422 = vtanh.pop %v2408
    %v2423 = vxor.u32 %v2409, 2147483648
    %v2424 = vmul.f32 %v2423, 1.442695
    %v2425 = vpow.pop %v2424
    %v2426 = vadd.f32 %v2425, 1.0
    %v2427 = vrcp.pop %v2426
    %v2428 = vmul.f32 1.0, %v2427
    %v2429 = vmul.f32 %v2421, 0.0
    %v2430 = vmul.f32 %v2415, %v2422
    %v2431 = vadd.f32 %v2429, %v2430
    %v2432 = vtanh.pop %v2431
    %v2433 = vmul.f32 %v2428, %v2432
    %v2434 = vld [vmem:[#allocation2 + $0x20] sm:$0xff]
    %v2435 = vld [vmem:[#allocation2 + $0x28] sm:$0xff]
    %v2436 = vld [vmem:[#allocation2 + $0x30] sm:$0xff]
    %v2437 = vld [vmem:[#allocation2 + $0x38] sm:$0xff]
    %v2438 = vpack.c.bf16 %v2433, %v2433
    %2439 = vmatprep.subr.bf16.mxu0 %v2289
    %2440 = vmatpush1.bf16.msra.mxu0 %v2288
    %2441 = vmatprep.subr.bf16.mxu0 %v2285
    %2442 = vmatpush1.bf16.msra.mxu0 %v2284
    %2443 = vmatprep.subr.bf16.mxu0 %v2281
    %2444 = vmatpush1.bf16.msra.mxu0 %v2280
    %2445 = vmatprep.subr.bf16.mxu0 %v2277
    %2446 = vmatpush1.bf16.msra.mxu0 %v2276
    %2447 = vmatprep.subr.bf16.mxu0 %v2273
    %2448 = vmatpush1.bf16.msra.mxu0 %v2272
    %2449 = vmatprep.subr.bf16.mxu0 %v2269
    %2450 = vmatpush1.bf16.msra.mxu0 %v2268
    %2451 = vmatprep.subr.bf16.mxu0 %v2265
    %2452 = vmatpush1.bf16.msra.mxu0 %v2264
    %2453 = vmatprep.subr.bf16.mxu0 %v2261
    %2454 = vmatpush1.bf16.msra.mxu0 %v2260
    %2455 = vmatprep.subr.bf16.mxu0 0
    %2456 = vmatpush2.bf16.msra.mxu0 0
    %2457 = vmatprep.subr.bf16.mxu0 0
    %2458 = vmatpush2.bf16.msra.mxu0 0
    %2459 = vmatprep.subr.bf16.mxu0 0
    %2460 = vmatpush2.bf16.msra.mxu0 0
    %2461 = vmatprep.subr.bf16.mxu0 0
    %2462 = vmatpush2.bf16.msra.mxu0 0
    %2463 = vmatprep.subr.bf16.mxu0 0
    %2464 = vmatpush2.bf16.msra.mxu0 0
    %2465 = vmatprep.subr.bf16.mxu0 0
    %2466 = vmatpush2.bf16.msra.mxu0 0
    %2467 = vmatprep.subr.bf16.mxu0 0
    %2468 = vmatpush2.bf16.msra.mxu0 0
    %2469 = vmatprep.subr.bf16.mxu0 0
    %2470 = vmatpush2.bf16.msra.mxu0 0
    %2471 = vmatprep.mubr.bf16.mxu0 0
    %2472 = vmatmul.mubr.bf16.gmra.mxu0 %v2438
    %v2473 = vpop.f32.mrf.mxu0
    %v2474 = vadd.f32 0.0, %v2473
    %v2475 = vpop.f32.mrf.mxu0
    %v2476 = vadd.f32 0.0, %v2475
    %v2477 = vpop.f32.mrf.mxu0
    %v2478 = vpop.f32.mrf.mxu0
    %2479 = vdwg.mxu0
    %2480 = vmatprep.subr.bf16.mxu0 %v2291
    %2481 = vmatpush1.bf16.msra.mxu0 %v2290
    %2482 = vmatprep.subr.bf16.mxu0 %v2287
    %2483 = vmatpush1.bf16.msra.mxu0 %v2286
    %2484 = vmatprep.subr.bf16.mxu0 %v2283
    %2485 = vmatpush1.bf16.msra.mxu0 %v2282
    %2486 = vmatprep.subr.bf16.mxu0 %v2279
    %2487 = vmatpush1.bf16.msra.mxu0 %v2278
    %2488 = vmatprep.subr.bf16.mxu0 %v2275
    %2489 = vmatpush1.bf16.msra.mxu0 %v2274
    %2490 = vmatprep.subr.bf16.mxu0 %v2271
    %2491 = vmatpush1.bf16.msra.mxu0 %v2270
    %2492 = vmatprep.subr.bf16.mxu0 %v2267
    %2493 = vmatpush1.bf16.msra.mxu0 %v2266
    %2494 = vmatprep.subr.bf16.mxu0 %v2263
    %2495 = vmatpush1.bf16.msra.mxu0 %v2262
    %2496 = vmatprep.subr.bf16.mxu0 0
    %2497 = vmatpush2.bf16.msra.mxu0 0
    %2498 = vmatprep.subr.bf16.mxu0 0
    %2499 = vmatpush2.bf16.msra.mxu0 0
    %2500 = vmatprep.subr.bf16.mxu0 0
    %2501 = vmatpush2.bf16.msra.mxu0 0
    %2502 = vmatprep.subr.bf16.mxu0 0
    %2503 = vmatpush2.bf16.msra.mxu0 0
    %2504 = vmatprep.subr.bf16.mxu0 0
    %2505 = vmatpush2.bf16.msra.mxu0 0
    %2506 = vmatprep.subr.bf16.mxu0 0
    %2507 = vmatpush2.bf16.msra.mxu0 0
    %2508 = vmatprep.subr.bf16.mxu0 0
    %2509 = vmatpush2.bf16.msra.mxu0 0
    %2510 = vmatprep.subr.bf16.mxu0 0
    %2511 = vmatpush2.bf16.msra.mxu0 0
    %2512 = vmatprep.mubr.bf16.mxu0 0
    %2513 = vmatmul.mubr.bf16.gmra.mxu0 %v2438
    %v2514 = vpop.f32.mrf.mxu0
    %v2515 = vadd.f32 0.0, %v2514
    %v2516 = vpop.f32.mrf.mxu0
    %v2517 = vadd.f32 0.0, %v2516
    %v2518 = vpop.f32.mrf.mxu0
    %v2519 = vpop.f32.mrf.mxu0
    %2520 = vdwg.mxu0
    %v2521 = vadd.f32 %v2434, %v2474
    %v2522 = vadd.f32 %v2435, %v2476
    %v2523 = vadd.f32 %v2436, %v2515
    %v2524 = vadd.f32 %v2437, %v2517
    %v2525 = vxor.u32 %v2521, 2147483648
    %v2526 = vmul.f32 %v2525, 1.442695
    %v2527 = vpow.pop %v2526
    %v2528 = vadd.f32 %v2527, 1.0
    %v2529 = vrcp.pop %v2528
    %v2530 = vmul.f32 1.0, %v2529
    %v2531 = vxor.u32 %v2522, 2147483648
    %v2532 = vmul.f32 %v2531, 1.442695
    %v2533 = vpow.pop %v2532
    %v2534 = vadd.f32 %v2533, 1.0
    %v2535 = vrcp.pop %v2534
    %v2536 = vmul.f32 1.0, %v2535
    %v2537 = vtanh.pop %v2523
    %v2538 = vxor.u32 %v2524, 2147483648
    %v2539 = vmul.f32 %v2538, 1.442695
    %v2540 = vpow.pop %v2539
    %v2541 = vadd.f32 %v2540, 1.0
    %v2542 = vrcp.pop %v2541
    %v2543 = vmul.f32 1.0, %v2542
    %v2544 = vmul.f32 %v2536, %v2431
    %v2545 = vmul.f32 %v2530, %v2537
    %v2546 = vadd.f32 %v2544, %v2545
    %v2547 = vtanh.pop %v2546
    %v2548 = vmul.f32 %v2543, %v2547
    %v2549 = vld [vmem:[#allocation2 + $0x40] sm:$0xff]
    %v2550 = vld [vmem:[#allocation2 + $0x48] sm:$0xff]
    %v2551 = vld [vmem:[#allocation2 + $0x50] sm:$0xff]
    %v2552 = vld [vmem:[#allocation2 + $0x58] sm:$0xff]
    %v2553 = vpack.c.bf16 %v2548, %v2548
    %2554 = vmatprep.subr.bf16.mxu0 %v2289
    %2555 = vmatpush1.bf16.msra.mxu0 %v2288
    %2556 = vmatprep.subr.bf16.mxu0 %v2285
    %2557 = vmatpush1.bf16.msra.mxu0 %v2284
    %2558 = vmatprep.subr.bf16.mxu0 %v2281
    %2559 = vmatpush1.bf16.msra.mxu0 %v2280
    %2560 = vmatprep.subr.bf16.mxu0 %v2277
    %2561 = vmatpush1.bf16.msra.mxu0 %v2276
    %2562 = vmatprep.subr.bf16.mxu0 %v2273
    %2563 = vmatpush1.bf16.msra.mxu0 %v2272
    %2564 = vmatprep.subr.bf16.mxu0 %v2269
    %2565 = vmatpush1.bf16.msra.mxu0 %v2268
    %2566 = vmatprep.subr.bf16.mxu0 %v2265
    %2567 = vmatpush1.bf16.msra.mxu0 %v2264
    %2568 = vmatprep.subr.bf16.mxu0 %v2261
    %2569 = vmatpush1.bf16.msra.mxu0 %v2260
    %2570 = vmatprep.subr.bf16.mxu0 0
    %2571 = vmatpush2.bf16.msra.mxu0 0
    %2572 = vmatprep.subr.bf16.mxu0 0
    %2573 = vmatpush2.bf16.msra.mxu0 0
    %2574 = vmatprep.subr.bf16.mxu0 0
    %2575 = vmatpush2.bf16.msra.mxu0 0
    %2576 = vmatprep.subr.bf16.mxu0 0
    %2577 = vmatpush2.bf16.msra.mxu0 0
    %2578 = vmatprep.subr.bf16.mxu0 0
    %2579 = vmatpush2.bf16.msra.mxu0 0
    %2580 = vmatprep.subr.bf16.mxu0 0
    %2581 = vmatpush2.bf16.msra.mxu0 0
    %2582 = vmatprep.subr.bf16.mxu0 0
    %2583 = vmatpush2.bf16.msra.mxu0 0
    %2584 = vmatprep.subr.bf16.mxu0 0
    %2585 = vmatpush2.bf16.msra.mxu0 0
    %2586 = vmatprep.mubr.bf16.mxu0 0
    %2587 = vmatmul.mubr.bf16.gmra.mxu0 %v2553
    %v2588 = vpop.f32.mrf.mxu0
    %v2589 = vadd.f32 0.0, %v2588
    %v2590 = vpop.f32.mrf.mxu0
    %v2591 = vadd.f32 0.0, %v2590
    %v2592 = vpop.f32.mrf.mxu0
    %v2593 = vpop.f32.mrf.mxu0
    %2594 = vdwg.mxu0
    %2595 = vmatprep.subr.bf16.mxu0 %v2291
    %2596 = vmatpush1.bf16.msra.mxu0 %v2290
    %2597 = vmatprep.subr.bf16.mxu0 %v2287
    %2598 = vmatpush1.bf16.msra.mxu0 %v2286
    %2599 = vmatprep.subr.bf16.mxu0 %v2283
    %2600 = vmatpush1.bf16.msra.mxu0 %v2282
    %2601 = vmatprep.subr.bf16.mxu0 %v2279
    %2602 = vmatpush1.bf16.msra.mxu0 %v2278
    %2603 = vmatprep.subr.bf16.mxu0 %v2275
    %2604 = vmatpush1.bf16.msra.mxu0 %v2274
    %2605 = vmatprep.subr.bf16.mxu0 %v2271
    %2606 = vmatpush1.bf16.msra.mxu0 %v2270
    %2607 = vmatprep.subr.bf16.mxu0 %v2267
    %2608 = vmatpush1.bf16.msra.mxu0 %v2266
    %2609 = vmatprep.subr.bf16.mxu0 %v2263
    %2610 = vmatpush1.bf16.msra.mxu0 %v2262
    %2611 = vmatprep.subr.bf16.mxu0 0
    %2612 = vmatpush2.bf16.msra.mxu0 0
    %2613 = vmatprep.subr.bf16.mxu0 0
    %2614 = vmatpush2.bf16.msra.mxu0 0
    %2615 = vmatprep.subr.bf16.mxu0 0
    %2616 = vmatpush2.bf16.msra.mxu0 0
    %2617 = vmatprep.subr.bf16.mxu0 0
    %2618 = vmatpush2.bf16.msra.mxu0 0
    %2619 = vmatprep.subr.bf16.mxu0 0
    %2620 = vmatpush2.bf16.msra.mxu0 0
    %2621 = vmatprep.subr.bf16.mxu0 0
    %2622 = vmatpush2.bf16.msra.mxu0 0
    %2623 = vmatprep.subr.bf16.mxu0 0
    %2624 = vmatpush2.bf16.msra.mxu0 0
    %2625 = vmatprep.subr.bf16.mxu0 0
    %2626 = vmatpush2.bf16.msra.mxu0 0
    %2627 = vmatprep.mubr.bf16.mxu0 0
    %2628 = vmatmul.mubr.bf16.gmra.mxu0 %v2553
    %v2629 = vpop.f32.mrf.mxu0
    %v2630 = vadd.f32 0.0, %v2629
    %v2631 = vpop.f32.mrf.mxu0
    %v2632 = vadd.f32 0.0, %v2631
    %v2633 = vpop.f32.mrf.mxu0
    %v2634 = vpop.f32.mrf.mxu0
    %2635 = vdwg.mxu0
    %v2636 = vadd.f32 %v2549, %v2589
    %v2637 = vadd.f32 %v2550, %v2591
    %v2638 = vadd.f32 %v2551, %v2630
    %v2639 = vadd.f32 %v2552, %v2632
    %v2640 = vxor.u32 %v2636, 2147483648
    %v2641 = vmul.f32 %v2640, 1.442695
    %v2642 = vpow.pop %v2641
    %v2643 = vadd.f32 %v2642, 1.0
    %v2644 = vrcp.pop %v2643
    %v2645 = vmul.f32 1.0, %v2644
    %v2646 = vxor.u32 %v2637, 2147483648
    %v2647 = vmul.f32 %v2646, 1.442695
    %v2648 = vpow.pop %v2647
    %v2649 = vadd.f32 %v2648, 1.0
    %v2650 = vrcp.pop %v2649
    %v2651 = vmul.f32 1.0, %v2650
    %v2652 = vtanh.pop %v2638
    %v2653 = vxor.u32 %v2639, 2147483648
    %v2654 = vmul.f32 %v2653, 1.442695
    %v2655 = vpow.pop %v2654
    %v2656 = vadd.f32 %v2655, 1.0
    %v2657 = vrcp.pop %v2656
    %v2658 = vmul.f32 1.0, %v2657
    %v2659 = vmul.f32 %v2651, %v2546
    %v2660 = vmul.f32 %v2645, %v2652
    %v2661 = vadd.f32 %v2659, %v2660
    %v2662 = vtanh.pop %v2661
    %v2663 = vmul.f32 %v2658, %v2662
    %v2664 = vld [vmem:[#allocation2 + $0x60] sm:$0xff]
    %v2665 = vld [vmem:[#allocation2 + $0x68] sm:$0xff]
    %v2666 = vld [vmem:[#allocation2 + $0x70] sm:$0xff]
    %v2667 = vld [vmem:[#allocation2 + $0x78] sm:$0xff]
    %v2668 = vpack.c.bf16 %v2663, %v2663
    %2669 = vmatprep.subr.bf16.mxu0 %v2289
    %2670 = vmatpush1.bf16.msra.mxu0 %v2288
    %2671 = vmatprep.subr.bf16.mxu0 %v2285
    %2672 = vmatpush1.bf16.msra.mxu0 %v2284
    %2673 = vmatprep.subr.bf16.mxu0 %v2281
    %2674 = vmatpush1.bf16.msra.mxu0 %v2280
    %2675 = vmatprep.subr.bf16.mxu0 %v2277
    %2676 = vmatpush1.bf16.msra.mxu0 %v2276
    %2677 = vmatprep.subr.bf16.mxu0 %v2273
    %2678 = vmatpush1.bf16.msra.mxu0 %v2272
    %2679 = vmatprep.subr.bf16.mxu0 %v2269
    %2680 = vmatpush1.bf16.msra.mxu0 %v2268
    %2681 = vmatprep.subr.bf16.mxu0 %v2265
    %2682 = vmatpush1.bf16.msra.mxu0 %v2264
    %2683 = vmatprep.subr.bf16.mxu0 %v2261
    %2684 = vmatpush1.bf16.msra.mxu0 %v2260
    %2685 = vmatprep.subr.bf16.mxu0 0
    %2686 = vmatpush2.bf16.msra.mxu0 0
    %2687 = vmatprep.subr.bf16.mxu0 0
    %2688 = vmatpush2.bf16.msra.mxu0 0
    %2689 = vmatprep.subr.bf16.mxu0 0
    %2690 = vmatpush2.bf16.msra.mxu0 0
    %2691 = vmatprep.subr.bf16.mxu0 0
    %2692 = vmatpush2.bf16.msra.mxu0 0
    %2693 = vmatprep.subr.bf16.mxu0 0
    %2694 = vmatpush2.bf16.msra.mxu0 0
    %2695 = vmatprep.subr.bf16.mxu0 0
    %2696 = vmatpush2.bf16.msra.mxu0 0
    %2697 = vmatprep.subr.bf16.mxu0 0
    %2698 = vmatpush2.bf16.msra.mxu0 0
    %2699 = vmatprep.subr.bf16.mxu0 0
    %2700 = vmatpush2.bf16.msra.mxu0 0
    %2701 = vmatprep.mubr.bf16.mxu0 0
    %2702 = vmatmul.mubr.bf16.gmra.mxu0 %v2668
    %v2703 = vpop.f32.mrf.mxu0
    %v2704 = vadd.f32 0.0, %v2703
    %v2705 = vpop.f32.mrf.mxu0
    %v2706 = vadd.f32 0.0, %v2705
    %v2707 = vpop.f32.mrf.mxu0
    %v2708 = vpop.f32.mrf.mxu0
    %2709 = vdwg.mxu0
    %2710 = vmatprep.subr.bf16.mxu0 %v2291
    %2711 = vmatpush1.bf16.msra.mxu0 %v2290
    %2712 = vmatprep.subr.bf16.mxu0 %v2287
    %2713 = vmatpush1.bf16.msra.mxu0 %v2286
    %2714 = vmatprep.subr.bf16.mxu0 %v2283
    %2715 = vmatpush1.bf16.msra.mxu0 %v2282
    %2716 = vmatprep.subr.bf16.mxu0 %v2279
    %2717 = vmatpush1.bf16.msra.mxu0 %v2278
    %2718 = vmatprep.subr.bf16.mxu0 %v2275
    %2719 = vmatpush1.bf16.msra.mxu0 %v2274
    %2720 = vmatprep.subr.bf16.mxu0 %v2271
    %2721 = vmatpush1.bf16.msra.mxu0 %v2270
    %2722 = vmatprep.subr.bf16.mxu0 %v2267
    %2723 = vmatpush1.bf16.msra.mxu0 %v2266
    %2724 = vmatprep.subr.bf16.mxu0 %v2263
    %2725 = vmatpush1.bf16.msra.mxu0 %v2262
    %2726 = vmatprep.subr.bf16.mxu0 0
    %2727 = vmatpush2.bf16.msra.mxu0 0
    %2728 = vmatprep.subr.bf16.mxu0 0
    %2729 = vmatpush2.bf16.msra.mxu0 0
    %2730 = vmatprep.subr.bf16.mxu0 0
    %2731 = vmatpush2.bf16.msra.mxu0 0
    %2732 = vmatprep.subr.bf16.mxu0 0
    %2733 = vmatpush2.bf16.msra.mxu0 0
    %2734 = vmatprep.subr.bf16.mxu0 0
    %2735 = vmatpush2.bf16.msra.mxu0 0
    %2736 = vmatprep.subr.bf16.mxu0 0
    %2737 = vmatpush2.bf16.msra.mxu0 0
    %2738 = vmatprep.subr.bf16.mxu0 0
    %2739 = vmatpush2.bf16.msra.mxu0 0
    %2740 = vmatprep.subr.bf16.mxu0 0
    %2741 = vmatpush2.bf16.msra.mxu0 0
    %2742 = vmatprep.mubr.bf16.mxu0 0
    %2743 = vmatmul.mubr.bf16.gmra.mxu0 %v2668
    %v2744 = vpop.f32.mrf.mxu0
    %v2745 = vadd.f32 0.0, %v2744
    %v2746 = vpop.f32.mrf.mxu0
    %v2747 = vadd.f32 0.0, %v2746
    %v2748 = vpop.f32.mrf.mxu0
    %v2749 = vpop.f32.mrf.mxu0
    %2750 = vdwg.mxu0
    %v2751 = vadd.f32 %v2664, %v2704
    %v2752 = vadd.f32 %v2665, %v2706
    %v2753 = vadd.f32 %v2666, %v2745
    %v2754 = vadd.f32 %v2667, %v2747
    %v2755 = vxor.u32 %v2751, 2147483648
    %v2756 = vmul.f32 %v2755, 1.442695
    %v2757 = vpow.pop %v2756
    %v2758 = vadd.f32 %v2757, 1.0
    %v2759 = vrcp.pop %v2758
    %v2760 = vmul.f32 1.0, %v2759
    %v2761 = vxor.u32 %v2752, 2147483648
    %v2762 = vmul.f32 %v2761, 1.442695
    %v2763 = vpow.pop %v2762
    %v2764 = vadd.f32 %v2763, 1.0
    %v2765 = vrcp.pop %v2764
    %v2766 = vmul.f32 1.0, %v2765
    %v2767 = vtanh.pop %v2753
    %v2768 = vxor.u32 %v2754, 2147483648
    %v2769 = vmul.f32 %v2768, 1.442695
    %v2770 = vpow.pop %v2769
    %v2771 = vadd.f32 %v2770, 1.0
    %v2772 = vrcp.pop %v2771
    %v2773 = vmul.f32 1.0, %v2772
    %v2774 = vmul.f32 %v2766, %v2661
    %v2775 = vmul.f32 %v2760, %v2767
    %v2776 = vadd.f32 %v2774, %v2775
    %v2777 = vtanh.pop %v2776
    %v2778 = vmul.f32 %v2773, %v2777
    %v2779 = vld [vmem:[#allocation2 + $0x80] sm:$0xff]
    %v2780 = vld [vmem:[#allocation2 + $0x88] sm:$0xff]
    %v2781 = vld [vmem:[#allocation2 + $0x90] sm:$0xff]
    %v2782 = vld [vmem:[#allocation2 + $0x98] sm:$0xff]
    %v2783 = vpack.c.bf16 %v2778, %v2778
    %2784 = vmatprep.subr.bf16.mxu0 %v2289
    %2785 = vmatpush1.bf16.msra.mxu0 %v2288
    %2786 = vmatprep.subr.bf16.mxu0 %v2285
    %2787 = vmatpush1.bf16.msra.mxu0 %v2284
    %2788 = vmatprep.subr.bf16.mxu0 %v2281
    %2789 = vmatpush1.bf16.msra.mxu0 %v2280
    %2790 = vmatprep.subr.bf16.mxu0 %v2277
    %2791 = vmatpush1.bf16.msra.mxu0 %v2276
    %2792 = vmatprep.subr.bf16.mxu0 %v2273
    %2793 = vmatpush1.bf16.msra.mxu0 %v2272
    %2794 = vmatprep.subr.bf16.mxu0 %v2269
    %2795 = vmatpush1.bf16.msra.mxu0 %v2268
    %2796 = vmatprep.subr.bf16.mxu0 %v2265
    %2797 = vmatpush1.bf16.msra.mxu0 %v2264
    %2798 = vmatprep.subr.bf16.mxu0 %v2261
    %2799 = vmatpush1.bf16.msra.mxu0 %v2260
    %2800 = vmatprep.subr.bf16.mxu0 0
    %2801 = vmatpush2.bf16.msra.mxu0 0
    %2802 = vmatprep.subr.bf16.mxu0 0
    %2803 = vmatpush2.bf16.msra.mxu0 0
    %2804 = vmatprep.subr.bf16.mxu0 0
    %2805 = vmatpush2.bf16.msra.mxu0 0
    %2806 = vmatprep.subr.bf16.mxu0 0
    %2807 = vmatpush2.bf16.msra.mxu0 0
    %2808 = vmatprep.subr.bf16.mxu0 0
    %2809 = vmatpush2.bf16.msra.mxu0 0
    %2810 = vmatprep.subr.bf16.mxu0 0
    %2811 = vmatpush2.bf16.msra.mxu0 0
    %2812 = vmatprep.subr.bf16.mxu0 0
    %2813 = vmatpush2.bf16.msra.mxu0 0
    %2814 = vmatprep.subr.bf16.mxu0 0
    %2815 = vmatpush2.bf16.msra.mxu0 0
    %2816 = vmatprep.mubr.bf16.mxu0 0
    %2817 = vmatmul.mubr.bf16.gmra.mxu0 %v2783
    %v2818 = vpop.f32.mrf.mxu0
    %v2819 = vadd.f32 0.0, %v2818
    %v2820 = vpop.f32.mrf.mxu0
    %v2821 = vadd.f32 0.0, %v2820
    %v2822 = vpop.f32.mrf.mxu0
    %v2823 = vpop.f32.mrf.mxu0
    %2824 = vdwg.mxu0
    %2825 = vmatprep.subr.bf16.mxu0 %v2291
    %2826 = vmatpush1.bf16.msra.mxu0 %v2290
    %2827 = vmatprep.subr.bf16.mxu0 %v2287
    %2828 = vmatpush1.bf16.msra.mxu0 %v2286
    %2829 = vmatprep.subr.bf16.mxu0 %v2283
    %2830 = vmatpush1.bf16.msra.mxu0 %v2282
    %2831 = vmatprep.subr.bf16.mxu0 %v2279
    %2832 = vmatpush1.bf16.msra.mxu0 %v2278
    %2833 = vmatprep.subr.bf16.mxu0 %v2275
    %2834 = vmatpush1.bf16.msra.mxu0 %v2274
    %2835 = vmatprep.subr.bf16.mxu0 %v2271
    %2836 = vmatpush1.bf16.msra.mxu0 %v2270
    %2837 = vmatprep.subr.bf16.mxu0 %v2267
    %2838 = vmatpush1.bf16.msra.mxu0 %v2266
    %2839 = vmatprep.subr.bf16.mxu0 %v2263
    %2840 = vmatpush1.bf16.msra.mxu0 %v2262
    %2841 = vmatprep.subr.bf16.mxu0 0
    %2842 = vmatpush2.bf16.msra.mxu0 0
    %2843 = vmatprep.subr.bf16.mxu0 0
    %2844 = vmatpush2.bf16.msra.mxu0 0
    %2845 = vmatprep.subr.bf16.mxu0 0
    %2846 = vmatpush2.bf16.msra.mxu0 0
    %2847 = vmatprep.subr.bf16.mxu0 0
    %2848 = vmatpush2.bf16.msra.mxu0 0
    %2849 = vmatprep.subr.bf16.mxu0 0
    %2850 = vmatpush2.bf16.msra.mxu0 0
    %2851 = vmatprep.subr.bf16.mxu0 0
    %2852 = vmatpush2.bf16.msra.mxu0 0
    %2853 = vmatprep.subr.bf16.mxu0 0
    %2854 = vmatpush2.bf16.msra.mxu0 0
    %2855 = vmatprep.subr.bf16.mxu0 0
    %2856 = vmatpush2.bf16.msra.mxu0 0
    %2857 = vmatprep.mubr.bf16.mxu0 0
    %2858 = vmatmul.mubr.bf16.gmra.mxu0 %v2783
    %v2859 = vpop.f32.mrf.mxu0
    %v2860 = vadd.f32 0.0, %v2859
    %v2861 = vpop.f32.mrf.mxu0
    %v2862 = vadd.f32 0.0, %v2861
    %v2863 = vpop.f32.mrf.mxu0
    %v2864 = vpop.f32.mrf.mxu0
    %2865 = vdwg.mxu0
    %v2866 = vadd.f32 %v2779, %v2819
    %v2867 = vadd.f32 %v2780, %v2821
    %v2868 = vadd.f32 %v2781, %v2860
    %v2869 = vadd.f32 %v2782, %v2862
    %v2870 = vxor.u32 %v2866, 2147483648
    %v2871 = vmul.f32 %v2870, 1.442695
    %v2872 = vpow.pop %v2871
    %v2873 = vadd.f32 %v2872, 1.0
    %v2874 = vrcp.pop %v2873
    %v2875 = vmul.f32 1.0, %v2874
    %v2876 = vxor.u32 %v2867, 2147483648
    %v2877 = vmul.f32 %v2876, 1.442695
    %v2878 = vpow.pop %v2877
    %v2879 = vadd.f32 %v2878, 1.0
    %v2880 = vrcp.pop %v2879
    %v2881 = vmul.f32 1.0, %v2880
    %v2882 = vtanh.pop %v2868
    %v2883 = vxor.u32 %v2869, 2147483648
    %v2884 = vmul.f32 %v2883, 1.442695
    %v2885 = vpow.pop %v2884
    %v2886 = vadd.f32 %v2885, 1.0
    %v2887 = vrcp.pop %v2886
    %v2888 = vmul.f32 1.0, %v2887
    %v2889 = vmul.f32 %v2881, %v2776
    %v2890 = vmul.f32 %v2875, %v2882
    %v2891 = vadd.f32 %v2889, %v2890
    %v2892 = vtanh.pop %v2891
    %v2893 = vmul.f32 %v2888, %v2892
    %v2894 = vld [vmem:[#allocation2 + $0xa0] sm:$0xff]
    %v2895 = vld [vmem:[#allocation2 + $0xa8] sm:$0xff]
    %v2896 = vld [vmem:[#allocation2 + $0xb0] sm:$0xff]
    %v2897 = vld [vmem:[#allocation2 + $0xb8] sm:$0xff]
    %v2898 = vpack.c.bf16 %v2893, %v2893
    %2899 = vmatprep.subr.bf16.mxu0 %v2289
    %2900 = vmatpush1.bf16.msra.mxu0 %v2288
    %2901 = vmatprep.subr.bf16.mxu0 %v2285
    %2902 = vmatpush1.bf16.msra.mxu0 %v2284
    %2903 = vmatprep.subr.bf16.mxu0 %v2281
    %2904 = vmatpush1.bf16.msra.mxu0 %v2280
    %2905 = vmatprep.subr.bf16.mxu0 %v2277
    %2906 = vmatpush1.bf16.msra.mxu0 %v2276
    %2907 = vmatprep.subr.bf16.mxu0 %v2273
    %2908 = vmatpush1.bf16.msra.mxu0 %v2272
    %2909 = vmatprep.subr.bf16.mxu0 %v2269
    %2910 = vmatpush1.bf16.msra.mxu0 %v2268
    %2911 = vmatprep.subr.bf16.mxu0 %v2265
    %2912 = vmatpush1.bf16.msra.mxu0 %v2264
    %2913 = vmatprep.subr.bf16.mxu0 %v2261
    %2914 = vmatpush1.bf16.msra.mxu0 %v2260
    %2915 = vmatprep.subr.bf16.mxu0 0
    %2916 = vmatpush2.bf16.msra.mxu0 0
    %2917 = vmatprep.subr.bf16.mxu0 0
    %2918 = vmatpush2.bf16.msra.mxu0 0
    %2919 = vmatprep.subr.bf16.mxu0 0
    %2920 = vmatpush2.bf16.msra.mxu0 0
    %2921 = vmatprep.subr.bf16.mxu0 0
    %2922 = vmatpush2.bf16.msra.mxu0 0
    %2923 = vmatprep.subr.bf16.mxu0 0
    %2924 = vmatpush2.bf16.msra.mxu0 0
    %2925 = vmatprep.subr.bf16.mxu0 0
    %2926 = vmatpush2.bf16.msra.mxu0 0
    %2927 = vmatprep.subr.bf16.mxu0 0
    %2928 = vmatpush2.bf16.msra.mxu0 0
    %2929 = vmatprep.subr.bf16.mxu0 0
    %2930 = vmatpush2.bf16.msra.mxu0 0
    %2931 = vmatprep.mubr.bf16.mxu0 0
    %2932 = vmatmul.mubr.bf16.gmra.mxu0 %v2898
    %v2933 = vpop.f32.mrf.mxu0
    %v2934 = vadd.f32 0.0, %v2933
    %v2935 = vpop.f32.mrf.mxu0
    %v2936 = vadd.f32 0.0, %v2935
    %v2937 = vpop.f32.mrf.mxu0
    %v2938 = vpop.f32.mrf.mxu0
    %2939 = vdwg.mxu0
    %2940 = vmatprep.subr.bf16.mxu0 %v2291
    %2941 = vmatpush1.bf16.msra.mxu0 %v2290
    %2942 = vmatprep.subr.bf16.mxu0 %v2287
    %2943 = vmatpush1.bf16.msra.mxu0 %v2286
    %2944 = vmatprep.subr.bf16.mxu0 %v2283
    %2945 = vmatpush1.bf16.msra.mxu0 %v2282
    %2946 = vmatprep.subr.bf16.mxu0 %v2279
    %2947 = vmatpush1.bf16.msra.mxu0 %v2278
    %2948 = vmatprep.subr.bf16.mxu0 %v2275
    %2949 = vmatpush1.bf16.msra.mxu0 %v2274
    %2950 = vmatprep.subr.bf16.mxu0 %v2271
    %2951 = vmatpush1.bf16.msra.mxu0 %v2270
    %2952 = vmatprep.subr.bf16.mxu0 %v2267
    %2953 = vmatpush1.bf16.msra.mxu0 %v2266
    %2954 = vmatprep.subr.bf16.mxu0 %v2263
    %2955 = vmatpush1.bf16.msra.mxu0 %v2262
    %2956 = vmatprep.subr.bf16.mxu0 0
    %2957 = vmatpush2.bf16.msra.mxu0 0
    %2958 = vmatprep.subr.bf16.mxu0 0
    %2959 = vmatpush2.bf16.msra.mxu0 0
    %2960 = vmatprep.subr.bf16.mxu0 0
    %2961 = vmatpush2.bf16.msra.mxu0 0
    %2962 = vmatprep.subr.bf16.mxu0 0
    %2963 = vmatpush2.bf16.msra.mxu0 0
    %2964 = vmatprep.subr.bf16.mxu0 0
    %2965 = vmatpush2.bf16.msra.mxu0 0
    %2966 = vmatprep.subr.bf16.mxu0 0
    %2967 = vmatpush2.bf16.msra.mxu0 0
    %2968 = vmatprep.subr.bf16.mxu0 0
    %2969 = vmatpush2.bf16.msra.mxu0 0
    %2970 = vmatprep.subr.bf16.mxu0 0
    %2971 = vmatpush2.bf16.msra.mxu0 0
    %2972 = vmatprep.mubr.bf16.mxu0 0
    %2973 = vmatmul.mubr.bf16.gmra.mxu0 %v2898
    %v2974 = vpop.f32.mrf.mxu0
    %v2975 = vadd.f32 0.0, %v2974
    %v2976 = vpop.f32.mrf.mxu0
    %v2977 = vadd.f32 0.0, %v2976
    %v2978 = vpop.f32.mrf.mxu0
    %v2979 = vpop.f32.mrf.mxu0
    %2980 = vdwg.mxu0
    %v2981 = vadd.f32 %v2894, %v2934
    %v2982 = vadd.f32 %v2895, %v2936
    %v2983 = vadd.f32 %v2896, %v2975
    %v2984 = vadd.f32 %v2897, %v2977
    %v2985 = vxor.u32 %v2981, 2147483648
    %v2986 = vmul.f32 %v2985, 1.442695
    %v2987 = vpow.pop %v2986
    %v2988 = vadd.f32 %v2987, 1.0
    %v2989 = vrcp.pop %v2988
    %v2990 = vmul.f32 1.0, %v2989
    %v2991 = vxor.u32 %v2982, 2147483648
    %v2992 = vmul.f32 %v2991, 1.442695
    %v2993 = vpow.pop %v2992
    %v2994 = vadd.f32 %v2993, 1.0
    %v2995 = vrcp.pop %v2994
    %v2996 = vmul.f32 1.0, %v2995
    %v2997 = vtanh.pop %v2983
    %v2998 = vxor.u32 %v2984, 2147483648
    %v2999 = vmul.f32 %v2998, 1.442695
    %v3000 = vpow.pop %v2999
    %v3001 = vadd.f32 %v3000, 1.0
    %v3002 = vrcp.pop %v3001
    %v3003 = vmul.f32 1.0, %v3002
    %v3004 = vmul.f32 %v2996, %v2891
    %v3005 = vmul.f32 %v2990, %v2997
    %v3006 = vadd.f32 %v3004, %v3005
    %v3007 = vtanh.pop %v3006
    %v3008 = vmul.f32 %v3003, %v3007
    %v3009 = vld [vmem:[#allocation2 + $0xc0] sm:$0xff]
    %v3010 = vld [vmem:[#allocation2 + $0xc8] sm:$0xff]
    %v3011 = vld [vmem:[#allocation2 + $0xd0] sm:$0xff]
    %v3012 = vld [vmem:[#allocation2 + $0xd8] sm:$0xff]
    %v3013 = vpack.c.bf16 %v3008, %v3008
    %3014 = vmatprep.subr.bf16.mxu0 %v2289
    %3015 = vmatpush1.bf16.msra.mxu0 %v2288
    %3016 = vmatprep.subr.bf16.mxu0 %v2285
    %3017 = vmatpush1.bf16.msra.mxu0 %v2284
    %3018 = vmatprep.subr.bf16.mxu0 %v2281
    %3019 = vmatpush1.bf16.msra.mxu0 %v2280
    %3020 = vmatprep.subr.bf16.mxu0 %v2277
    %3021 = vmatpush1.bf16.msra.mxu0 %v2276
    %3022 = vmatprep.subr.bf16.mxu0 %v2273
    %3023 = vmatpush1.bf16.msra.mxu0 %v2272
    %3024 = vmatprep.subr.bf16.mxu0 %v2269
    %3025 = vmatpush1.bf16.msra.mxu0 %v2268
    %3026 = vmatprep.subr.bf16.mxu0 %v2265
    %3027 = vmatpush1.bf16.msra.mxu0 %v2264
    %3028 = vmatprep.subr.bf16.mxu0 %v2261
    %3029 = vmatpush1.bf16.msra.mxu0 %v2260
    %3030 = vmatprep.subr.bf16.mxu0 0
    %3031 = vmatpush2.bf16.msra.mxu0 0
    %3032 = vmatprep.subr.bf16.mxu0 0
    %3033 = vmatpush2.bf16.msra.mxu0 0
    %3034 = vmatprep.subr.bf16.mxu0 0
    %3035 = vmatpush2.bf16.msra.mxu0 0
    %3036 = vmatprep.subr.bf16.mxu0 0
    %3037 = vmatpush2.bf16.msra.mxu0 0
    %3038 = vmatprep.subr.bf16.mxu0 0
    %3039 = vmatpush2.bf16.msra.mxu0 0
    %3040 = vmatprep.subr.bf16.mxu0 0
    %3041 = vmatpush2.bf16.msra.mxu0 0
    %3042 = vmatprep.subr.bf16.mxu0 0
    %3043 = vmatpush2.bf16.msra.mxu0 0
    %3044 = vmatprep.subr.bf16.mxu0 0
    %3045 = vmatpush2.bf16.msra.mxu0 0
    %3046 = vmatprep.mubr.bf16.mxu0 0
    %3047 = vmatmul.mubr.bf16.gmra.mxu0 %v3013
    %v3048 = vpop.f32.mrf.mxu0
    %v3049 = vadd.f32 0.0, %v3048
    %v3050 = vpop.f32.mrf.mxu0
    %v3051 = vadd.f32 0.0, %v3050
    %v3052 = vpop.f32.mrf.mxu0
    %v3053 = vpop.f32.mrf.mxu0
    %3054 = vdwg.mxu0
    %3055 = vmatprep.subr.bf16.mxu0 %v2291
    %3056 = vmatpush1.bf16.msra.mxu0 %v2290
    %3057 = vmatprep.subr.bf16.mxu0 %v2287
    %3058 = vmatpush1.bf16.msra.mxu0 %v2286
    %3059 = vmatprep.subr.bf16.mxu0 %v2283
    %3060 = vmatpush1.bf16.msra.mxu0 %v2282
    %3061 = vmatprep.subr.bf16.mxu0 %v2279
    %3062 = vmatpush1.bf16.msra.mxu0 %v2278
    %3063 = vmatprep.subr.bf16.mxu0 %v2275
    %3064 = vmatpush1.bf16.msra.mxu0 %v2274
    %3065 = vmatprep.subr.bf16.mxu0 %v2271
    %3066 = vmatpush1.bf16.msra.mxu0 %v2270
    %3067 = vmatprep.subr.bf16.mxu0 %v2267
    %3068 = vmatpush1.bf16.msra.mxu0 %v2266
    %3069 = vmatprep.subr.bf16.mxu0 %v2263
    %3070 = vmatpush1.bf16.msra.mxu0 %v2262
    %3071 = vmatprep.subr.bf16.mxu0 0
    %3072 = vmatpush2.bf16.msra.mxu0 0
    %3073 = vmatprep.subr.bf16.mxu0 0
    %3074 = vmatpush2.bf16.msra.mxu0 0
    %3075 = vmatprep.subr.bf16.mxu0 0
    %3076 = vmatpush2.bf16.msra.mxu0 0
    %3077 = vmatprep.subr.bf16.mxu0 0
    %3078 = vmatpush2.bf16.msra.mxu0 0
    %3079 = vmatprep.subr.bf16.mxu0 0
    %3080 = vmatpush2.bf16.msra.mxu0 0
    %3081 = vmatprep.subr.bf16.mxu0 0
    %3082 = vmatpush2.bf16.msra.mxu0 0
    %3083 = vmatprep.subr.bf16.mxu0 0
    %3084 = vmatpush2.bf16.msra.mxu0 0
    %3085 = vmatprep.subr.bf16.mxu0 0
    %3086 = vmatpush2.bf16.msra.mxu0 0
    %3087 = vmatprep.mubr.bf16.mxu0 0
    %3088 = vmatmul.mubr.bf16.gmra.mxu0 %v3013
    %v3089 = vpop.f32.mrf.mxu0
    %v3090 = vadd.f32 0.0, %v3089
    %v3091 = vpop.f32.mrf.mxu0
    %v3092 = vadd.f32 0.0, %v3091
    %v3093 = vpop.f32.mrf.mxu0
    %v3094 = vpop.f32.mrf.mxu0
    %3095 = vdwg.mxu0
    %v3096 = vadd.f32 %v3009, %v3049
    %v3097 = vadd.f32 %v3010, %v3051
    %v3098 = vadd.f32 %v3011, %v3090
    %v3099 = vadd.f32 %v3012, %v3092
    %v3100 = vxor.u32 %v3096, 2147483648
    %v3101 = vmul.f32 %v3100, 1.442695
    %v3102 = vpow.pop %v3101
    %v3103 = vadd.f32 %v3102, 1.0
    %v3104 = vrcp.pop %v3103
    %v3105 = vmul.f32 1.0, %v3104
    %v3106 = vxor.u32 %v3097, 2147483648
    %v3107 = vmul.f32 %v3106, 1.442695
    %v3108 = vpow.pop %v3107
    %v3109 = vadd.f32 %v3108, 1.0
    %v3110 = vrcp.pop %v3109
    %v3111 = vmul.f32 1.0, %v3110
    %v3112 = vtanh.pop %v3098
    %v3113 = vxor.u32 %v3099, 2147483648
    %v3114 = vmul.f32 %v3113, 1.442695
    %v3115 = vpow.pop %v3114
    %v3116 = vadd.f32 %v3115, 1.0
    %v3117 = vrcp.pop %v3116
    %v3118 = vmul.f32 1.0, %v3117
    %v3119 = vmul.f32 %v3111, %v3006
    %v3120 = vmul.f32 %v3105, %v3112
    %v3121 = vadd.f32 %v3119, %v3120
    %v3122 = vtanh.pop %v3121
    %v3123 = vmul.f32 %v3118, %v3122
    %v3124 = vld [vmem:[#allocation2 + $0xe0] sm:$0xff]
    %v3125 = vld [vmem:[#allocation2 + $0xe8] sm:$0xff]
    %v3126 = vld [vmem:[#allocation2 + $0xf0] sm:$0xff]
    %v3127 = vld [vmem:[#allocation2 + $0xf8] sm:$0xff]
    %v3128 = vpack.c.bf16 %v3123, %v3123
    %3129 = vmatprep.subr.bf16.mxu0 %v2289
    %3130 = vmatpush1.bf16.msra.mxu0 %v2288
    %3131 = vmatprep.subr.bf16.mxu0 %v2285
    %3132 = vmatpush1.bf16.msra.mxu0 %v2284
    %3133 = vmatprep.subr.bf16.mxu0 %v2281
    %3134 = vmatpush1.bf16.msra.mxu0 %v2280
    %3135 = vmatprep.subr.bf16.mxu0 %v2277
    %3136 = vmatpush1.bf16.msra.mxu0 %v2276
    %3137 = vmatprep.subr.bf16.mxu0 %v2273
    %3138 = vmatpush1.bf16.msra.mxu0 %v2272
    %3139 = vmatprep.subr.bf16.mxu0 %v2269
    %3140 = vmatpush1.bf16.msra.mxu0 %v2268
    %3141 = vmatprep.subr.bf16.mxu0 %v2265
    %3142 = vmatpush1.bf16.msra.mxu0 %v2264
    %3143 = vmatprep.subr.bf16.mxu0 %v2261
    %3144 = vmatpush1.bf16.msra.mxu0 %v2260
    %3145 = vmatprep.subr.bf16.mxu0 0
    %3146 = vmatpush2.bf16.msra.mxu0 0
    %3147 = vmatprep.subr.bf16.mxu0 0
    %3148 = vmatpush2.bf16.msra.mxu0 0
    %3149 = vmatprep.subr.bf16.mxu0 0
    %3150 = vmatpush2.bf16.msra.mxu0 0
    %3151 = vmatprep.subr.bf16.mxu0 0
    %3152 = vmatpush2.bf16.msra.mxu0 0
    %3153 = vmatprep.subr.bf16.mxu0 0
    %3154 = vmatpush2.bf16.msra.mxu0 0
    %3155 = vmatprep.subr.bf16.mxu0 0
    %3156 = vmatpush2.bf16.msra.mxu0 0
    %3157 = vmatprep.subr.bf16.mxu0 0
    %3158 = vmatpush2.bf16.msra.mxu0 0
    %3159 = vmatprep.subr.bf16.mxu0 0
    %3160 = vmatpush2.bf16.msra.mxu0 0
    %3161 = vmatprep.mubr.bf16.mxu0 0
    %3162 = vmatmul.mubr.bf16.gmra.mxu0 %v3128
    %v3163 = vpop.f32.mrf.mxu0
    %v3164 = vadd.f32 0.0, %v3163
    %v3165 = vpop.f32.mrf.mxu0
    %v3166 = vadd.f32 0.0, %v3165
    %v3167 = vpop.f32.mrf.mxu0
    %v3168 = vpop.f32.mrf.mxu0
    %3169 = vdwg.mxu0
    %3170 = vmatprep.subr.bf16.mxu0 %v2291
    %3171 = vmatpush1.bf16.msra.mxu0 %v2290
    %3172 = vmatprep.subr.bf16.mxu0 %v2287
    %3173 = vmatpush1.bf16.msra.mxu0 %v2286
    %3174 = vmatprep.subr.bf16.mxu0 %v2283
    %3175 = vmatpush1.bf16.msra.mxu0 %v2282
    %3176 = vmatprep.subr.bf16.mxu0 %v2279
    %3177 = vmatpush1.bf16.msra.mxu0 %v2278
    %3178 = vmatprep.subr.bf16.mxu0 %v2275
    %3179 = vmatpush1.bf16.msra.mxu0 %v2274
    %3180 = vmatprep.subr.bf16.mxu0 %v2271
    %3181 = vmatpush1.bf16.msra.mxu0 %v2270
    %3182 = vmatprep.subr.bf16.mxu0 %v2267
    %3183 = vmatpush1.bf16.msra.mxu0 %v2266
    %3184 = vmatprep.subr.bf16.mxu0 %v2263
    %3185 = vmatpush1.bf16.msra.mxu0 %v2262
    %3186 = vmatprep.subr.bf16.mxu0 0
    %3187 = vmatpush2.bf16.msra.mxu0 0
    %3188 = vmatprep.subr.bf16.mxu0 0
    %3189 = vmatpush2.bf16.msra.mxu0 0
    %3190 = vmatprep.subr.bf16.mxu0 0
    %3191 = vmatpush2.bf16.msra.mxu0 0
    %3192 = vmatprep.subr.bf16.mxu0 0
    %3193 = vmatpush2.bf16.msra.mxu0 0
    %3194 = vmatprep.subr.bf16.mxu0 0
    %3195 = vmatpush2.bf16.msra.mxu0 0
    %3196 = vmatprep.subr.bf16.mxu0 0
    %3197 = vmatpush2.bf16.msra.mxu0 0
    %3198 = vmatprep.subr.bf16.mxu0 0
    %3199 = vmatpush2.bf16.msra.mxu0 0
    %3200 = vmatprep.subr.bf16.mxu0 0
    %3201 = vmatpush2.bf16.msra.mxu0 0
    %3202 = vmatprep.mubr.bf16.mxu0 0
    %3203 = vmatmul.mubr.bf16.gmra.mxu0 %v3128
    %v3204 = vpop.f32.mrf.mxu0
    %v3205 = vadd.f32 0.0, %v3204
    %v3206 = vpop.f32.mrf.mxu0
    %v3207 = vadd.f32 0.0, %v3206
    %v3208 = vpop.f32.mrf.mxu0
    %v3209 = vpop.f32.mrf.mxu0
    %3210 = vdwg.mxu0
    %v3211 = vadd.f32 %v3124, %v3164
    %v3212 = vadd.f32 %v3125, %v3166
    %v3213 = vadd.f32 %v3126, %v3205
    %v3214 = vadd.f32 %v3127, %v3207
    %v3215 = vxor.u32 %v3211, 2147483648
    %v3216 = vmul.f32 %v3215, 1.442695
    %v3217 = vpow.pop %v3216
    %v3218 = vadd.f32 %v3217, 1.0
    %v3219 = vrcp.pop %v3218
    %v3220 = vmul.f32 1.0, %v3219
    %v3221 = vxor.u32 %v3212, 2147483648
    %v3222 = vmul.f32 %v3221, 1.442695
    %v3223 = vpow.pop %v3222
    %v3224 = vadd.f32 %v3223, 1.0
    %v3225 = vrcp.pop %v3224
    %v3226 = vmul.f32 1.0, %v3225
    %v3227 = vtanh.pop %v3213
    %v3228 = vxor.u32 %v3214, 2147483648
    %v3229 = vmul.f32 %v3228, 1.442695
    %v3230 = vpow.pop %v3229
    %v3231 = vadd.f32 %v3230, 1.0
    %v3232 = vrcp.pop %v3231
    %v3233 = vmul.f32 1.0, %v3232
    %v3234 = vmul.f32 %v3226, %v3121
    %v3235 = vmul.f32 %v3220, %v3227
    %v3236 = vadd.f32 %v3234, %v3235
    %v3237 = vtanh.pop %v3236
    %v3238 = vmul.f32 %v3233, %v3237
    %v3239 = vsel %vm119, %v3238, %v2433
    %v3241 = vrot.slane %v3239, 2
    %v3243 = vrot.slane %v3239, 4
    %v3245 = vrot.slane %v3239, 6
    %v3247 = vld [vmem:[%s7] sm:$0xff]
    %v3248 = vld [vmem:[%s7 + $0x8] sm:$0xff]
    %v3249 = vld [vmem:[%s7 + $0x10] sm:$0xff]
    %v3250 = vld [vmem:[%s7 + $0x18] sm:$0xff]
    %v3251 = vld [vmem:[%s7 + $0x20] sm:$0xff]
    %v3252 = vld [vmem:[%s7 + $0x28] sm:$0xff]
    %v3253 = vld [vmem:[%s7 + $0x30] sm:$0xff]
    %v3254 = vld [vmem:[%s7 + $0x38] sm:$0xff]
    %v3255 = vld [vmem:[%s7 + $0x40] sm:$0xff]
    %v3256 = vld [vmem:[%s7 + $0x48] sm:$0xff]
    %v3257 = vld [vmem:[%s7 + $0x50] sm:$0xff]
    %v3258 = vld [vmem:[%s7 + $0x58] sm:$0xff]
    %v3259 = vld [vmem:[%s7 + $0x60] sm:$0xff]
    %v3260 = vld [vmem:[%s7 + $0x68] sm:$0xff]
    %v3261 = vld [vmem:[%s7 + $0x70] sm:$0xff]
    %v3262 = vld [vmem:[%s7 + $0x78] sm:$0xff]
    %v3263 = vld [vmem:[%s7 + $0x80] sm:$0xff]
    %v3264 = vld [vmem:[%s7 + $0x88] sm:$0xff]
    %v3265 = vld [vmem:[%s7 + $0x90] sm:$0xff]
    %v3266 = vld [vmem:[%s7 + $0x98] sm:$0xff]
    %v3267 = vld [vmem:[%s7 + $0xa0] sm:$0xff]
    %v3268 = vld [vmem:[%s7 + $0xa8] sm:$0xff]
    %v3269 = vld [vmem:[%s7 + $0xb0] sm:$0xff]
    %v3270 = vld [vmem:[%s7 + $0xb8] sm:$0xff]
    %v3271 = vld [vmem:[%s7 + $0xc0] sm:$0xff]
    %v3272 = vld [vmem:[%s7 + $0xc8] sm:$0xff]
    %v3273 = vld [vmem:[%s7 + $0xd0] sm:$0xff]
    %v3274 = vld [vmem:[%s7 + $0xd8] sm:$0xff]
    %v3275 = vld [vmem:[%s7 + $0xe0] sm:$0xff]
    %v3276 = vld [vmem:[%s7 + $0xe8] sm:$0xff]
    %v3277 = vld [vmem:[%s7 + $0xf0] sm:$0xff]
    %v3278 = vld [vmem:[%s7 + $0xf8] sm:$0xff]
    %v3279 = vld [vmem:[%s7 + $0x100] sm:$0xff]
    %v3280 = vld [vmem:[%s7 + $0x108] sm:$0xff]
    %v3281 = vld [vmem:[%s7 + $0x110] sm:$0xff]
    %v3282 = vld [vmem:[%s7 + $0x118] sm:$0xff]
    %v3283 = vld [vmem:[%s7 + $0x120] sm:$0xff]
    %v3284 = vld [vmem:[%s7 + $0x128] sm:$0xff]
    %v3285 = vld [vmem:[%s7 + $0x130] sm:$0xff]
    %v3286 = vld [vmem:[%s7 + $0x138] sm:$0xff]
    %v3287 = vld [vmem:[%s7 + $0x140] sm:$0xff]
    %v3288 = vld [vmem:[%s7 + $0x148] sm:$0xff]
    %v3289 = vld [vmem:[%s7 + $0x150] sm:$0xff]
    %v3290 = vld [vmem:[%s7 + $0x158] sm:$0xff]
    %v3291 = vld [vmem:[%s7 + $0x160] sm:$0xff]
    %v3292 = vld [vmem:[%s7 + $0x168] sm:$0xff]
    %v3293 = vld [vmem:[%s7 + $0x170] sm:$0xff]
    %v3294 = vld [vmem:[%s7 + $0x178] sm:$0xff]
    %v3295 = vld [vmem:[%s7 + $0x180] sm:$0xff]
    %v3296 = vld [vmem:[%s7 + $0x188] sm:$0xff]
    %v3297 = vld [vmem:[%s7 + $0x190] sm:$0xff]
    %v3298 = vld [vmem:[%s7 + $0x198] sm:$0xff]
    %v3299 = vld [vmem:[%s7 + $0x1a0] sm:$0xff]
    %v3300 = vld [vmem:[%s7 + $0x1a8] sm:$0xff]
    %v3301 = vld [vmem:[%s7 + $0x1b0] sm:$0xff]
    %v3302 = vld [vmem:[%s7 + $0x1b8] sm:$0xff]
    %v3303 = vld [vmem:[%s7 + $0x1c0] sm:$0xff]
    %v3304 = vld [vmem:[%s7 + $0x1c8] sm:$0xff]
    %v3305 = vld [vmem:[%s7 + $0x1d0] sm:$0xff]
    %v3306 = vld [vmem:[%s7 + $0x1d8] sm:$0xff]
    %v3307 = vld [vmem:[%s7 + $0x1e0] sm:$0xff]
    %v3308 = vld [vmem:[%s7 + $0x1e8] sm:$0xff]
    %v3309 = vld [vmem:[%s7 + $0x1f0] sm:$0xff]
    %v3310 = vld [vmem:[%s7 + $0x1f8] sm:$0xff]
    %v3311 = vld [vmem:[%s8] sm:$0x1]
    %v3313 = vlaneseq
    %v3314 = vshrl.u32 %v3313, 7
    %v3315 = vsub.s32 0, %v3314
    %v3316 = vrot.slane %v3311, %v3315
    %3318 = vmatprep.subr.mxu0 0.0
    %3319 = vmatpush1.msra.mxu0 %v3262
    %3320 = vmatprep.subr.mxu0 0.0
    %3321 = vmatpush1.msra.mxu0 %v3261
    %3322 = vmatprep.subr.mxu0 0.0
    %3323 = vmatpush1.msra.mxu0 %v3260
    %3324 = vmatprep.subr.mxu0 0.0
    %3325 = vmatpush1.msra.mxu0 %v3259
    %3326 = vmatprep.subr.mxu0 0.0
    %3327 = vmatpush1.msra.mxu0 %v3258
    %3328 = vmatprep.subr.mxu0 0.0
    %3329 = vmatpush1.msra.mxu0 %v3257
    %3330 = vmatprep.subr.mxu0 0.0
    %3331 = vmatpush1.msra.mxu0 %v3256
    %3332 = vmatprep.subr.mxu0 0.0
    %3333 = vmatpush1.msra.mxu0 %v3255
    %3334 = vmatprep.subr.mxu0 0.0
    %3335 = vmatpush1.msra.mxu0 %v3254
    %3336 = vmatprep.subr.mxu0 0.0
    %3337 = vmatpush1.msra.mxu0 %v3253
    %3338 = vmatprep.subr.mxu0 0.0
    %3339 = vmatpush1.msra.mxu0 %v3252
    %3340 = vmatprep.subr.mxu0 0.0
    %3341 = vmatpush1.msra.mxu0 %v3251
    %3342 = vmatprep.subr.mxu0 0.0
    %3343 = vmatpush1.msra.mxu0 %v3250
    %3344 = vmatprep.subr.mxu0 0.0
    %3345 = vmatpush1.msra.mxu0 %v3249
    %3346 = vmatprep.subr.mxu0 0.0
    %3347 = vmatpush1.msra.mxu0 %v3248
    %3348 = vmatprep.subr.mxu0 0.0
    %3349 = vmatpush1.msra.mxu0 %v3247
    %3350 = vmatprep.subr.mxu0 0.0
    %3351 = vmatpush2.msra.mxu0 %v3278
    %3352 = vmatprep.subr.mxu0 0.0
    %3353 = vmatpush2.msra.mxu0 %v3277
    %3354 = vmatprep.subr.mxu0 0.0
    %3355 = vmatpush2.msra.mxu0 %v3276
    %3356 = vmatprep.subr.mxu0 0.0
    %3357 = vmatpush2.msra.mxu0 %v3275
    %3358 = vmatprep.subr.mxu0 0.0
    %3359 = vmatpush2.msra.mxu0 %v3274
    %3360 = vmatprep.subr.mxu0 0.0
    %3361 = vmatpush2.msra.mxu0 %v3273
    %3362 = vmatprep.subr.mxu0 0.0
    %3363 = vmatpush2.msra.mxu0 %v3272
    %3364 = vmatprep.subr.mxu0 0.0
    %3365 = vmatpush2.msra.mxu0 %v3271
    %3366 = vmatprep.subr.mxu0 0.0
    %3367 = vmatpush2.msra.mxu0 %v3270
    %3368 = vmatprep.subr.mxu0 0.0
    %3369 = vmatpush2.msra.mxu0 %v3269
    %3370 = vmatprep.subr.mxu0 0.0
    %3371 = vmatpush2.msra.mxu0 %v3268
    %3372 = vmatprep.subr.mxu0 0.0
    %3373 = vmatpush2.msra.mxu0 %v3267
    %3374 = vmatprep.subr.mxu0 0.0
    %3375 = vmatpush2.msra.mxu0 %v3266
    %3376 = vmatprep.subr.mxu0 0.0
    %3377 = vmatpush2.msra.mxu0 %v3265
    %3378 = vmatprep.subr.mxu0 0.0
    %3379 = vmatpush2.msra.mxu0 %v3264
    %3380 = vmatprep.subr.mxu0 0.0
    %3381 = vmatpush2.msra.mxu0 %v3263
    %3382 = vmatprep.mubr.f32.mxu0 %v3241
    %3383 = vmatmul.mubr.f32.gmra.mxu0 %v3239
    %v3384 = vpop.f32.mrf.mxu0
    %v3385 = vadd.f32 %v3316, %v3384
    %v3386 = vpop.f32.mrf.mxu0
    %3387 = vdwg.mxu0
    %3388 = vmatprep.subr.mxu0 0.0
    %3389 = vmatpush1.msra.mxu0 %v3294
    %3390 = vmatprep.subr.mxu0 0.0
    %3391 = vmatpush1.msra.mxu0 %v3293
    %3392 = vmatprep.subr.mxu0 0.0
    %3393 = vmatpush1.msra.mxu0 %v3292
    %3394 = vmatprep.subr.mxu0 0.0
    %3395 = vmatpush1.msra.mxu0 %v3291
    %3396 = vmatprep.subr.mxu0 0.0
    %3397 = vmatpush1.msra.mxu0 %v3290
    %3398 = vmatprep.subr.mxu0 0.0
    %3399 = vmatpush1.msra.mxu0 %v3289
    %3400 = vmatprep.subr.mxu0 0.0
    %3401 = vmatpush1.msra.mxu0 %v3288
    %3402 = vmatprep.subr.mxu0 0.0
    %3403 = vmatpush1.msra.mxu0 %v3287
    %3404 = vmatprep.subr.mxu0 0.0
    %3405 = vmatpush1.msra.mxu0 %v3286
    %3406 = vmatprep.subr.mxu0 0.0
    %3407 = vmatpush1.msra.mxu0 %v3285
    %3408 = vmatprep.subr.mxu0 0.0
    %3409 = vmatpush1.msra.mxu0 %v3284
    %3410 = vmatprep.subr.mxu0 0.0
    %3411 = vmatpush1.msra.mxu0 %v3283
    %3412 = vmatprep.subr.mxu0 0.0
    %3413 = vmatpush1.msra.mxu0 %v3282
    %3414 = vmatprep.subr.mxu0 0.0
    %3415 = vmatpush1.msra.mxu0 %v3281
    %3416 = vmatprep.subr.mxu0 0.0
    %3417 = vmatpush1.msra.mxu0 %v3280
    %3418 = vmatprep.subr.mxu0 0.0
    %3419 = vmatpush1.msra.mxu0 %v3279
    %3420 = vmatprep.subr.mxu0 0.0
    %3421 = vmatpush2.msra.mxu0 %v3310
    %3422 = vmatprep.subr.mxu0 0.0
    %3423 = vmatpush2.msra.mxu0 %v3309
    %3424 = vmatprep.subr.mxu0 0.0
    %3425 = vmatpush2.msra.mxu0 %v3308
    %3426 = vmatprep.subr.mxu0 0.0
    %3427 = vmatpush2.msra.mxu0 %v3307
    %3428 = vmatprep.subr.mxu0 0.0
    %3429 = vmatpush2.msra.mxu0 %v3306
    %3430 = vmatprep.subr.mxu0 0.0
    %3431 = vmatpush2.msra.mxu0 %v3305
    %3432 = vmatprep.subr.mxu0 0.0
    %3433 = vmatpush2.msra.mxu0 %v3304
    %3434 = vmatprep.subr.mxu0 0.0
    %3435 = vmatpush2.msra.mxu0 %v3303
    %3436 = vmatprep.subr.mxu0 0.0
    %3437 = vmatpush2.msra.mxu0 %v3302
    %3438 = vmatprep.subr.mxu0 0.0
    %3439 = vmatpush2.msra.mxu0 %v3301
    %3440 = vmatprep.subr.mxu0 0.0
    %3441 = vmatpush2.msra.mxu0 %v3300
    %3442 = vmatprep.subr.mxu0 0.0
    %3443 = vmatpush2.msra.mxu0 %v3299
    %3444 = vmatprep.subr.mxu0 0.0
    %3445 = vmatpush2.msra.mxu0 %v3298
    %3446 = vmatprep.subr.mxu0 0.0
    %3447 = vmatpush2.msra.mxu0 %v3297
    %3448 = vmatprep.subr.mxu0 0.0
    %3449 = vmatpush2.msra.mxu0 %v3296
    %3450 = vmatprep.subr.mxu0 0.0
    %3451 = vmatpush2.msra.mxu0 %v3295
    %3452 = vmatprep.mubr.f32.mxu0 %v3245
    %3453 = vmatmul.mubr.f32.gmra.mxu0 %v3243
    %v3454 = vpop.f32.mrf.mxu0
    %v3455 = vadd.f32 %v3385, %v3454
    %v3456 = vpop.f32.mrf.mxu0
    %3457 = vdwg.mxu0
    %vm3458 = vcmask 9216
    %3459 = vst.msk [vmem:[#allocation9] sm:$0x3] %vm3458, %v3455
    // Predicated region
    $region46: #{lstm_model_forward.1} parent=1 // pred_check
      _
    $region47: #{lstm_model_forward.1} parent=1 // pred_check_branch
      %3461 = sbr.rel (0) target = $region49
    $region48: #{lstm_model_forward.1} parent=1 // pred_region
      %s3463 = ssub.s32 32, 32
      %3464 = vsyncadd [#allocation6], %s3463
      %s3466 = sshll.u32 [#allocation9], 4
      %s3467 = int_to_ptr.vmem [resolvable:$true] %s3466
      %3469 = dma.vmem_to_hbm [thread:$0]  %s3467, 32, %s9, [#allocation6]
    $region49: #{lstm_model_forward.1} parent=1 // pred_fallthru
      _
    // Predicated region
    $region50: #{lstm_model_forward.1} parent=1 // pred_check
      _
    $region51: #{lstm_model_forward.1} parent=1 // pred_check_branch
      %3471 = sbr.rel (0) target = $region53
    $region52: #{lstm_model_forward.1} parent=1 // pred_region
      %3472 = dma.done [#allocation6], 32
    $region53: #{lstm_model_forward.1} parent=1 // pred_fallthru
      _
    %3473 = vsyncpa [#allocation5], 1
    %3474 = vsyncpa [#allocation8], 1
    %3475 = vsyncpa [#allocation6], 1

</llo_original>
